<compile_context>
chip_gen: v7x
topology: tpu7x:2x2x1
jax: 0.10.0
libtpu: 0.0.40
codegen_flags: <defaults>
</compile_context>

<pallas_src>
import numpy as np

import jax
import jax.numpy as jnp
from jax.experimental import pallas as pl
from jax.experimental.pallas import tpu as pltpu

# ---------------------------------------------------------------- config ----
Z_DIM = 16
IMAGE_SIZE = 16
CONV_DIM = 8
INIT_STD = 0.02          # Generator.weight_init(mean=0.0, std=0.02)
BN_EPS = 1e-5
LRELU_SLOPE = 0.05

# (cin, cout, kernel, stride, pad) for deconv0, fc, deconv1..deconv4.
LAYERS = (
    dict(name="deconv0", cin=Z_DIM,        cout=128,          k=1,                s=1, p=0),
    dict(name="fc",      cin=128,          cout=CONV_DIM * 8, k=IMAGE_SIZE // 16, s=1, p=0),
    dict(name="deconv1", cin=CONV_DIM * 8, cout=CONV_DIM * 4, k=4,                s=2, p=1),
    dict(name="deconv2", cin=CONV_DIM * 4, cout=CONV_DIM * 2, k=4,                s=2, p=1),
    dict(name="deconv3", cin=CONV_DIM * 2, cout=CONV_DIM,     k=4,                s=2, p=1),
    dict(name="deconv4", cin=CONV_DIM,     cout=3,            k=4,                s=2, p=1),
)


# ------------------------------------------------------------ Pallas kernel --
def _generator_kernel(z_ref, u0_ref, u1f_ref, b1f_ref, s1_ref, t1_ref,
                      u2_ref, s2_ref, t2_ref,
                      u3_ref, s3_ref, t3_ref,
                      u4_ref, b4_ref, o_ref):
    """Entire generator forward: five bf16 MXU matmuls + fused BN/lrelu/tanh.

    Activations are carried as (B, H*W*C) flattened-NHWC rows (channels mixed
    into the lane dim), so every matmul and the single store are lane-dense and
    no reshape / transpose is needed inside the kernel.  Weights are bf16; all
    accumulation and epilogue math is f32.
    """
    def mmw(a, w_ref):
        # bf16 x bf16 MXU matmul, f32 accumulation.
        return jnp.dot(a.astype(jnp.bfloat16), w_ref[...],
                       preferred_element_type=jnp.float32)

    def mm32(a, b):
        # small f32 matmul for BN statistics (kept f32 per numerical concerns).
        return jnp.dot(a, b, preferred_element_type=jnp.float32)

    def stack2(r0, r1):
        # Build [[r0]; [r1]] of shape (2, L) without jnp.concatenate.
        L = r0.shape[-1]
        row = jax.lax.broadcasted_iota(jnp.int32, (2, L), 0)
        return jnp.where(row == 0,
                         jnp.broadcast_to(r0, (2, L)),
                         jnp.broadcast_to(r1, (2, L)))

    def bn_rows(y):
        # BatchNorm2d (train mode) on a 1x1-spatial layer: per-lane stats over batch.
        mean = jnp.mean(y, axis=0, keepdims=True)
        cent = y - mean
        var = jnp.mean(cent * cent, axis=0, keepdims=True)     # biased, like torch
        return cent * jax.lax.rsqrt(var + BN_EPS)

    def bn_lrelu(y, pool_ref, unpool_ref):
        # y: (B, P*C) flattened (h, w, c).  pool (P*C, C) sums the P lanes of a
        # channel; unpool (C, P*C) broadcasts per-channel values back.  Exactly
        # two 2-row MXU pushes per layer.
        pool = pool_ref[...]
        unpool = unpool_ref[...]
        inv_n = 1.0 / (y.shape[0] * (pool.shape[0] // pool.shape[1]))   # 1/(B*H*W)
        stats = stack2(jnp.sum(y, axis=0, keepdims=True),
                       jnp.sum(y * y, axis=0, keepdims=True))           # (2, P*C)
        pooled = mm32(stats, pool) * inv_n                              # (2, C)
        mean = pooled[0:1, :]
        var = pooled[1:2, :] - mean * mean        # biased batch var (torch train mode)
        scale = jax.lax.rsqrt(var + BN_EPS)
        sb = mm32(stack2(scale, -mean * scale), unpool)                 # (2, P*C)
        y = y * sb[0:1, :] + sb[1:2, :]                                 # VPU fma
        return jnp.where(y >= 0, y, LRELU_SLOPE * y)                    # leaky_relu(0.05)

    x = z_ref[...]                                    # (B, z_dim) == flat-NHWC z
    # deconv0 (1x1) + BN.  Its conv bias is cancelled by train-mode BN -> dropped.
    x = bn_rows(mmw(x, u0_ref))
    # fc (+bias) fused with deconv1 (no nonlinearity between them in the module).
    # deconv1's own bias is cancelled by its BN -> dropped.
    x = mmw(x, u1f_ref) + b1f_ref[...]
    x = bn_lrelu(x, s1_ref, t1_ref)                   # deconv1 BN + leaky_relu
    # deconv2 / deconv3 (4x4, s=2, p=1) + BN + leaky_relu; conv biases dropped (BN).
    x = bn_lrelu(mmw(x, u2_ref), s2_ref, t2_ref)
    x = bn_lrelu(mmw(x, u3_ref), s3_ref, t3_ref)
    # deconv4 + bias + tanh.  u4's columns are CHW-ordered so this single store
    # is a lane-dense (B, 3*H*W) block; the wrapper only reshapes to NCHW.
    o_ref[...] = jnp.tanh(mmw(x, u4_ref) + b4_ref[...]).astype(o_ref.dtype)
    # TODO(synk): BatchNorm running-stat (running_mean/var) buffer updates are
    # not modeled; train-mode forward uses batch statistics only, so the output
    # is unaffected.


# ----------------------------------------------------------------- wrapper --
def generator_forward(z, prepared):
    """z: (B, z_dim) -> image (B, 3, IMAGE_SIZE, IMAGE_SIZE), NCHW like PyTorch."""
    B = z.shape[0]
    out_lanes = 3 * IMAGE_SIZE * IMAGE_SIZE            # 768 = 6 * 128 (lane-dense)
    operands = (z,) + tuple(prepared)

    # Advisory cost estimate so XLA schedules sensibly around the custom call.
    in_bytes = sum(int(np.prod(a.shape)) * a.dtype.itemsize for a in operands)
    mm_flops = 0
    for a in prepared:
        if a.ndim == 2 and a.shape[0] > 1:             # weight / pool matrices
            rows = B if a.dtype == jnp.bfloat16 else 2  # bf16 mains vs 2-row BN
            mm_flops += 2 * rows * int(a.shape[0]) * int(a.shape[1])
    cost = pl.CostEstimate(
        flops=mm_flops,
        transcendentals=B * out_lanes + 8 * 128,       # tanh + BN rsqrt (rough)
        bytes_accessed=in_bytes + B * out_lanes * 4,
    )

    out_flat = pl.pallas_call(
        _generator_kernel,
        out_shape=jax.ShapeDtypeStruct((B, out_lanes), jnp.float32),
        grid=(1,),
        in_specs=[pl.BlockSpec(a.shape, lambda i: (0, 0)) for a in operands],
        out_specs=pl.BlockSpec((B, out_lanes), lambda i: (0, 0)),
        compiler_params=pltpu.CompilerParams(dimension_semantics=("arbitrary",)),
        cost_estimate=cost,
    )(*operands)
    return out_flat.reshape(B, 3, IMAGE_SIZE, IMAGE_SIZE)


# ------------------------------------------------------- parameter packing --
def init_params(key):
    """Raw PyTorch-layout parameters: w (Cin, Cout, K, K), b (Cout,)."""
    params = []
    for cfg in LAYERS:
        key, wk, bk = jax.random.split(key, 3)
        params.append(dict(
            w=INIT_STD * jax.random.normal(
                wk, (cfg["cin"], cfg["cout"], cfg["k"], cfg["k"]), jnp.float32),
            # random (not zero) biases so the fc / deconv4 bias paths are exercised
            b=INIT_STD * jax.random.normal(bk, (cfg["cout"],), jnp.float32),
        ))
    return params


def _unroll_deconv(w, hin, win, s, p):
    """Dense ConvTranspose2d matrix: flat-NHWC in (Hin*Win*Cin) -> flat-NHWC out."""
    cin, cout, k, _ = w.shape
    hout, wout = (hin - 1) * s - 2 * p + k, (win - 1) * s - 2 * p + k
    u = np.zeros((hin * win * cin, hout * wout * cout), np.float32)
    for ih in range(hin):
        for iw in range(win):
            r0 = (ih * win + iw) * cin
            for kh in range(k):
                oh = ih * s - p + kh
                if oh < 0 or oh >= hout:
                    continue
                for kw in range(k):
                    ow = iw * s - p + kw
                    if ow < 0 or ow >= wout:
                        continue
                    c0 = (oh * wout + ow) * cout
                    u[r0:r0 + cin, c0:c0 + cout] = w[:, :, kh, kw]
    return u, (hout, wout)


def _pool_mats(p, c):
    """(P*C, C) lane->channel summing matrix and its (C, P*C) broadcast transpose."""
    s = np.zeros((p * c, c), np.float32)
    s[np.arange(p * c), np.arange(p * c) % c] = 1.0
    return s, np.ascontiguousarray(s.T)


def prepare_params(params):
    """Pack PyTorch-layout params into MXU-ready kernel operands (once, at init).

    Main deconv matrices are stored bf16 (halves DMA bytes & MXU passes); BN
    pool/unpool 0/1 matrices and biases stay f32 (tiny, and stats stay f32).
    """
    w = [np.asarray(prm["w"], np.float32) for prm in params]
    b = [np.asarray(prm["b"], np.float32) for prm in params]

    u0, hw = _unroll_deconv(w[0], 1, 1, LAYERS[0]["s"], LAYERS[0]["p"])
    ufc, hw = _unroll_deconv(w[1], hw[0], hw[1], LAYERS[1]["s"], LAYERS[1]["p"])
    u1, hw1 = _unroll_deconv(w[2], hw[0], hw[1], LAYERS[2]["s"], LAYERS[2]["p"])
    u2, hw2 = _unroll_deconv(w[3], hw1[0], hw1[1], LAYERS[3]["s"], LAYERS[3]["p"])
    u3, hw3 = _unroll_deconv(w[4], hw2[0], hw2[1], LAYERS[4]["s"], LAYERS[4]["p"])
    u4, hw4 = _unroll_deconv(w[5], hw3[0], hw3[1], LAYERS[5]["s"], LAYERS[5]["p"])

    # Host-side fusion of fc into deconv1 (no nonlinearity between them).
    # fc's bias is pushed through u1; deconv1's own bias is cancelled by its BN.
    u1f = ufc @ u1                                         # (128, P1*C1)
    b1f = b[1][None, :] @ u1                               # (1,   P1*C1)

    # BN pooling matrices for deconv1..3 (outputs flattened as (h, w, c)).
    s1, t1 = _pool_mats(hw1[0] * hw1[1], LAYERS[2]["cout"])
    s2, t2 = _pool_mats(hw2[0] * hw2[1], LAYERS[3]["cout"])
    s3, t3 = _pool_mats(hw3[0] * hw3[1], LAYERS[4]["cout"])

    # Final layer: permute columns from (h, w, c) to (c, h, w) so the kernel's
    # output block is already flat-NCHW (lane-dense, 3*H*W = 768 lanes).
    hw_out, cout4 = hw4[0] * hw4[1], LAYERS[5]["cout"]
    perm = (np.arange(hw_out)[None, :] * cout4 + np.arange(cout4)[:, None]).reshape(-1)
    u4 = np.ascontiguousarray(u4[:, perm])
    b4 = np.repeat(b[5], hw_out)[None, :]                  # (1, 3*H*W), CHW order

    # Biases of deconv0/1/2/3 are intentionally NOT packed: those layers end in
    # train-mode BatchNorm (gamma=1, beta=0), which cancels any per-channel bias.
    bf16 = lambda a: jnp.asarray(a, jnp.bfloat16)
    f32 = lambda a: jnp.asarray(a, jnp.float32)
    return (bf16(u0), bf16(u1f), f32(b1f), f32(s1), f32(t1),
            bf16(u2), f32(s2), f32(t2),
            bf16(u3), f32(s3), f32(t3),
            bf16(u4), f32(b4))


# ----------------------------------------------------- pure-JAX reference ---
def _reference_forward(z, params):
    """Direct NCHW ConvTranspose2d reference (pure JAX, no Pallas), for checking."""
    hi = jax.lax.Precision.HIGHEST

    def deconv(x, w, b, s, p):
        bsz, _, h, wd = x.shape
        cout, k = w.shape[1], w.shape[2]
        hf, wf = (h - 1) * s + k, (wd - 1) * s + k
        y = jnp.zeros((bsz, cout, hf, wf), jnp.float32)
        for kh in range(k):
            for kw in range(k):
                contrib = jnp.einsum("bihw,io->bohw", x, w[:, :, kh, kw], precision=hi)
                y = y.at[:, :, kh:kh + (h - 1) * s + 1:s,
                               kw:kw + (wd - 1) * s + 1:s].add(contrib)
        return y[:, :, p:hf - p, p:wf - p] + b.reshape(1, -1, 1, 1)

    def bn(x):
        m = jnp.mean(x, axis=(0, 2, 3), keepdims=True)
        v = jnp.mean(jnp.square(x - m), axis=(0, 2, 3), keepdims=True)
        return (x - m) * jax.lax.rsqrt(v + BN_EPS)

    def lrelu(x):
        return jnp.where(x >= 0, x, LRELU_SLOPE * x)

    x = z.reshape(z.shape[0], z.shape[1], 1, 1)
    x = bn(deconv(x, params[0]["w"], params[0]["b"], 1, 0))
    x = deconv(x, params[1]["w"], params[1]["b"], 1, 0)
    x = lrelu(bn(deconv(x, params[2]["w"], params[2]["b"], 2, 1)))
    x = lrelu(bn(deconv(x, params[3]["w"], params[3]["b"], 2, 1)))
    x = lrelu(bn(deconv(x, params[4]["w"], params[4]["b"], 2, 1)))
    return jnp.tanh(deconv(x, params[5]["w"], params[5]["b"], 2, 1))


# --------------------------------------------------------------- main -------
if __name__ == "__main__":
    key = jax.random.PRNGKey(0)
    pkey, zkey = jax.random.split(key)
    params = init_params(pkey)
    prepared = prepare_params(params)

    B = 2
    z = jax.random.normal(zkey, (B, Z_DIM), dtype=jnp.float32)

    fwd = jax.jit(generator_forward)
    out = jax.block_until_ready(fwd(z, prepared))

    assert out.shape == (B, 3, IMAGE_SIZE, IMAGE_SIZE), out.shape
    assert out.dtype == jnp.float32
    assert bool(jnp.all(jnp.isfinite(out)))
    assert bool(jnp.all(jnp.abs(out) <= 1.0 + 1e-6))         # tanh range

    # Semantics check against a direct f32 NCHW ConvTranspose2d reference.  The
    # tolerance is loosened vs the old f32-weight kernel (3e-2 -> 5e-2) to cover
    # bf16 weight/activation quantization; structural (layout / BN / bias) bugs
    # show up as O(1e-1 .. 1) deviations and are still caught.
    ref = _reference_forward(z, params)
    max_err = float(jnp.max(jnp.abs(out - ref)))
    assert max_err < 5e-2, f"kernel deviates from reference: max|diff|={max_err}"

    print("KERNEL_OK")
</pallas_src>

<mosaic_0001>
module attributes {stable_mosaic.version = 11 : i64} {
  func.func @_generator_kernel(%arg0: i32, %arg1: memref<2x16xf32, #tpu.memory_space<vmem>>, %arg2: memref<16x128xbf16, #tpu.memory_space<vmem>>, %arg3: memref<128x128xbf16, #tpu.memory_space<vmem>>, %arg4: memref<1x128xf32, #tpu.memory_space<vmem>>, %arg5: memref<128x32xf32, #tpu.memory_space<vmem>>, %arg6: memref<32x128xf32, #tpu.memory_space<vmem>>, %arg7: memref<128x256xbf16, #tpu.memory_space<vmem>>, %arg8: memref<256x16xf32, #tpu.memory_space<vmem>>, %arg9: memref<16x256xf32, #tpu.memory_space<vmem>>, %arg10: memref<256x512xbf16, #tpu.memory_space<vmem>>, %arg11: memref<512x8xf32, #tpu.memory_space<vmem>>, %arg12: memref<8x512xf32, #tpu.memory_space<vmem>>, %arg13: memref<512x768xbf16, #tpu.memory_space<vmem>>, %arg14: memref<1x768xf32, #tpu.memory_space<vmem>>, %arg15: memref<2x768xf32, #tpu.memory_space<vmem>>) attributes {dimension_semantics = [#tpu.dimension_semantics<arbitrary>], iteration_bounds = array<i64: 1>, scalar_prefetch = 0 : i64, scratch_operands = 0 : i64, tpu.core_type = #tpu.core_type<tc>, window_params = [{pipeline_mode = #tpu.pipeline_mode<synchronous>, transform_indices = @transform_0, window_bounds = array<i64: 2, 16>}, {pipeline_mode = #tpu.pipeline_mode<synchronous>, transform_indices = @transform_1, window_bounds = array<i64: 16, 128>}, {pipeline_mode = #tpu.pipeline_mode<synchronous>, transform_indices = @transform_2, window_bounds = array<i64: 128, 128>}, {pipeline_mode = #tpu.pipeline_mode<synchronous>, transform_indices = @transform_3, window_bounds = array<i64: 1, 128>}, {pipeline_mode = #tpu.pipeline_mode<synchronous>, transform_indices = @transform_4, window_bounds = array<i64: 128, 32>}, {pipeline_mode = #tpu.pipeline_mode<synchronous>, transform_indices = @transform_5, window_bounds = array<i64: 32, 128>}, {pipeline_mode = #tpu.pipeline_mode<synchronous>, transform_indices = @transform_6, window_bounds = array<i64: 128, 256>}, {pipeline_mode = #tpu.pipeline_mode<synchronous>, transform_indices = @transform_7, window_bounds = array<i64: 256, 16>}, {pipeline_mode = #tpu.pipeline_mode<synchronous>, transform_indices = @transform_8, window_bounds = array<i64: 16, 256>}, {pipeline_mode = #tpu.pipeline_mode<synchronous>, transform_indices = @transform_9, window_bounds = array<i64: 256, 512>}, {pipeline_mode = #tpu.pipeline_mode<synchronous>, transform_indices = @transform_10, window_bounds = array<i64: 512, 8>}, {pipeline_mode = #tpu.pipeline_mode<synchronous>, transform_indices = @transform_11, window_bounds = array<i64: 8, 512>}, {pipeline_mode = #tpu.pipeline_mode<synchronous>, transform_indices = @transform_12, window_bounds = array<i64: 512, 768>}, {pipeline_mode = #tpu.pipeline_mode<synchronous>, transform_indices = @transform_13, window_bounds = array<i64: 1, 768>}, {pipeline_mode = #tpu.pipeline_mode<synchronous>, transform_indices = @transform_14, window_bounds = array<i64: 2, 768>}]} {
    %c0 = arith.constant 0 : index
    %c0_0 = arith.constant 0 : index
    %0 = vector.load %arg1[%c0, %c0_0] : memref<2x16xf32, #tpu.memory_space<vmem>>, vector<2x16xf32>
    %1 = arith.truncf %0 : vector<2x16xf32> to vector<2x16xbf16>
    %c0_1 = arith.constant 0 : index
    %c0_2 = arith.constant 0 : index
    %2 = vector.load %arg2[%c0_1, %c0_2] : memref<16x128xbf16, #tpu.memory_space<vmem>>, vector<16x128xbf16>
    %cst = arith.constant dense<0.000000e+00> : vector<2x128xf32>
    %3 = tpu.matmul %1, %2, %cst {dimension_numbers = #tpu.dot_dimension_numbers<[1], [0], [0], [1], [0, 0, 1, 1], [], []>} : vector<2x16xbf16>, vector<16x128xbf16>, vector<2x128xf32> -> vector<2x128xf32>
    %cst_3 = arith.constant dense<0.000000e+00> : vector<128xf32>
    %4 = vector.multi_reduction <add>, %3, %cst_3 [0] : vector<2x128xf32> to vector<128xf32>
    %5 = vector.shape_cast %4 : vector<128xf32> to vector<1x128xf32>
    %cst_4 = arith.constant 2.000000e+00 : f32
    %6 = vector.broadcast %cst_4 : f32 to vector<1x128xf32>
    %7 = arith.divf %5, %6 : vector<1x128xf32>
    %8 = vector.broadcast %7 : vector<1x128xf32> to vector<2x128xf32>
    %9 = arith.subf %3, %8 : vector<2x128xf32>
    %10 = arith.mulf %9, %9 : vector<2x128xf32>
    %cst_5 = arith.constant dense<0.000000e+00> : vector<128xf32>
    %11 = vector.multi_reduction <add>, %10, %cst_5 [0] : vector<2x128xf32> to vector<128xf32>
    %12 = vector.shape_cast %11 : vector<128xf32> to vector<1x128xf32>
    %cst_6 = arith.constant 2.000000e+00 : f32
    %13 = vector.broadcast %cst_6 : f32 to vector<1x128xf32>
    %14 = arith.divf %12, %13 : vector<1x128xf32>
    %cst_7 = arith.constant 9.99999974E-6 : f32
    %15 = vector.broadcast %cst_7 : f32 to vector<1x128xf32>
    %16 = arith.addf %14, %15 : vector<1x128xf32>
    %17 = math.rsqrt %16 : vector<1x128xf32>
    %18 = vector.broadcast %17 : vector<1x128xf32> to vector<2x128xf32>
    %19 = arith.mulf %9, %18 : vector<2x128xf32>
    %20 = arith.truncf %19 : vector<2x128xf32> to vector<2x128xbf16>
    %c0_8 = arith.constant 0 : index
    %c0_9 = arith.constant 0 : index
    %21 = vector.load %arg3[%c0_8, %c0_9] : memref<128x128xbf16, #tpu.memory_space<vmem>>, vector<128x128xbf16>
    %cst_10 = arith.constant dense<0.000000e+00> : vector<2x128xf32>
    %22 = tpu.matmul %20, %21, %cst_10 {dimension_numbers = #tpu.dot_dimension_numbers<[1], [0], [0], [1], [0, 0, 1, 1], [], []>} : vector<2x128xbf16>, vector<128x128xbf16>, vector<2x128xf32> -> vector<2x128xf32>
    %c0_11 = arith.constant 0 : index
    %c0_12 = arith.constant 0 : index
    %23 = vector.load %arg4[%c0_11, %c0_12] : memref<1x128xf32, #tpu.memory_space<vmem>>, vector<1x128xf32>
    %24 = vector.broadcast %23 : vector<1x128xf32> to vector<2x128xf32>
    %25 = arith.addf %22, %24 : vector<2x128xf32>
    %c0_13 = arith.constant 0 : index
    %c0_14 = arith.constant 0 : index
    %26 = vector.load %arg5[%c0_13, %c0_14] : memref<128x32xf32, #tpu.memory_space<vmem>>, vector<128x32xf32>
    %c0_15 = arith.constant 0 : index
    %c0_16 = arith.constant 0 : index
    %27 = vector.load %arg6[%c0_15, %c0_16] : memref<32x128xf32, #tpu.memory_space<vmem>>, vector<32x128xf32>
    %cst_17 = arith.constant dense<0.000000e+00> : vector<128xf32>
    %28 = vector.multi_reduction <add>, %25, %cst_17 [0] : vector<2x128xf32> to vector<128xf32>
    %29 = vector.shape_cast %28 : vector<128xf32> to vector<1x128xf32>
    %30 = arith.mulf %25, %25 : vector<2x128xf32>
    %cst_18 = arith.constant dense<0.000000e+00> : vector<128xf32>
    %31 = vector.multi_reduction <add>, %30, %cst_18 [0] : vector<2x128xf32> to vector<128xf32>
    %32 = vector.shape_cast %31 : vector<128xf32> to vector<1x128xf32>
    %33 = tpu.iota {dimensions = array<i32: 0>} : vector<2x128xi32>
    %c0_i32 = arith.constant 0 : i32
    %34 = vector.broadcast %c0_i32 : i32 to vector<2x128xi32>
    %35 = arith.cmpi eq, %33, %34 : vector<2x128xi32>
    %36 = vector.shape_cast %29 : vector<1x128xf32> to vector<1x128xf32>
    %37 = vector.broadcast %36 : vector<1x128xf32> to vector<2x128xf32>
    %38 = vector.shape_cast %32 : vector<1x128xf32> to vector<1x128xf32>
    %39 = vector.broadcast %38 : vector<1x128xf32> to vector<2x128xf32>
    %40 = arith.select %35, %37, %39 : vector<2x128xi1>, vector<2x128xf32>
    %cst_19 = arith.constant dense<0.000000e+00> : vector<2x32xf32>
    %41 = tpu.matmul %40, %26, %cst_19 {dimension_numbers = #tpu.dot_dimension_numbers<[1], [0], [0], [1], [0, 0, 1, 1], [], []>} : vector<2x128xf32>, vector<128x32xf32>, vector<2x32xf32> -> vector<2x32xf32>
    %cst_20 = arith.constant 1.250000e-01 : f32
    %42 = vector.broadcast %cst_20 : f32 to vector<2x32xf32>
    %43 = arith.mulf %41, %42 : vector<2x32xf32>
    %44 = vector.extract_strided_slice %43 {offsets = [0, 0], sizes = [1, 32], strides = [1, 1]} : vector<2x32xf32> to vector<1x32xf32>
    %45 = vector.extract_strided_slice %43 {offsets = [1, 0], sizes = [1, 32], strides = [1, 1]} : vector<2x32xf32> to vector<1x32xf32>
    %46 = arith.mulf %44, %44 : vector<1x32xf32>
    %47 = arith.subf %45, %46 : vector<1x32xf32>
    %cst_21 = arith.constant 9.99999974E-6 : f32
    %48 = vector.broadcast %cst_21 : f32 to vector<1x32xf32>
    %49 = arith.addf %47, %48 : vector<1x32xf32>
    %50 = math.rsqrt %49 : vector<1x32xf32>
    %cst_22 = arith.constant 0.000000e+00 : f32
    %51 = vector.broadcast %cst_22 : f32 to vector<1x32xf32>
    %52 = arith.subf %51, %44 : vector<1x32xf32>
    %53 = arith.mulf %52, %50 : vector<1x32xf32>
    %54 = tpu.iota {dimensions = array<i32: 0>} : vector<2x32xi32>
    %c0_i32_23 = arith.constant 0 : i32
    %55 = vector.broadcast %c0_i32_23 : i32 to vector<2x32xi32>
    %56 = arith.cmpi eq, %54, %55 : vector<2x32xi32>
    %57 = vector.shape_cast %50 : vector<1x32xf32> to vector<1x32xf32>
    %58 = vector.broadcast %57 : vector<1x32xf32> to vector<2x32xf32>
    %59 = vector.shape_cast %53 : vector<1x32xf32> to vector<1x32xf32>
    %60 = vector.broadcast %59 : vector<1x32xf32> to vector<2x32xf32>
    %61 = arith.select %56, %58, %60 : vector<2x32xi1>, vector<2x32xf32>
    %cst_24 = arith.constant dense<0.000000e+00> : vector<2x128xf32>
    %62 = tpu.matmul %61, %27, %cst_24 {dimension_numbers = #tpu.dot_dimension_numbers<[1], [0], [0], [1], [0, 0, 1, 1], [], []>} : vector<2x32xf32>, vector<32x128xf32>, vector<2x128xf32> -> vector<2x128xf32>
    %63 = vector.extract_strided_slice %62 {offsets = [0, 0], sizes = [1, 128], strides = [1, 1]} : vector<2x128xf32> to vector<1x128xf32>
    %64 = vector.broadcast %63 : vector<1x128xf32> to vector<2x128xf32>
    %65 = arith.mulf %25, %64 : vector<2x128xf32>
    %66 = vector.extract_strided_slice %62 {offsets = [1, 0], sizes = [1, 128], strides = [1, 1]} : vector<2x128xf32> to vector<1x128xf32>
    %67 = vector.broadcast %66 : vector<1x128xf32> to vector<2x128xf32>
    %68 = arith.addf %65, %67 : vector<2x128xf32>
    %cst_25 = arith.constant 0.000000e+00 : f32
    %69 = vector.broadcast %cst_25 : f32 to vector<2x128xf32>
    %70 = arith.cmpf oge, %68, %69 : vector<2x128xf32>
    %cst_26 = arith.constant 5.000000e-02 : f32
    %71 = vector.broadcast %cst_26 : f32 to vector<2x128xf32>
    %72 = arith.mulf %71, %68 : vector<2x128xf32>
    %73 = arith.select %70, %68, %72 : vector<2x128xi1>, vector<2x128xf32>
    %74 = arith.truncf %73 : vector<2x128xf32> to vector<2x128xbf16>
    %c0_27 = arith.constant 0 : index
    %c0_28 = arith.constant 0 : index
    %75 = vector.load %arg7[%c0_27, %c0_28] : memref<128x256xbf16, #tpu.memory_space<vmem>>, vector<128x256xbf16>
    %cst_29 = arith.constant dense<0.000000e+00> : vector<2x256xf32>
    %76 = tpu.matmul %74, %75, %cst_29 {dimension_numbers = #tpu.dot_dimension_numbers<[1], [0], [0], [1], [0, 0, 1, 1], [], []>} : vector<2x128xbf16>, vector<128x256xbf16>, vector<2x256xf32> -> vector<2x256xf32>
    %c0_30 = arith.constant 0 : index
    %c0_31 = arith.constant 0 : index
    %77 = vector.load %arg8[%c0_30, %c0_31] : memref<256x16xf32, #tpu.memory_space<vmem>>, vector<256x16xf32>
    %c0_32 = arith.constant 0 : index
    %c0_33 = arith.constant 0 : index
    %78 = vector.load %arg9[%c0_32, %c0_33] : memref<16x256xf32, #tpu.memory_space<vmem>>, vector<16x256xf32>
    %cst_34 = arith.constant dense<0.000000e+00> : vector<256xf32>
    %79 = vector.multi_reduction <add>, %76, %cst_34 [0] : vector<2x256xf32> to vector<256xf32>
    %80 = vector.shape_cast %79 : vector<256xf32> to vector<1x256xf32>
    %81 = arith.mulf %76, %76 : vector<2x256xf32>
    %cst_35 = arith.constant dense<0.000000e+00> : vector<256xf32>
    %82 = vector.multi_reduction <add>, %81, %cst_35 [0] : vector<2x256xf32> to vector<256xf32>
    %83 = vector.shape_cast %82 : vector<256xf32> to vector<1x256xf32>
    %84 = tpu.iota {dimensions = array<i32: 0>} : vector<2x256xi32>
    %c0_i32_36 = arith.constant 0 : i32
    %85 = vector.broadcast %c0_i32_36 : i32 to vector<2x256xi32>
    %86 = arith.cmpi eq, %84, %85 : vector<2x256xi32>
    %87 = vector.shape_cast %80 : vector<1x256xf32> to vector<1x256xf32>
    %88 = vector.broadcast %87 : vector<1x256xf32> to vector<2x256xf32>
    %89 = vector.shape_cast %83 : vector<1x256xf32> to vector<1x256xf32>
    %90 = vector.broadcast %89 : vector<1x256xf32> to vector<2x256xf32>
    %91 = arith.select %86, %88, %90 : vector<2x256xi1>, vector<2x256xf32>
    %cst_37 = arith.constant dense<0.000000e+00> : vector<2x16xf32>
    %92 = tpu.matmul %91, %77, %cst_37 {dimension_numbers = #tpu.dot_dimension_numbers<[1], [0], [0], [1], [0, 0, 1, 1], [], []>} : vector<2x256xf32>, vector<256x16xf32>, vector<2x16xf32> -> vector<2x16xf32>
    %cst_38 = arith.constant 3.125000e-02 : f32
    %93 = vector.broadcast %cst_38 : f32 to vector<2x16xf32>
    %94 = arith.mulf %92, %93 : vector<2x16xf32>
    %95 = vector.extract_strided_slice %94 {offsets = [0, 0], sizes = [1, 16], strides = [1, 1]} : vector<2x16xf32> to vector<1x16xf32>
    %96 = vector.extract_strided_slice %94 {offsets = [1, 0], sizes = [1, 16], strides = [1, 1]} : vector<2x16xf32> to vector<1x16xf32>
    %97 = arith.mulf %95, %95 : vector<1x16xf32>
    %98 = arith.subf %96, %97 : vector<1x16xf32>
    %cst_39 = arith.constant 9.99999974E-6 : f32
    %99 = vector.broadcast %cst_39 : f32 to vector<1x16xf32>
    %100 = arith.addf %98, %99 : vector<1x16xf32>
    %101 = math.rsqrt %100 : vector<1x16xf32>
    %cst_40 = arith.constant 0.000000e+00 : f32
    %102 = vector.broadcast %cst_40 : f32 to vector<1x16xf32>
    %103 = arith.subf %102, %95 : vector<1x16xf32>
    %104 = arith.mulf %103, %101 : vector<1x16xf32>
    %105 = tpu.iota {dimensions = array<i32: 0>} : vector<2x16xi32>
    %c0_i32_41 = arith.constant 0 : i32
    %106 = vector.broadcast %c0_i32_41 : i32 to vector<2x16xi32>
    %107 = arith.cmpi eq, %105, %106 : vector<2x16xi32>
    %108 = vector.shape_cast %101 : vector<1x16xf32> to vector<1x16xf32>
    %109 = vector.broadcast %108 : vector<1x16xf32> to vector<2x16xf32>
    %110 = vector.shape_cast %104 : vector<1x16xf32> to vector<1x16xf32>
    %111 = vector.broadcast %110 : vector<1x16xf32> to vector<2x16xf32>
    %112 = arith.select %107, %109, %111 : vector<2x16xi1>, vector<2x16xf32>
    %cst_42 = arith.constant dense<0.000000e+00> : vector<2x256xf32>
    %113 = tpu.matmul %112, %78, %cst_42 {dimension_numbers = #tpu.dot_dimension_numbers<[1], [0], [0], [1], [0, 0, 1, 1], [], []>} : vector<2x16xf32>, vector<16x256xf32>, vector<2x256xf32> -> vector<2x256xf32>
    %114 = vector.extract_strided_slice %113 {offsets = [0, 0], sizes = [1, 256], strides = [1, 1]} : vector<2x256xf32> to vector<1x256xf32>
    %115 = vector.broadcast %114 : vector<1x256xf32> to vector<2x256xf32>
    %116 = arith.mulf %76, %115 : vector<2x256xf32>
    %117 = vector.extract_strided_slice %113 {offsets = [1, 0], sizes = [1, 256], strides = [1, 1]} : vector<2x256xf32> to vector<1x256xf32>
    %118 = vector.broadcast %117 : vector<1x256xf32> to vector<2x256xf32>
    %119 = arith.addf %116, %118 : vector<2x256xf32>
    %cst_43 = arith.constant 0.000000e+00 : f32
    %120 = vector.broadcast %cst_43 : f32 to vector<2x256xf32>
    %121 = arith.cmpf oge, %119, %120 : vector<2x256xf32>
    %cst_44 = arith.constant 5.000000e-02 : f32
    %122 = vector.broadcast %cst_44 : f32 to vector<2x256xf32>
    %123 = arith.mulf %122, %119 : vector<2x256xf32>
    %124 = arith.select %121, %119, %123 : vector<2x256xi1>, vector<2x256xf32>
    %125 = arith.truncf %124 : vector<2x256xf32> to vector<2x256xbf16>
    %c0_45 = arith.constant 0 : index
    %c0_46 = arith.constant 0 : index
    %126 = vector.load %arg10[%c0_45, %c0_46] : memref<256x512xbf16, #tpu.memory_space<vmem>>, vector<256x512xbf16>
    %cst_47 = arith.constant dense<0.000000e+00> : vector<2x512xf32>
    %127 = tpu.matmul %125, %126, %cst_47 {dimension_numbers = #tpu.dot_dimension_numbers<[1], [0], [0], [1], [0, 0, 1, 1], [], []>} : vector<2x256xbf16>, vector<256x512xbf16>, vector<2x512xf32> -> vector<2x512xf32>
    %c0_48 = arith.constant 0 : index
    %c0_49 = arith.constant 0 : index
    %128 = vector.load %arg11[%c0_48, %c0_49] : memref<512x8xf32, #tpu.memory_space<vmem>>, vector<512x8xf32>
    %c0_50 = arith.constant 0 : index
    %c0_51 = arith.constant 0 : index
    %129 = vector.load %arg12[%c0_50, %c0_51] : memref<8x512xf32, #tpu.memory_space<vmem>>, vector<8x512xf32>
    %cst_52 = arith.constant dense<0.000000e+00> : vector<512xf32>
    %130 = vector.multi_reduction <add>, %127, %cst_52 [0] : vector<2x512xf32> to vector<512xf32>
    %131 = vector.shape_cast %130 : vector<512xf32> to vector<1x512xf32>
    %132 = arith.mulf %127, %127 : vector<2x512xf32>
    %cst_53 = arith.constant dense<0.000000e+00> : vector<512xf32>
    %133 = vector.multi_reduction <add>, %132, %cst_53 [0] : vector<2x512xf32> to vector<512xf32>
    %134 = vector.shape_cast %133 : vector<512xf32> to vector<1x512xf32>
    %135 = tpu.iota {dimensions = array<i32: 0>} : vector<2x512xi32>
    %c0_i32_54 = arith.constant 0 : i32
    %136 = vector.broadcast %c0_i32_54 : i32 to vector<2x512xi32>
    %137 = arith.cmpi eq, %135, %136 : vector<2x512xi32>
    %138 = vector.shape_cast %131 : vector<1x512xf32> to vector<1x512xf32>
    %139 = vector.broadcast %138 : vector<1x512xf32> to vector<2x512xf32>
    %140 = vector.shape_cast %134 : vector<1x512xf32> to vector<1x512xf32>
    %141 = vector.broadcast %140 : vector<1x512xf32> to vector<2x512xf32>
    %142 = arith.select %137, %139, %141 : vector<2x512xi1>, vector<2x512xf32>
    %cst_55 = arith.constant dense<0.000000e+00> : vector<2x8xf32>
    %143 = tpu.matmul %142, %128, %cst_55 {dimension_numbers = #tpu.dot_dimension_numbers<[1], [0], [0], [1], [0, 0, 1, 1], [], []>} : vector<2x512xf32>, vector<512x8xf32>, vector<2x8xf32> -> vector<2x8xf32>
    %cst_56 = arith.constant 7.812500e-03 : f32
    %144 = vector.broadcast %cst_56 : f32 to vector<2x8xf32>
    %145 = arith.mulf %143, %144 : vector<2x8xf32>
    %146 = vector.extract_strided_slice %145 {offsets = [0, 0], sizes = [1, 8], strides = [1, 1]} : vector<2x8xf32> to vector<1x8xf32>
    %147 = vector.extract_strided_slice %145 {offsets = [1, 0], sizes = [1, 8], strides = [1, 1]} : vector<2x8xf32> to vector<1x8xf32>
    %148 = arith.mulf %146, %146 : vector<1x8xf32>
    %149 = arith.subf %147, %148 : vector<1x8xf32>
    %cst_57 = arith.constant 9.99999974E-6 : f32
    %150 = vector.broadcast %cst_57 : f32 to vector<1x8xf32>
    %151 = arith.addf %149, %150 : vector<1x8xf32>
    %152 = math.rsqrt %151 : vector<1x8xf32>
    %cst_58 = arith.constant 0.000000e+00 : f32
    %153 = vector.broadcast %cst_58 : f32 to vector<1x8xf32>
    %154 = arith.subf %153, %146 : vector<1x8xf32>
    %155 = arith.mulf %154, %152 : vector<1x8xf32>
    %156 = tpu.iota {dimensions = array<i32: 0>} : vector<2x8xi32>
    %c0_i32_59 = arith.constant 0 : i32
    %157 = vector.broadcast %c0_i32_59 : i32 to vector<2x8xi32>
    %158 = arith.cmpi eq, %156, %157 : vector<2x8xi32>
    %159 = vector.shape_cast %152 : vector<1x8xf32> to vector<1x8xf32>
    %160 = vector.broadcast %159 : vector<1x8xf32> to vector<2x8xf32>
    %161 = vector.shape_cast %155 : vector<1x8xf32> to vector<1x8xf32>
    %162 = vector.broadcast %161 : vector<1x8xf32> to vector<2x8xf32>
    %163 = arith.select %158, %160, %162 : vector<2x8xi1>, vector<2x8xf32>
    %cst_60 = arith.constant dense<0.000000e+00> : vector<2x512xf32>
    %164 = tpu.matmul %163, %129, %cst_60 {dimension_numbers = #tpu.dot_dimension_numbers<[1], [0], [0], [1], [0, 0, 1, 1], [], []>} : vector<2x8xf32>, vector<8x512xf32>, vector<2x512xf32> -> vector<2x512xf32>
    %165 = vector.extract_strided_slice %164 {offsets = [0, 0], sizes = [1, 512], strides = [1, 1]} : vector<2x512xf32> to vector<1x512xf32>
    %166 = vector.broadcast %165 : vector<1x512xf32> to vector<2x512xf32>
    %167 = arith.mulf %127, %166 : vector<2x512xf32>
    %168 = vector.extract_strided_slice %164 {offsets = [1, 0], sizes = [1, 512], strides = [1, 1]} : vector<2x512xf32> to vector<1x512xf32>
    %169 = vector.broadcast %168 : vector<1x512xf32> to vector<2x512xf32>
    %170 = arith.addf %167, %169 : vector<2x512xf32>
    %cst_61 = arith.constant 0.000000e+00 : f32
    %171 = vector.broadcast %cst_61 : f32 to vector<2x512xf32>
    %172 = arith.cmpf oge, %170, %171 : vector<2x512xf32>
    %cst_62 = arith.constant 5.000000e-02 : f32
    %173 = vector.broadcast %cst_62 : f32 to vector<2x512xf32>
    %174 = arith.mulf %173, %170 : vector<2x512xf32>
    %175 = arith.select %172, %170, %174 : vector<2x512xi1>, vector<2x512xf32>
    %176 = arith.truncf %175 : vector<2x512xf32> to vector<2x512xbf16>
    %c0_63 = arith.constant 0 : index
    %c0_64 = arith.constant 0 : index
    %177 = vector.load %arg13[%c0_63, %c0_64] : memref<512x768xbf16, #tpu.memory_space<vmem>>, vector<512x768xbf16>
    %cst_65 = arith.constant dense<0.000000e+00> : vector<2x768xf32>
    %178 = tpu.matmul %176, %177, %cst_65 {dimension_numbers = #tpu.dot_dimension_numbers<[1], [0], [0], [1], [0, 0, 1, 1], [], []>} : vector<2x512xbf16>, vector<512x768xbf16>, vector<2x768xf32> -> vector<2x768xf32>
    %c0_66 = arith.constant 0 : index
    %c0_67 = arith.constant 0 : index
    %179 = vector.load %arg14[%c0_66, %c0_67] : memref<1x768xf32, #tpu.memory_space<vmem>>, vector<1x768xf32>
    %180 = vector.broadcast %179 : vector<1x768xf32> to vector<2x768xf32>
    %181 = arith.addf %178, %180 : vector<2x768xf32>
    %182 = math.tanh %181 : vector<2x768xf32>
    %c0_68 = arith.constant 0 : index
    %c0_69 = arith.constant 0 : index
    %183 = vector.load %arg15[%c0_68, %c0_69] : memref<2x768xf32, #tpu.memory_space<vmem>>, vector<2x768xf32>
    tpu.vector_store %arg15[%c0_68, %c0_69], %182 {strides = array<i32>} : memref<2x768xf32, #tpu.memory_space<vmem>>, vector<2x768xf32>,
    return
  }
  func.func @transform_0(%arg0: i32) -> (i32, i32) {
    %c0_i32 = arith.constant 0 : i32
    %c0_i32_0 = arith.constant 0 : i32
    %c0_i32_1 = arith.constant 0 : i32
    return %c0_i32, %c0_i32_0 : i32, i32
  }
  func.func @transform_1(%arg0: i32) -> (i32, i32) {
    %c0_i32 = arith.constant 0 : i32
    %c0_i32_0 = arith.constant 0 : i32
    %c0_i32_1 = arith.constant 0 : i32
    return %c0_i32, %c0_i32_0 : i32, i32
  }
  func.func @transform_2(%arg0: i32) -> (i32, i32) {
    %c0_i32 = arith.constant 0 : i32
    %c0_i32_0 = arith.constant 0 : i32
    %c0_i32_1 = arith.constant 0 : i32
    return %c0_i32, %c0_i32_0 : i32, i32
  }
  func.func @transform_3(%arg0: i32) -> (i32, i32) {
    %c0_i32 = arith.constant 0 : i32
    %c0_i32_0 = arith.constant 0 : i32
    %c0_i32_1 = arith.constant 0 : i32
    return %c0_i32, %c0_i32_0 : i32, i32
  }
  func.func @transform_4(%arg0: i32) -> (i32, i32) {
    %c0_i32 = arith.constant 0 : i32
    %c0_i32_0 = arith.constant 0 : i32
    %c0_i32_1 = arith.constant 0 : i32
    return %c0_i32, %c0_i32_0 : i32, i32
  }
  func.func @transform_5(%arg0: i32) -> (i32, i32) {
    %c0_i32 = arith.constant 0 : i32
    %c0_i32_0 = arith.constant 0 : i32
    %c0_i32_1 = arith.constant 0 : i32
    return %c0_i32, %c0_i32_0 : i32, i32
  }
  func.func @transform_6(%arg0: i32) -> (i32, i32) {
    %c0_i32 = arith.constant 0 : i32
    %c0_i32_0 = arith.constant 0 : i32
    %c0_i32_1 = arith.constant 0 : i32
    return %c0_i32, %c0_i32_0 : i32, i32
  }
  func.func @transform_7(%arg0: i32) -> (i32, i32) {
    %c0_i32 = arith.constant 0 : i32
    %c0_i32_0 = arith.constant 0 : i32
    %c0_i32_1 = arith.constant 0 : i32
    return %c0_i32, %c0_i32_0 : i32, i32
  }
  func.func @transform_8(%arg0: i32) -> (i32, i32) {
    %c0_i32 = arith.constant 0 : i32
    %c0_i32_0 = arith.constant 0 : i32
    %c0_i32_1 = arith.constant 0 : i32
    return %c0_i32, %c0_i32_0 : i32, i32
  }
  func.func @transform_9(%arg0: i32) -> (i32, i32) {
    %c0_i32 = arith.constant 0 : i32
    %c0_i32_0 = arith.constant 0 : i32
    %c0_i32_1 = arith.constant 0 : i32
    return %c0_i32, %c0_i32_0 : i32, i32
  }
  func.func @transform_10(%arg0: i32) -> (i32, i32) {
    %c0_i32 = arith.constant 0 : i32
    %c0_i32_0 = arith.constant 0 : i32
    %c0_i32_1 = arith.constant 0 : i32
    return %c0_i32, %c0_i32_0 : i32, i32
  }
  func.func @transform_11(%arg0: i32) -> (i32, i32) {
    %c0_i32 = arith.constant 0 : i32
    %c0_i32_0 = arith.constant 0 : i32
    %c0_i32_1 = arith.constant 0 : i32
    return %c0_i32, %c0_i32_0 : i32, i32
  }
  func.func @transform_12(%arg0: i32) -> (i32, i32) {
    %c0_i32 = arith.constant 0 : i32
    %c0_i32_0 = arith.constant 0 : i32
    %c0_i32_1 = arith.constant 0 : i32
    return %c0_i32, %c0_i32_0 : i32, i32
  }
  func.func @transform_13(%arg0: i32) -> (i32, i32) {
    %c0_i32 = arith.constant 0 : i32
    %c0_i32_0 = arith.constant 0 : i32
    %c0_i32_1 = arith.constant 0 : i32
    return %c0_i32, %c0_i32_0 : i32, i32
  }
  func.func @transform_14(%arg0: i32) -> (i32, i32) {
    %c0_i32 = arith.constant 0 : i32
    %c0_i32_0 = arith.constant 0 : i32
    %c0_i32_1 = arith.constant 0 : i32
    return %c0_i32, %c0_i32_0 : i32, i32
  }
}

</mosaic_0001>

<llo_original>
// kernel: generator_forward.1
$region0: #{generator_forward.1}
  #allocation0 [shape = 'u32[]', space=smem, size = 0x4, offset = 0x4, fixed_abs, tag = 'smem constant byte address 0x4 - core index']
  #allocation1 [shape = 'u32[144,128]{1,0:T(1,128)}', space=vmem, size = 0x12000, scoped, tag = 'internal scratch']
  %s0 = inlined_call_operand.vmem [shape: f32[2,16], index: 0, kind: input, shape index: {}]
  %s1 = inlined_call_operand.vmem [shape: bf16[16,128], index: 1, kind: input, shape index: {}]
  %s2 = inlined_call_operand.vmem [shape: bf16[128,128], index: 2, kind: input, shape index: {}]
  %s3 = inlined_call_operand.vmem [shape: f32[1,128], index: 3, kind: input, shape index: {}]
  %s4 = inlined_call_operand.vmem [shape: f32[128,32], index: 4, kind: input, shape index: {}]
  %s5 = inlined_call_operand.vmem [shape: f32[32,128], index: 5, kind: input, shape index: {}]
  %s6 = inlined_call_operand.vmem [shape: bf16[128,256], index: 6, kind: input, shape index: {}]
  %s7 = inlined_call_operand.vmem [shape: f32[256,16], index: 7, kind: input, shape index: {}]
  %s8 = inlined_call_operand.vmem [shape: f32[16,256], index: 8, kind: input, shape index: {}]
  %s9 = inlined_call_operand.vmem [shape: bf16[256,512], index: 9, kind: input, shape index: {}]
  %s10 = inlined_call_operand.vmem [shape: f32[512,8], index: 10, kind: input, shape index: {}]
  %s11 = inlined_call_operand.vmem [shape: f32[8,512], index: 11, kind: input, shape index: {}]
  %s12 = inlined_call_operand.hbm [shape: bf16[512,768], index: 12, kind: input, shape index: {}]
  %s13 = inlined_call_operand.vmem [shape: f32[1,768], index: 13, kind: input, shape index: {}]
  %s14 = inlined_call_operand.vmem [shape: f32[2,768], index: 14, kind: output, shape index: {}]
  %s15 = sld [smem:[#allocation0]]
  $region70: #{generator_forward.1} parent=0
    _
  %s17 = ssub.s32 1, %s15
  %s18 = scalar_select 0, %s17, %s15
  $region1: #{generator_forward.1} parent=0
    #allocation2 [shape = 'u8[786432]{0}', space=vmem, size = 0xc0000, scoped, tag = 'input window, operand 12, single buffered']
    #allocation3 [shape = 's32[1]{0}', space=sflag, size = 0x4, scoped, tag = 'scoped memory for generator_forward.1']
    %19 = vsyncpa [#allocation3], 0
    // Predicated region
    $region2: #{generator_forward.1} parent=1 // pred_check
      _
    $region3: #{generator_forward.1} parent=1 // pred_check_branch
      %21 = sbr.rel (0) target = $region5
    $region4: #{generator_forward.1} parent=1 // pred_region
      _
    $region5: #{generator_forward.1} parent=1 // pred_fallthru
      _
    // Predicated region
    $region6: #{generator_forward.1} parent=1 // pred_check
      _
    $region7: #{generator_forward.1} parent=1 // pred_check_branch
      %23 = sbr.rel (0) target = $region9
    $region8: #{generator_forward.1} parent=1 // pred_region
      _
    $region9: #{generator_forward.1} parent=1 // pred_fallthru
      _
    // Predicated region
    $region10: #{generator_forward.1} parent=1 // pred_check
      _
    $region11: #{generator_forward.1} parent=1 // pred_check_branch
      %25 = sbr.rel (0) target = $region13
    $region12: #{generator_forward.1} parent=1 // pred_region
      _
    $region13: #{generator_forward.1} parent=1 // pred_fallthru
      _
    // Predicated region
    $region14: #{generator_forward.1} parent=1 // pred_check
      _
    $region15: #{generator_forward.1} parent=1 // pred_check_branch
      %27 = sbr.rel (0) target = $region17
    $region16: #{generator_forward.1} parent=1 // pred_region
      _
    $region17: #{generator_forward.1} parent=1 // pred_fallthru
      _
    // Predicated region
    $region18: #{generator_forward.1} parent=1 // pred_check
      _
    $region19: #{generator_forward.1} parent=1 // pred_check_branch
      %29 = sbr.rel (0) target = $region21
    $region20: #{generator_forward.1} parent=1 // pred_region
      _
    $region21: #{generator_forward.1} parent=1 // pred_fallthru
      _
    // Predicated region
    $region22: #{generator_forward.1} parent=1 // pred_check
      _
    $region23: #{generator_forward.1} parent=1 // pred_check_branch
      %31 = sbr.rel (0) target = $region25
    $region24: #{generator_forward.1} parent=1 // pred_region
      _
    $region25: #{generator_forward.1} parent=1 // pred_fallthru
      _
    // Predicated region
    $region26: #{generator_forward.1} parent=1 // pred_check
      _
    $region27: #{generator_forward.1} parent=1 // pred_check_branch
      %33 = sbr.rel (0) target = $region29
    $region28: #{generator_forward.1} parent=1 // pred_region
      _
    $region29: #{generator_forward.1} parent=1 // pred_fallthru
      _
    // Predicated region
    $region30: #{generator_forward.1} parent=1 // pred_check
      _
    $region31: #{generator_forward.1} parent=1 // pred_check_branch
      %35 = sbr.rel (0) target = $region33
    $region32: #{generator_forward.1} parent=1 // pred_region
      _
    $region33: #{generator_forward.1} parent=1 // pred_fallthru
      _
    // Predicated region
    $region34: #{generator_forward.1} parent=1 // pred_check
      _
    $region35: #{generator_forward.1} parent=1 // pred_check_branch
      %37 = sbr.rel (0) target = $region37
    $region36: #{generator_forward.1} parent=1 // pred_region
      _
    $region37: #{generator_forward.1} parent=1 // pred_fallthru
      _
    // Predicated region
    $region38: #{generator_forward.1} parent=1 // pred_check
      _
    $region39: #{generator_forward.1} parent=1 // pred_check_branch
      %39 = sbr.rel (0) target = $region41
    $region40: #{generator_forward.1} parent=1 // pred_region
      _
    $region41: #{generator_forward.1} parent=1 // pred_fallthru
      _
    // Predicated region
    $region42: #{generator_forward.1} parent=1 // pred_check
      _
    $region43: #{generator_forward.1} parent=1 // pred_check_branch
      %41 = sbr.rel (0) target = $region45
    $region44: #{generator_forward.1} parent=1 // pred_region
      _
    $region45: #{generator_forward.1} parent=1 // pred_fallthru
      _
    // Predicated region
    $region46: #{generator_forward.1} parent=1 // pred_check
      _
    $region47: #{generator_forward.1} parent=1 // pred_check_branch
      %43 = sbr.rel (0) target = $region49
    $region48: #{generator_forward.1} parent=1 // pred_region
      _
    $region49: #{generator_forward.1} parent=1 // pred_fallthru
      _
    // Predicated region
    $region50: #{generator_forward.1} parent=1 // pred_check
      _
    $region51: #{generator_forward.1} parent=1 // pred_check_branch
      %45 = sbr.rel (0) target = $region53
    $region52: #{generator_forward.1} parent=1 // pred_region
      %s47 = ssub.s32 24576, 24576
      %48 = vsyncadd [#allocation3], %s47
      %s49 = sshll.u32 [#allocation2], 4
      %s50 = int_to_ptr.vmem [resolvable:$true] %s49
      %55 = dma.hbm_to_vmem [thread:$0]  %s12, 24576, %s50, [#allocation3], 384, 384, 24
    $region53: #{generator_forward.1} parent=1 // pred_fallthru
      _
    // Predicated region
    $region54: #{generator_forward.1} parent=1 // pred_check
      _
    $region55: #{generator_forward.1} parent=1 // pred_check_branch
      %57 = sbr.rel (0) target = $region57
    $region56: #{generator_forward.1} parent=1 // pred_region
      _
    $region57: #{generator_forward.1} parent=1 // pred_fallthru
      _
    // Predicated region
    $region58: #{generator_forward.1} parent=1 // pred_check
      _
    $region59: #{generator_forward.1} parent=1 // pred_check_branch
      %59 = sbr.rel (0) target = $region61
    $region60: #{generator_forward.1} parent=1 // pred_region
      %60 = dma.done [#allocation3], 24576
    $region61: #{generator_forward.1} parent=1 // pred_fallthru
      _
    %v62 = vld [vmem:[%s0] sm:$0x3]
    %v63 = vpack.c.bf16 %v62, %v62
    %v64 = vld [vmem:[%s1] sm:$0xf]
    %v65 = vld [vmem:[%s1 + $0x4] sm:$0xf]
    %v68 = vunpack.c.l.b16 %v64
    %v69 = vunpack.c.l.b16 %v65
    %v70 = vpack.c.b16 %v69, %v68
    %vm72 = vcmask 130048
    %v74 = vsel %vm72, %v63, 0
    %76 = vmatprep.subr.bf16.mxu0 0
    %77 = vmatpush1.bf16.msra.mxu0 %v70
    %78 = vmatprep.subr.bf16.mxu0 0
    %79 = vmatpush1.bf16.msra.mxu0 0
    %80 = vmatprep.subr.bf16.mxu0 0
    %81 = vmatpush1.bf16.msra.mxu0 0
    %82 = vmatprep.subr.bf16.mxu0 0
    %83 = vmatpush1.bf16.msra.mxu0 0
    %84 = vmatprep.subr.bf16.mxu0 0
    %85 = vmatpush1.bf16.msra.mxu0 0
    %86 = vmatprep.subr.bf16.mxu0 0
    %87 = vmatpush1.bf16.msra.mxu0 0
    %88 = vmatprep.subr.bf16.mxu0 0
    %89 = vmatpush1.bf16.msra.mxu0 0
    %90 = vmatprep.subr.bf16.mxu0 0
    %91 = vmatpush1.bf16.msra.mxu0 0
    %92 = vmatprep.subr.bf16.mxu0 0
    %93 = vmatpush1.bf16.msra.mxu0 0
    %94 = vmatprep.subr.bf16.mxu0 0
    %95 = vmatpush1.bf16.msra.mxu0 0
    %96 = vmatprep.subr.bf16.mxu0 0
    %97 = vmatpush1.bf16.msra.mxu0 0
    %98 = vmatprep.subr.bf16.mxu0 0
    %99 = vmatpush1.bf16.msra.mxu0 0
    %100 = vmatprep.subr.bf16.mxu0 0
    %101 = vmatpush1.bf16.msra.mxu0 0
    %102 = vmatprep.subr.bf16.mxu0 0
    %103 = vmatpush1.bf16.msra.mxu0 0
    %104 = vmatprep.subr.bf16.mxu0 0
    %105 = vmatpush1.bf16.msra.mxu0 0
    %106 = vmatprep.subr.bf16.mxu0 0
    %107 = vmatpush1.bf16.msra.mxu0 0
    %108 = vmatprep.mubr.bf16.mxu0 0
    %109 = vmatmul.mubr.bf16.gmra.mrb[0].mxu0 %v74
    %v110 = vpop.f32.mrb[0].mxu0
    %v111 = vadd.f32 0.0, %v110
    %v112 = vpop.f32.mrb[0].mxu0
    %v113 = vpop.f32.mrb[0].mxu0
    %v114 = vpop.f32.mrb[0].mxu0
    %115 = vdwg.mxu0
    %vm116 = vcmask 1041408
    %v117 = vsel %vm116, %v111, 0.0
    %v118 = vrot.slane %v117, 4
    %v119 = vadd.f32 %v117, %v118
    %v120 = vrot.slane %v119, 2
    %v121 = vadd.f32 %v119, %v120
    %v122 = vrot.slane %v121, 1
    %v123 = vadd.f32 %v121, %v122
    %v124 = vrcp.pop 2.0
    %v125 = vmul.f32 %v123, %v124
    %v126 = vsub.f32 %v111, %v125
    %v127 = vmul.f32 %v126, %v126
    %v128 = vsel %vm116, %v127, 0.0
    %v129 = vrot.slane %v128, 4
    %v130 = vadd.f32 %v128, %v129
    %v131 = vrot.slane %v130, 2
    %v132 = vadd.f32 %v130, %v131
    %v133 = vrot.slane %v132, 1
    %v134 = vadd.f32 %v132, %v133
    %v135 = vmul.f32 %v134, %v124
    %v136 = vadd.f32 %v135, 1e-05
    %v137 = vrsqrt.pop %v136
    %v138 = vmul.f32 %v126, %v137
    %v139 = vpack.c.bf16 %v138, %v138
    %v140 = vld [vmem:[%s2] sm:$0xf]
    %v141 = vld [vmem:[%s2 + $0x4] sm:$0xf]
    %v142 = vld [vmem:[%s2 + $0x8] sm:$0xf]
    %v143 = vld [vmem:[%s2 + $0xc] sm:$0xf]
    %v144 = vld [vmem:[%s2 + $0x10] sm:$0xf]
    %v145 = vld [vmem:[%s2 + $0x14] sm:$0xf]
    %v146 = vld [vmem:[%s2 + $0x18] sm:$0xf]
    %v147 = vld [vmem:[%s2 + $0x1c] sm:$0xf]
    %v148 = vld [vmem:[%s2 + $0x20] sm:$0xf]
    %v149 = vld [vmem:[%s2 + $0x24] sm:$0xf]
    %v150 = vld [vmem:[%s2 + $0x28] sm:$0xf]
    %v151 = vld [vmem:[%s2 + $0x2c] sm:$0xf]
    %v152 = vld [vmem:[%s2 + $0x30] sm:$0xf]
    %v153 = vld [vmem:[%s2 + $0x34] sm:$0xf]
    %v154 = vld [vmem:[%s2 + $0x38] sm:$0xf]
    %v155 = vld [vmem:[%s2 + $0x3c] sm:$0xf]
    %v156 = vld [vmem:[%s3] sm:$0x1]
    %v158 = vlaneseq
    %v159 = vshrl.u32 %v158, 7
    %v160 = vsub.s32 0, %v159
    %v161 = vrot.slane %v156, %v160
    %v179 = vunpack.c.l.b16 %v140
    %v180 = vunpack.c.l.b16 %v141
    %v181 = vunpack.c.l.b16 %v142
    %v182 = vunpack.c.l.b16 %v143
    %v183 = vunpack.c.l.b16 %v144
    %v184 = vunpack.c.l.b16 %v145
    %v185 = vunpack.c.l.b16 %v146
    %v186 = vunpack.c.l.b16 %v147
    %v187 = vunpack.c.l.b16 %v148
    %v188 = vunpack.c.l.b16 %v149
    %v189 = vunpack.c.l.b16 %v150
    %v190 = vunpack.c.l.b16 %v151
    %v191 = vunpack.c.l.b16 %v152
    %v192 = vunpack.c.l.b16 %v153
    %v193 = vunpack.c.l.b16 %v154
    %v194 = vunpack.c.l.b16 %v155
    %v195 = vpack.c.b16 %v180, %v179
    %v196 = vpack.c.b16 %v182, %v181
    %v197 = vpack.c.b16 %v184, %v183
    %v198 = vpack.c.b16 %v186, %v185
    %v199 = vpack.c.b16 %v188, %v187
    %v200 = vpack.c.b16 %v190, %v189
    %v201 = vpack.c.b16 %v192, %v191
    %v202 = vpack.c.b16 %v194, %v193
    %211 = vmatprep.subr.bf16.mxu0 0
    %212 = vmatpush1.bf16.msra.mxu0 %v195
    %213 = vmatprep.subr.bf16.mxu0 0
    %214 = vmatpush1.bf16.msra.mxu0 %v196
    %215 = vmatprep.subr.bf16.mxu0 0
    %216 = vmatpush1.bf16.msra.mxu0 %v197
    %217 = vmatprep.subr.bf16.mxu0 0
    %218 = vmatpush1.bf16.msra.mxu0 %v198
    %219 = vmatprep.subr.bf16.mxu0 0
    %220 = vmatpush1.bf16.msra.mxu0 %v199
    %221 = vmatprep.subr.bf16.mxu0 0
    %222 = vmatpush1.bf16.msra.mxu0 %v200
    %223 = vmatprep.subr.bf16.mxu0 0
    %224 = vmatpush1.bf16.msra.mxu0 %v201
    %225 = vmatprep.subr.bf16.mxu0 0
    %226 = vmatpush1.bf16.msra.mxu0 %v202
    %227 = vmatprep.subr.bf16.mxu0 0
    %228 = vmatpush1.bf16.msra.mxu0 0
    %229 = vmatprep.subr.bf16.mxu0 0
    %230 = vmatpush1.bf16.msra.mxu0 0
    %231 = vmatprep.subr.bf16.mxu0 0
    %232 = vmatpush1.bf16.msra.mxu0 0
    %233 = vmatprep.subr.bf16.mxu0 0
    %234 = vmatpush1.bf16.msra.mxu0 0
    %235 = vmatprep.subr.bf16.mxu0 0
    %236 = vmatpush1.bf16.msra.mxu0 0
    %237 = vmatprep.subr.bf16.mxu0 0
    %238 = vmatpush1.bf16.msra.mxu0 0
    %239 = vmatprep.subr.bf16.mxu0 0
    %240 = vmatpush1.bf16.msra.mxu0 0
    %241 = vmatprep.subr.bf16.mxu0 0
    %242 = vmatpush1.bf16.msra.mxu0 0
    %243 = vmatprep.mubr.bf16.mxu0 0
    %244 = vmatmul.mubr.bf16.gmra.mrb[0].mxu0 %v139
    %v245 = vpop.f32.mrb[0].mxu0
    %v246 = vadd.f32 %v161, %v245
    %v247 = vpop.f32.mrb[0].mxu0
    %v248 = vpop.f32.mrb[0].mxu0
    %v249 = vpop.f32.mrb[0].mxu0
    %250 = vdwg.mxu0
    %v251 = vld [vmem:[%s4] sm:$0xff]
    %v252 = vld [vmem:[%s4 + $0x8] sm:$0xff]
    %v253 = vld [vmem:[%s4 + $0x10] sm:$0xff]
    %v254 = vld [vmem:[%s4 + $0x18] sm:$0xff]
    %v255 = vld [vmem:[%s4 + $0x20] sm:$0xff]
    %v256 = vld [vmem:[%s4 + $0x28] sm:$0xff]
    %v257 = vld [vmem:[%s4 + $0x30] sm:$0xff]
    %v258 = vld [vmem:[%s4 + $0x38] sm:$0xff]
    %v259 = vld [vmem:[%s4 + $0x40] sm:$0xff]
    %v260 = vld [vmem:[%s4 + $0x48] sm:$0xff]
    %v261 = vld [vmem:[%s4 + $0x50] sm:$0xff]
    %v262 = vld [vmem:[%s4 + $0x58] sm:$0xff]
    %v263 = vld [vmem:[%s4 + $0x60] sm:$0xff]
    %v264 = vld [vmem:[%s4 + $0x68] sm:$0xff]
    %v265 = vld [vmem:[%s4 + $0x70] sm:$0xff]
    %v266 = vld [vmem:[%s4 + $0x78] sm:$0xff]
    %v267 = vld [vmem:[%s5] sm:$0xff]
    %v268 = vld [vmem:[%s5 + $0x8] sm:$0xff]
    %v269 = vld [vmem:[%s5 + $0x10] sm:$0xff]
    %v270 = vld [vmem:[%s5 + $0x18] sm:$0xff]
    %v271 = vsel %vm116, %v246, 0.0
    %v272 = vrot.slane %v271, 4
    %v273 = vadd.f32 %v271, %v272
    %v274 = vrot.slane %v273, 2
    %v275 = vadd.f32 %v273, %v274
    %v276 = vrot.slane %v275, 1
    %v277 = vadd.f32 %v275, %v276
    %v278 = vmul.f32 %v246, %v246
    %v279 = vsel %vm116, %v278, 0.0
    %v280 = vrot.slane %v279, 4
    %v281 = vadd.f32 %v279, %v280
    %v282 = vrot.slane %v281, 2
    %v283 = vadd.f32 %v281, %v282
    %v284 = vrot.slane %v283, 1
    %v285 = vadd.f32 %v283, %v284
    %v286 = vlaneseq
    %v287 = vshrl.u32 %v286, 7
    %vm288 = vcmp.eq.s32.totalorder %v287, 0
    %v289 = vsel %vm288, %v277, %v285
    %290 = vmatprep.subr.mxu0 0.0
    %291 = vmatpush1.msra.mxu0 %v251
    %292 = vmatprep.subr.mxu0 0.0
    %293 = vmatpush1.msra.mxu0 %v252
    %294 = vmatprep.subr.mxu0 0.0
    %295 = vmatpush1.msra.mxu0 %v253
    %296 = vmatprep.subr.mxu0 0.0
    %297 = vmatpush1.msra.mxu0 %v254
    %298 = vmatprep.subr.mxu0 0.0
    %299 = vmatpush1.msra.mxu0 %v255
    %300 = vmatprep.subr.mxu0 0.0
    %301 = vmatpush1.msra.mxu0 %v256
    %302 = vmatprep.subr.mxu0 0.0
    %303 = vmatpush1.msra.mxu0 %v257
    %304 = vmatprep.subr.mxu0 0.0
    %305 = vmatpush1.msra.mxu0 %v258
    %306 = vmatprep.subr.mxu0 0.0
    %307 = vmatpush1.msra.mxu0 %v259
    %308 = vmatprep.subr.mxu0 0.0
    %309 = vmatpush1.msra.mxu0 %v260
    %310 = vmatprep.subr.mxu0 0.0
    %311 = vmatpush1.msra.mxu0 %v261
    %312 = vmatprep.subr.mxu0 0.0
    %313 = vmatpush1.msra.mxu0 %v262
    %314 = vmatprep.subr.mxu0 0.0
    %315 = vmatpush1.msra.mxu0 %v263
    %316 = vmatprep.subr.mxu0 0.0
    %317 = vmatpush1.msra.mxu0 %v264
    %318 = vmatprep.subr.mxu0 0.0
    %319 = vmatpush1.msra.mxu0 %v265
    %320 = vmatprep.subr.mxu0 0.0
    %321 = vmatpush1.msra.mxu0 %v266
    %322 = vmatprep.subr.mxu0 0.0
    %323 = vmatpush1.msra.mxu0 0.0
    %324 = vmatprep.subr.mxu0 0.0
    %325 = vmatpush1.msra.mxu0 0.0
    %326 = vmatprep.subr.mxu0 0.0
    %327 = vmatpush1.msra.mxu0 0.0
    %328 = vmatprep.subr.mxu0 0.0
    %329 = vmatpush1.msra.mxu0 0.0
    %330 = vmatprep.subr.mxu0 0.0
    %331 = vmatpush1.msra.mxu0 0.0
    %332 = vmatprep.subr.mxu0 0.0
    %333 = vmatpush1.msra.mxu0 0.0
    %334 = vmatprep.subr.mxu0 0.0
    %335 = vmatpush1.msra.mxu0 0.0
    %336 = vmatprep.subr.mxu0 0.0
    %337 = vmatpush1.msra.mxu0 0.0
    %338 = vmatprep.subr.mxu0 0.0
    %339 = vmatpush1.msra.mxu0 0.0
    %340 = vmatprep.subr.mxu0 0.0
    %341 = vmatpush1.msra.mxu0 0.0
    %342 = vmatprep.subr.mxu0 0.0
    %343 = vmatpush1.msra.mxu0 0.0
    %344 = vmatprep.subr.mxu0 0.0
    %345 = vmatpush1.msra.mxu0 0.0
    %346 = vmatprep.subr.mxu0 0.0
    %347 = vmatpush1.msra.mxu0 0.0
    %348 = vmatprep.subr.mxu0 0.0
    %349 = vmatpush1.msra.mxu0 0.0
    %350 = vmatprep.subr.mxu0 0.0
    %351 = vmatpush1.msra.mxu0 0.0
    %352 = vmatprep.subr.mxu0 0.0
    %353 = vmatpush1.msra.mxu0 0.0
    %354 = vmatprep.mubr.f32.mxu0 0.0
    %355 = vmatmul.mubr.f32.gmra.mrb[0].mxu0 %v289
    %v356 = vpop.f32.mrb[0].mxu0
    %v357 = vadd.f32 0.0, %v356
    %v358 = vpop.f32.mrb[0].mxu0
    %359 = vdwg.mxu0
    %v360 = vmul.f32 %v357, 0.125
    %v361 = vmul.f32 %v360, %v360
    %v363 = vrot.slane %v361, 7
    %v365 = vsub.f32 %v360, %v363
    %v366 = vadd.f32 %v365, 1e-05
    %v367 = vrsqrt.pop %v366
    %v368 = vsub.f32 0.0, %v360
    %v370 = vrot.slane %v367, 1
    %v372 = vmul.f32 %v368, %v370
    %v373 = vlaneseq
    %v374 = vshrl.u32 %v373, 7
    %v375 = vsub.s32 1, %v374
    %v376 = vrot.slane %v367, %v375
    %v377 = vlaneseq
    %v378 = vshrl.u32 %v377, 7
    %v379 = vsub.s32 0, %v378
    %v380 = vrot.slane %v372, %v379
    %v381 = vsel %vm288, %v376, %v380
    %vm382 = vcmask 261120
    %v384 = vsel %vm382, %v381, 0
    %386 = vmatprep.subr.mxu0 0.0
    %387 = vmatpush1.msra.mxu0 %v267
    %388 = vmatprep.subr.mxu0 0.0
    %389 = vmatpush1.msra.mxu0 %v268
    %390 = vmatprep.subr.mxu0 0.0
    %391 = vmatpush1.msra.mxu0 %v269
    %392 = vmatprep.subr.mxu0 0.0
    %393 = vmatpush1.msra.mxu0 %v270
    %394 = vmatprep.subr.mxu0 0.0
    %395 = vmatpush1.msra.mxu0 0.0
    %396 = vmatprep.subr.mxu0 0.0
    %397 = vmatpush1.msra.mxu0 0.0
    %398 = vmatprep.subr.mxu0 0.0
    %399 = vmatpush1.msra.mxu0 0.0
    %400 = vmatprep.subr.mxu0 0.0
    %401 = vmatpush1.msra.mxu0 0.0
    %402 = vmatprep.subr.mxu0 0.0
    %403 = vmatpush1.msra.mxu0 0.0
    %404 = vmatprep.subr.mxu0 0.0
    %405 = vmatpush1.msra.mxu0 0.0
    %406 = vmatprep.subr.mxu0 0.0
    %407 = vmatpush1.msra.mxu0 0.0
    %408 = vmatprep.subr.mxu0 0.0
    %409 = vmatpush1.msra.mxu0 0.0
    %410 = vmatprep.subr.mxu0 0.0
    %411 = vmatpush1.msra.mxu0 0.0
    %412 = vmatprep.subr.mxu0 0.0
    %413 = vmatpush1.msra.mxu0 0.0
    %414 = vmatprep.subr.mxu0 0.0
    %415 = vmatpush1.msra.mxu0 0.0
    %416 = vmatprep.subr.mxu0 0.0
    %417 = vmatpush1.msra.mxu0 0.0
    %418 = vmatprep.subr.mxu0 0.0
    %419 = vmatpush1.msra.mxu0 0.0
    %420 = vmatprep.subr.mxu0 0.0
    %421 = vmatpush1.msra.mxu0 0.0
    %422 = vmatprep.subr.mxu0 0.0
    %423 = vmatpush1.msra.mxu0 0.0
    %424 = vmatprep.subr.mxu0 0.0
    %425 = vmatpush1.msra.mxu0 0.0
    %426 = vmatprep.subr.mxu0 0.0
    %427 = vmatpush1.msra.mxu0 0.0
    %428 = vmatprep.subr.mxu0 0.0
    %429 = vmatpush1.msra.mxu0 0.0
    %430 = vmatprep.subr.mxu0 0.0
    %431 = vmatpush1.msra.mxu0 0.0
    %432 = vmatprep.subr.mxu0 0.0
    %433 = vmatpush1.msra.mxu0 0.0
    %434 = vmatprep.subr.mxu0 0.0
    %435 = vmatpush1.msra.mxu0 0.0
    %436 = vmatprep.subr.mxu0 0.0
    %437 = vmatpush1.msra.mxu0 0.0
    %438 = vmatprep.subr.mxu0 0.0
    %439 = vmatpush1.msra.mxu0 0.0
    %440 = vmatprep.subr.mxu0 0.0
    %441 = vmatpush1.msra.mxu0 0.0
    %442 = vmatprep.subr.mxu0 0.0
    %443 = vmatpush1.msra.mxu0 0.0
    %444 = vmatprep.subr.mxu0 0.0
    %445 = vmatpush1.msra.mxu0 0.0
    %446 = vmatprep.subr.mxu0 0.0
    %447 = vmatpush1.msra.mxu0 0.0
    %448 = vmatprep.subr.mxu0 0.0
    %449 = vmatpush1.msra.mxu0 0.0
    %450 = vmatprep.mubr.f32.mxu0 0.0
    %451 = vmatmul.mubr.f32.gmra.mrb[0].mxu0 %v384
    %v452 = vpop.f32.mrb[0].mxu0
    %v453 = vadd.f32 0.0, %v452
    %v454 = vpop.f32.mrb[0].mxu0
    %455 = vdwg.mxu0
    %v456 = vlaneseq
    %v457 = vshrl.u32 %v456, 7
    %v458 = vsub.s32 0, %v457
    %v459 = vrot.slane %v453, %v458
    %v460 = vmul.f32 %v246, %v459
    %v461 = vlaneseq
    %v462 = vshrl.u32 %v461, 7
    %v463 = vsub.s32 1, %v462
    %v464 = vrot.slane %v453, %v463
    %v465 = vadd.f32 %v460, %v464
    %vm466 = vcmp.ge.f32.partialorder %v465, 0.0
    %v467 = vmul.f32 %v465, 0.05
    %v468 = vsel %vm466, %v465, %v467
    %v469 = vpack.c.bf16 %v468, %v468
    %v470 = vld [vmem:[%s6] sm:$0xff]
    %v471 = vld [vmem:[%s6 + $0x8] sm:$0xff]
    %v472 = vld [vmem:[%s6 + $0x10] sm:$0xff]
    %v473 = vld [vmem:[%s6 + $0x18] sm:$0xff]
    %v474 = vld [vmem:[%s6 + $0x20] sm:$0xff]
    %v475 = vld [vmem:[%s6 + $0x28] sm:$0xff]
    %v476 = vld [vmem:[%s6 + $0x30] sm:$0xff]
    %v477 = vld [vmem:[%s6 + $0x38] sm:$0xff]
    %v478 = vld [vmem:[%s6 + $0x40] sm:$0xff]
    %v479 = vld [vmem:[%s6 + $0x48] sm:$0xff]
    %v480 = vld [vmem:[%s6 + $0x50] sm:$0xff]
    %v481 = vld [vmem:[%s6 + $0x58] sm:$0xff]
    %v482 = vld [vmem:[%s6 + $0x60] sm:$0xff]
    %v483 = vld [vmem:[%s6 + $0x68] sm:$0xff]
    %v484 = vld [vmem:[%s6 + $0x70] sm:$0xff]
    %v485 = vld [vmem:[%s6 + $0x78] sm:$0xff]
    %v502 = vunpack.c.l.b16 %v470
    %v503 = vunpack.c.h.b16 %v470
    %v504 = vunpack.c.l.b16 %v471
    %v505 = vunpack.c.h.b16 %v471
    %v506 = vunpack.c.l.b16 %v472
    %v507 = vunpack.c.h.b16 %v472
    %v508 = vunpack.c.l.b16 %v473
    %v509 = vunpack.c.h.b16 %v473
    %v510 = vunpack.c.l.b16 %v474
    %v511 = vunpack.c.h.b16 %v474
    %v512 = vunpack.c.l.b16 %v475
    %v513 = vunpack.c.h.b16 %v475
    %v514 = vunpack.c.l.b16 %v476
    %v515 = vunpack.c.h.b16 %v476
    %v516 = vunpack.c.l.b16 %v477
    %v517 = vunpack.c.h.b16 %v477
    %v518 = vunpack.c.l.b16 %v478
    %v519 = vunpack.c.h.b16 %v478
    %v520 = vunpack.c.l.b16 %v479
    %v521 = vunpack.c.h.b16 %v479
    %v522 = vunpack.c.l.b16 %v480
    %v523 = vunpack.c.h.b16 %v480
    %v524 = vunpack.c.l.b16 %v481
    %v525 = vunpack.c.h.b16 %v481
    %v526 = vunpack.c.l.b16 %v482
    %v527 = vunpack.c.h.b16 %v482
    %v528 = vunpack.c.l.b16 %v483
    %v529 = vunpack.c.h.b16 %v483
    %v530 = vunpack.c.l.b16 %v484
    %v531 = vunpack.c.h.b16 %v484
    %v532 = vunpack.c.l.b16 %v485
    %v533 = vunpack.c.h.b16 %v485
    %v534 = vpack.c.b16 %v504, %v502
    %v535 = vpack.c.b16 %v505, %v503
    %v536 = vpack.c.b16 %v508, %v506
    %v537 = vpack.c.b16 %v509, %v507
    %v538 = vpack.c.b16 %v512, %v510
    %v539 = vpack.c.b16 %v513, %v511
    %v540 = vpack.c.b16 %v516, %v514
    %v541 = vpack.c.b16 %v517, %v515
    %v542 = vpack.c.b16 %v520, %v518
    %v543 = vpack.c.b16 %v521, %v519
    %v544 = vpack.c.b16 %v524, %v522
    %v545 = vpack.c.b16 %v525, %v523
    %v546 = vpack.c.b16 %v528, %v526
    %v547 = vpack.c.b16 %v529, %v527
    %v548 = vpack.c.b16 %v532, %v530
    %v549 = vpack.c.b16 %v533, %v531
    %566 = vmatprep.subr.bf16.mxu0 %v535
    %567 = vmatpush1.bf16.msra.mxu0 %v534
    %568 = vmatprep.subr.bf16.mxu0 %v537
    %569 = vmatpush1.bf16.msra.mxu0 %v536
    %570 = vmatprep.subr.bf16.mxu0 %v539
    %571 = vmatpush1.bf16.msra.mxu0 %v538
    %572 = vmatprep.subr.bf16.mxu0 %v541
    %573 = vmatpush1.bf16.msra.mxu0 %v540
    %574 = vmatprep.subr.bf16.mxu0 %v543
    %575 = vmatpush1.bf16.msra.mxu0 %v542
    %576 = vmatprep.subr.bf16.mxu0 %v545
    %577 = vmatpush1.bf16.msra.mxu0 %v544
    %578 = vmatprep.subr.bf16.mxu0 %v547
    %579 = vmatpush1.bf16.msra.mxu0 %v546
    %580 = vmatprep.subr.bf16.mxu0 %v549
    %581 = vmatpush1.bf16.msra.mxu0 %v548
    %582 = vmatprep.subr.bf16.mxu0 0
    %583 = vmatpush1.bf16.msra.mxu0 0
    %584 = vmatprep.subr.bf16.mxu0 0
    %585 = vmatpush1.bf16.msra.mxu0 0
    %586 = vmatprep.subr.bf16.mxu0 0
    %587 = vmatpush1.bf16.msra.mxu0 0
    %588 = vmatprep.subr.bf16.mxu0 0
    %589 = vmatpush1.bf16.msra.mxu0 0
    %590 = vmatprep.subr.bf16.mxu0 0
    %591 = vmatpush1.bf16.msra.mxu0 0
    %592 = vmatprep.subr.bf16.mxu0 0
    %593 = vmatpush1.bf16.msra.mxu0 0
    %594 = vmatprep.subr.bf16.mxu0 0
    %595 = vmatpush1.bf16.msra.mxu0 0
    %596 = vmatprep.subr.bf16.mxu0 0
    %597 = vmatpush1.bf16.msra.mxu0 0
    %598 = vmatprep.mubr.bf16.mxu0 0
    %599 = vmatmul.mubr.bf16.gmra.mrb[0].mxu0 %v469
    %v600 = vpop.f32.mrb[0].mxu0
    %v601 = vadd.f32 0.0, %v600
    %v602 = vpop.f32.mrb[0].mxu0
    %v603 = vadd.f32 0.0, %v602
    %v604 = vpop.f32.mrb[0].mxu0
    %v605 = vpop.f32.mrb[0].mxu0
    %606 = vdwg.mxu0
    %v607 = vld [vmem:[%s7] sm:$0xff]
    %v608 = vld [vmem:[%s7 + $0x8] sm:$0xff]
    %v609 = vld [vmem:[%s7 + $0x10] sm:$0xff]
    %v610 = vld [vmem:[%s7 + $0x18] sm:$0xff]
    %v611 = vld [vmem:[%s7 + $0x20] sm:$0xff]
    %v612 = vld [vmem:[%s7 + $0x28] sm:$0xff]
    %v613 = vld [vmem:[%s7 + $0x30] sm:$0xff]
    %v614 = vld [vmem:[%s7 + $0x38] sm:$0xff]
    %v615 = vld [vmem:[%s7 + $0x40] sm:$0xff]
    %v616 = vld [vmem:[%s7 + $0x48] sm:$0xff]
    %v617 = vld [vmem:[%s7 + $0x50] sm:$0xff]
    %v618 = vld [vmem:[%s7 + $0x58] sm:$0xff]
    %v619 = vld [vmem:[%s7 + $0x60] sm:$0xff]
    %v620 = vld [vmem:[%s7 + $0x68] sm:$0xff]
    %v621 = vld [vmem:[%s7 + $0x70] sm:$0xff]
    %v622 = vld [vmem:[%s7 + $0x78] sm:$0xff]
    %v623 = vld [vmem:[%s7 + $0x80] sm:$0xff]
    %v624 = vld [vmem:[%s7 + $0x88] sm:$0xff]
    %v625 = vld [vmem:[%s7 + $0x90] sm:$0xff]
    %v626 = vld [vmem:[%s7 + $0x98] sm:$0xff]
    %v627 = vld [vmem:[%s7 + $0xa0] sm:$0xff]
    %v628 = vld [vmem:[%s7 + $0xa8] sm:$0xff]
    %v629 = vld [vmem:[%s7 + $0xb0] sm:$0xff]
    %v630 = vld [vmem:[%s7 + $0xb8] sm:$0xff]
    %v631 = vld [vmem:[%s7 + $0xc0] sm:$0xff]
    %v632 = vld [vmem:[%s7 + $0xc8] sm:$0xff]
    %v633 = vld [vmem:[%s7 + $0xd0] sm:$0xff]
    %v634 = vld [vmem:[%s7 + $0xd8] sm:$0xff]
    %v635 = vld [vmem:[%s7 + $0xe0] sm:$0xff]
    %v636 = vld [vmem:[%s7 + $0xe8] sm:$0xff]
    %v637 = vld [vmem:[%s7 + $0xf0] sm:$0xff]
    %v638 = vld [vmem:[%s7 + $0xf8] sm:$0xff]
    %v639 = vld [vmem:[%s8] sm:$0xff]
    %v640 = vld [vmem:[%s8 + $0x8] sm:$0xff]
    %v641 = vld [vmem:[%s8 + $0x10] sm:$0xff]
    %v642 = vld [vmem:[%s8 + $0x18] sm:$0xff]
    %v643 = vsel %vm116, %v601, 0.0
    %v644 = vrot.slane %v643, 4
    %v645 = vadd.f32 %v643, %v644
    %v646 = vrot.slane %v645, 2
    %v647 = vadd.f32 %v645, %v646
    %v648 = vrot.slane %v647, 1
    %v649 = vadd.f32 %v647, %v648
    %v650 = vsel %vm116, %v603, 0.0
    %v651 = vrot.slane %v650, 4
    %v652 = vadd.f32 %v650, %v651
    %v653 = vrot.slane %v652, 2
    %v654 = vadd.f32 %v652, %v653
    %v655 = vrot.slane %v654, 1
    %v656 = vadd.f32 %v654, %v655
    %v657 = vmul.f32 %v601, %v601
    %v658 = vmul.f32 %v603, %v603
    %v659 = vsel %vm116, %v657, 0.0
    %v660 = vrot.slane %v659, 4
    %v661 = vadd.f32 %v659, %v660
    %v662 = vrot.slane %v661, 2
    %v663 = vadd.f32 %v661, %v662
    %v664 = vrot.slane %v663, 1
    %v665 = vadd.f32 %v663, %v664
    %v666 = vsel %vm116, %v658, 0.0
    %v667 = vrot.slane %v666, 4
    %v668 = vadd.f32 %v666, %v667
    %v669 = vrot.slane %v668, 2
    %v670 = vadd.f32 %v668, %v669
    %v671 = vrot.slane %v670, 1
    %v672 = vadd.f32 %v670, %v671
    %v673 = vsel %vm288, %v649, %v665
    %v674 = vsel %vm288, %v656, %v672
    %675 = vmatprep.subr.mxu0 0.0
    %676 = vmatpush1.msra.mxu0 %v607
    %677 = vmatprep.subr.mxu0 0.0
    %678 = vmatpush1.msra.mxu0 %v608
    %679 = vmatprep.subr.mxu0 0.0
    %680 = vmatpush1.msra.mxu0 %v609
    %681 = vmatprep.subr.mxu0 0.0
    %682 = vmatpush1.msra.mxu0 %v610
    %683 = vmatprep.subr.mxu0 0.0
    %684 = vmatpush1.msra.mxu0 %v611
    %685 = vmatprep.subr.mxu0 0.0
    %686 = vmatpush1.msra.mxu0 %v612
    %687 = vmatprep.subr.mxu0 0.0
    %688 = vmatpush1.msra.mxu0 %v613
    %689 = vmatprep.subr.mxu0 0.0
    %690 = vmatpush1.msra.mxu0 %v614
    %691 = vmatprep.subr.mxu0 0.0
    %692 = vmatpush1.msra.mxu0 %v615
    %693 = vmatprep.subr.mxu0 0.0
    %694 = vmatpush1.msra.mxu0 %v616
    %695 = vmatprep.subr.mxu0 0.0
    %696 = vmatpush1.msra.mxu0 %v617
    %697 = vmatprep.subr.mxu0 0.0
    %698 = vmatpush1.msra.mxu0 %v618
    %699 = vmatprep.subr.mxu0 0.0
    %700 = vmatpush1.msra.mxu0 %v619
    %701 = vmatprep.subr.mxu0 0.0
    %702 = vmatpush1.msra.mxu0 %v620
    %703 = vmatprep.subr.mxu0 0.0
    %704 = vmatpush1.msra.mxu0 %v621
    %705 = vmatprep.subr.mxu0 0.0
    %706 = vmatpush1.msra.mxu0 %v622
    %707 = vmatprep.subr.mxu0 0.0
    %708 = vmatpush1.msra.mxu0 %v623
    %709 = vmatprep.subr.mxu0 0.0
    %710 = vmatpush1.msra.mxu0 %v624
    %711 = vmatprep.subr.mxu0 0.0
    %712 = vmatpush1.msra.mxu0 %v625
    %713 = vmatprep.subr.mxu0 0.0
    %714 = vmatpush1.msra.mxu0 %v626
    %715 = vmatprep.subr.mxu0 0.0
    %716 = vmatpush1.msra.mxu0 %v627
    %717 = vmatprep.subr.mxu0 0.0
    %718 = vmatpush1.msra.mxu0 %v628
    %719 = vmatprep.subr.mxu0 0.0
    %720 = vmatpush1.msra.mxu0 %v629
    %721 = vmatprep.subr.mxu0 0.0
    %722 = vmatpush1.msra.mxu0 %v630
    %723 = vmatprep.subr.mxu0 0.0
    %724 = vmatpush1.msra.mxu0 %v631
    %725 = vmatprep.subr.mxu0 0.0
    %726 = vmatpush1.msra.mxu0 %v632
    %727 = vmatprep.subr.mxu0 0.0
    %728 = vmatpush1.msra.mxu0 %v633
    %729 = vmatprep.subr.mxu0 0.0
    %730 = vmatpush1.msra.mxu0 %v634
    %731 = vmatprep.subr.mxu0 0.0
    %732 = vmatpush1.msra.mxu0 %v635
    %733 = vmatprep.subr.mxu0 0.0
    %734 = vmatpush1.msra.mxu0 %v636
    %735 = vmatprep.subr.mxu0 0.0
    %736 = vmatpush1.msra.mxu0 %v637
    %737 = vmatprep.subr.mxu0 0.0
    %738 = vmatpush1.msra.mxu0 %v638
    %739 = vmatprep.mubr.f32.mxu0 %v674
    %740 = vmatmul.mubr.f32.gmra.mrb[0].mxu0 %v673
    %v741 = vpop.f32.mrb[0].mxu0
    %v742 = vadd.f32 0.0, %v741
    %v743 = vpop.f32.mrb[0].mxu0
    %744 = vdwg.mxu0
    %v745 = vmul.f32 %v742, 0.03125
    %v746 = vmul.f32 %v745, %v745
    %v748 = vrot.slane %v746, 7
    %v750 = vsub.f32 %v745, %v748
    %v751 = vadd.f32 %v750, 1e-05
    %v752 = vrsqrt.pop %v751
    %v753 = vsub.f32 0.0, %v745
    %v755 = vrot.slane %v752, 1
    %v757 = vmul.f32 %v753, %v755
    %v758 = vlaneseq
    %v759 = vshrl.u32 %v758, 7
    %v760 = vsub.s32 1, %v759
    %v761 = vrot.slane %v752, %v760
    %v762 = vlaneseq
    %v763 = vshrl.u32 %v762, 7
    %v764 = vsub.s32 0, %v763
    %v765 = vrot.slane %v757, %v764
    %v766 = vsel %vm288, %v761, %v765
    %v768 = vsel %vm72, %v766, 0
    %770 = vmatprep.subr.mxu0 %v640
    %771 = vmatpush1.msra.mxu0 %v639
    %772 = vmatprep.subr.mxu0 %v642
    %773 = vmatpush1.msra.mxu0 %v641
    %774 = vmatprep.subr.mxu0 0.0
    %775 = vmatpush1.msra.mxu0 0.0
    %776 = vmatprep.subr.mxu0 0.0
    %777 = vmatpush1.msra.mxu0 0.0
    %778 = vmatprep.subr.mxu0 0.0
    %779 = vmatpush1.msra.mxu0 0.0
    %780 = vmatprep.subr.mxu0 0.0
    %781 = vmatpush1.msra.mxu0 0.0
    %782 = vmatprep.subr.mxu0 0.0
    %783 = vmatpush1.msra.mxu0 0.0
    %784 = vmatprep.subr.mxu0 0.0
    %785 = vmatpush1.msra.mxu0 0.0
    %786 = vmatprep.subr.mxu0 0.0
    %787 = vmatpush1.msra.mxu0 0.0
    %788 = vmatprep.subr.mxu0 0.0
    %789 = vmatpush1.msra.mxu0 0.0
    %790 = vmatprep.subr.mxu0 0.0
    %791 = vmatpush1.msra.mxu0 0.0
    %792 = vmatprep.subr.mxu0 0.0
    %793 = vmatpush1.msra.mxu0 0.0
    %794 = vmatprep.subr.mxu0 0.0
    %795 = vmatpush1.msra.mxu0 0.0
    %796 = vmatprep.subr.mxu0 0.0
    %797 = vmatpush1.msra.mxu0 0.0
    %798 = vmatprep.subr.mxu0 0.0
    %799 = vmatpush1.msra.mxu0 0.0
    %800 = vmatprep.subr.mxu0 0.0
    %801 = vmatpush1.msra.mxu0 0.0
    %802 = vmatprep.subr.mxu0 0.0
    %803 = vmatpush1.msra.mxu0 0.0
    %804 = vmatprep.subr.mxu0 0.0
    %805 = vmatpush1.msra.mxu0 0.0
    %806 = vmatprep.subr.mxu0 0.0
    %807 = vmatpush1.msra.mxu0 0.0
    %808 = vmatprep.subr.mxu0 0.0
    %809 = vmatpush1.msra.mxu0 0.0
    %810 = vmatprep.subr.mxu0 0.0
    %811 = vmatpush1.msra.mxu0 0.0
    %812 = vmatprep.subr.mxu0 0.0
    %813 = vmatpush1.msra.mxu0 0.0
    %814 = vmatprep.subr.mxu0 0.0
    %815 = vmatpush1.msra.mxu0 0.0
    %816 = vmatprep.subr.mxu0 0.0
    %817 = vmatpush1.msra.mxu0 0.0
    %818 = vmatprep.subr.mxu0 0.0
    %819 = vmatpush1.msra.mxu0 0.0
    %820 = vmatprep.subr.mxu0 0.0
    %821 = vmatpush1.msra.mxu0 0.0
    %822 = vmatprep.subr.mxu0 0.0
    %823 = vmatpush1.msra.mxu0 0.0
    %824 = vmatprep.subr.mxu0 0.0
    %825 = vmatpush1.msra.mxu0 0.0
    %826 = vmatprep.subr.mxu0 0.0
    %827 = vmatpush1.msra.mxu0 0.0
    %828 = vmatprep.subr.mxu0 0.0
    %829 = vmatpush1.msra.mxu0 0.0
    %830 = vmatprep.subr.mxu0 0.0
    %831 = vmatpush1.msra.mxu0 0.0
    %832 = vmatprep.subr.mxu0 0.0
    %833 = vmatpush1.msra.mxu0 0.0
    %834 = vmatprep.mubr.f32.mxu0 0.0
    %835 = vmatmul.mubr.f32.gmra.mrb[0].mxu0 %v768
    %v836 = vpop.f32.mrb[0].mxu0
    %v837 = vadd.f32 0.0, %v836
    %v838 = vpop.f32.mrb[0].mxu0
    %v839 = vadd.f32 0.0, %v838
    %840 = vdwg.mxu0
    %v841 = vlaneseq
    %v842 = vshrl.u32 %v841, 7
    %v843 = vsub.s32 0, %v842
    %v844 = vrot.slane %v837, %v843
    %v845 = vlaneseq
    %v846 = vshrl.u32 %v845, 7
    %v847 = vsub.s32 0, %v846
    %v848 = vrot.slane %v839, %v847
    %v849 = vmul.f32 %v601, %v844
    %v850 = vmul.f32 %v603, %v848
    %v851 = vlaneseq
    %v852 = vshrl.u32 %v851, 7
    %v853 = vsub.s32 1, %v852
    %v854 = vrot.slane %v837, %v853
    %v855 = vlaneseq
    %v856 = vshrl.u32 %v855, 7
    %v857 = vsub.s32 1, %v856
    %v858 = vrot.slane %v839, %v857
    %v859 = vadd.f32 %v849, %v854
    %v860 = vadd.f32 %v850, %v858
    %vm861 = vcmp.ge.f32.partialorder %v859, 0.0
    %vm862 = vcmp.ge.f32.partialorder %v860, 0.0
    %v863 = vmul.f32 %v859, 0.05
    %v864 = vmul.f32 %v860, 0.05
    %v865 = vsel %vm861, %v859, %v863
    %v866 = vsel %vm862, %v860, %v864
    %v867 = vpack.c.bf16 %v865, %v865
    %v868 = vpack.c.bf16 %v866, %v866
    %v869 = vld [vmem:[%s9] sm:$0xff]
    %v870 = vld [vmem:[%s9 + $0x8] sm:$0xff]
    %v871 = vld [vmem:[%s9 + $0x10] sm:$0xff]
    %v872 = vld [vmem:[%s9 + $0x18] sm:$0xff]
    %v873 = vld [vmem:[%s9 + $0x20] sm:$0xff]
    %v874 = vld [vmem:[%s9 + $0x28] sm:$0xff]
    %v875 = vld [vmem:[%s9 + $0x30] sm:$0xff]
    %v876 = vld [vmem:[%s9 + $0x38] sm:$0xff]
    %v877 = vld [vmem:[%s9 + $0x40] sm:$0xff]
    %v878 = vld [vmem:[%s9 + $0x48] sm:$0xff]
    %v879 = vld [vmem:[%s9 + $0x50] sm:$0xff]
    %v880 = vld [vmem:[%s9 + $0x58] sm:$0xff]
    %v881 = vld [vmem:[%s9 + $0x60] sm:$0xff]
    %v882 = vld [vmem:[%s9 + $0x68] sm:$0xff]
    %v883 = vld [vmem:[%s9 + $0x70] sm:$0xff]
    %v884 = vld [vmem:[%s9 + $0x78] sm:$0xff]
    %v885 = vld [vmem:[%s9 + $0x80] sm:$0xff]
    %v886 = vld [vmem:[%s9 + $0x88] sm:$0xff]
    %v887 = vld [vmem:[%s9 + $0x90] sm:$0xff]
    %v888 = vld [vmem:[%s9 + $0x98] sm:$0xff]
    %v889 = vld [vmem:[%s9 + $0xa0] sm:$0xff]
    %v890 = vld [vmem:[%s9 + $0xa8] sm:$0xff]
    %v891 = vld [vmem:[%s9 + $0xb0] sm:$0xff]
    %v892 = vld [vmem:[%s9 + $0xb8] sm:$0xff]
    %v893 = vld [vmem:[%s9 + $0xc0] sm:$0xff]
    %v894 = vld [vmem:[%s9 + $0xc8] sm:$0xff]
    %v895 = vld [vmem:[%s9 + $0xd0] sm:$0xff]
    %v896 = vld [vmem:[%s9 + $0xd8] sm:$0xff]
    %v897 = vld [vmem:[%s9 + $0xe0] sm:$0xff]
    %v898 = vld [vmem:[%s9 + $0xe8] sm:$0xff]
    %v899 = vld [vmem:[%s9 + $0xf0] sm:$0xff]
    %v900 = vld [vmem:[%s9 + $0xf8] sm:$0xff]
    %v901 = vld [vmem:[%s9 + $0x100] sm:$0xff]
    %v902 = vld [vmem:[%s9 + $0x108] sm:$0xff]
    %v903 = vld [vmem:[%s9 + $0x110] sm:$0xff]
    %v904 = vld [vmem:[%s9 + $0x118] sm:$0xff]
    %v905 = vld [vmem:[%s9 + $0x120] sm:$0xff]
    %v906 = vld [vmem:[%s9 + $0x128] sm:$0xff]
    %v907 = vld [vmem:[%s9 + $0x130] sm:$0xff]
    %v908 = vld [vmem:[%s9 + $0x138] sm:$0xff]
    %v909 = vld [vmem:[%s9 + $0x140] sm:$0xff]
    %v910 = vld [vmem:[%s9 + $0x148] sm:$0xff]
    %v911 = vld [vmem:[%s9 + $0x150] sm:$0xff]
    %v912 = vld [vmem:[%s9 + $0x158] sm:$0xff]
    %v913 = vld [vmem:[%s9 + $0x160] sm:$0xff]
    %v914 = vld [vmem:[%s9 + $0x168] sm:$0xff]
    %v915 = vld [vmem:[%s9 + $0x170] sm:$0xff]
    %v916 = vld [vmem:[%s9 + $0x178] sm:$0xff]
    %v917 = vld [vmem:[%s9 + $0x180] sm:$0xff]
    %v918 = vld [vmem:[%s9 + $0x188] sm:$0xff]
    %v919 = vld [vmem:[%s9 + $0x190] sm:$0xff]
    %v920 = vld [vmem:[%s9 + $0x198] sm:$0xff]
    %v921 = vld [vmem:[%s9 + $0x1a0] sm:$0xff]
    %v922 = vld [vmem:[%s9 + $0x1a8] sm:$0xff]
    %v923 = vld [vmem:[%s9 + $0x1b0] sm:$0xff]
    %v924 = vld [vmem:[%s9 + $0x1b8] sm:$0xff]
    %v925 = vld [vmem:[%s9 + $0x1c0] sm:$0xff]
    %v926 = vld [vmem:[%s9 + $0x1c8] sm:$0xff]
    %v927 = vld [vmem:[%s9 + $0x1d0] sm:$0xff]
    %v928 = vld [vmem:[%s9 + $0x1d8] sm:$0xff]
    %v929 = vld [vmem:[%s9 + $0x1e0] sm:$0xff]
    %v930 = vld [vmem:[%s9 + $0x1e8] sm:$0xff]
    %v931 = vld [vmem:[%s9 + $0x1f0] sm:$0xff]
    %v932 = vld [vmem:[%s9 + $0x1f8] sm:$0xff]
    %v997 = vunpack.c.l.b16 %v869
    %v998 = vunpack.c.h.b16 %v869
    %v999 = vunpack.c.l.b16 %v870
    %v1000 = vunpack.c.h.b16 %v870
    %v1001 = vunpack.c.l.b16 %v871
    %v1002 = vunpack.c.h.b16 %v871
    %v1003 = vunpack.c.l.b16 %v872
    %v1004 = vunpack.c.h.b16 %v872
    %v1005 = vunpack.c.l.b16 %v873
    %v1006 = vunpack.c.h.b16 %v873
    %v1007 = vunpack.c.l.b16 %v874
    %v1008 = vunpack.c.h.b16 %v874
    %v1009 = vunpack.c.l.b16 %v875
    %v1010 = vunpack.c.h.b16 %v875
    %v1011 = vunpack.c.l.b16 %v876
    %v1012 = vunpack.c.h.b16 %v876
    %v1013 = vunpack.c.l.b16 %v877
    %v1014 = vunpack.c.h.b16 %v877
    %v1015 = vunpack.c.l.b16 %v878
    %v1016 = vunpack.c.h.b16 %v878
    %v1017 = vunpack.c.l.b16 %v879
    %v1018 = vunpack.c.h.b16 %v879
    %v1019 = vunpack.c.l.b16 %v880
    %v1020 = vunpack.c.h.b16 %v880
    %v1021 = vunpack.c.l.b16 %v881
    %v1022 = vunpack.c.h.b16 %v881
    %v1023 = vunpack.c.l.b16 %v882
    %v1024 = vunpack.c.h.b16 %v882
    %v1025 = vunpack.c.l.b16 %v883
    %v1026 = vunpack.c.h.b16 %v883
    %v1027 = vunpack.c.l.b16 %v884
    %v1028 = vunpack.c.h.b16 %v884
    %v1029 = vunpack.c.l.b16 %v885
    %v1030 = vunpack.c.h.b16 %v885
    %v1031 = vunpack.c.l.b16 %v886
    %v1032 = vunpack.c.h.b16 %v886
    %v1033 = vunpack.c.l.b16 %v887
    %v1034 = vunpack.c.h.b16 %v887
    %v1035 = vunpack.c.l.b16 %v888
    %v1036 = vunpack.c.h.b16 %v888
    %v1037 = vunpack.c.l.b16 %v889
    %v1038 = vunpack.c.h.b16 %v889
    %v1039 = vunpack.c.l.b16 %v890
    %v1040 = vunpack.c.h.b16 %v890
    %v1041 = vunpack.c.l.b16 %v891
    %v1042 = vunpack.c.h.b16 %v891
    %v1043 = vunpack.c.l.b16 %v892
    %v1044 = vunpack.c.h.b16 %v892
    %v1045 = vunpack.c.l.b16 %v893
    %v1046 = vunpack.c.h.b16 %v893
    %v1047 = vunpack.c.l.b16 %v894
    %v1048 = vunpack.c.h.b16 %v894
    %v1049 = vunpack.c.l.b16 %v895
    %v1050 = vunpack.c.h.b16 %v895
    %v1051 = vunpack.c.l.b16 %v896
    %v1052 = vunpack.c.h.b16 %v896
    %v1053 = vunpack.c.l.b16 %v897
    %v1054 = vunpack.c.h.b16 %v897
    %v1055 = vunpack.c.l.b16 %v898
    %v1056 = vunpack.c.h.b16 %v898
    %v1057 = vunpack.c.l.b16 %v899
    %v1058 = vunpack.c.h.b16 %v899
    %v1059 = vunpack.c.l.b16 %v900
    %v1060 = vunpack.c.h.b16 %v900
    %v1061 = vunpack.c.l.b16 %v901
    %v1062 = vunpack.c.h.b16 %v901
    %v1063 = vunpack.c.l.b16 %v902
    %v1064 = vunpack.c.h.b16 %v902
    %v1065 = vunpack.c.l.b16 %v903
    %v1066 = vunpack.c.h.b16 %v903
    %v1067 = vunpack.c.l.b16 %v904
    %v1068 = vunpack.c.h.b16 %v904
    %v1069 = vunpack.c.l.b16 %v905
    %v1070 = vunpack.c.h.b16 %v905
    %v1071 = vunpack.c.l.b16 %v906
    %v1072 = vunpack.c.h.b16 %v906
    %v1073 = vunpack.c.l.b16 %v907
    %v1074 = vunpack.c.h.b16 %v907
    %v1075 = vunpack.c.l.b16 %v908
    %v1076 = vunpack.c.h.b16 %v908
    %v1077 = vunpack.c.l.b16 %v909
    %v1078 = vunpack.c.h.b16 %v909
    %v1079 = vunpack.c.l.b16 %v910
    %v1080 = vunpack.c.h.b16 %v910
    %v1081 = vunpack.c.l.b16 %v911
    %v1082 = vunpack.c.h.b16 %v911
    %v1083 = vunpack.c.l.b16 %v912
    %v1084 = vunpack.c.h.b16 %v912
    %v1085 = vunpack.c.l.b16 %v913
    %v1086 = vunpack.c.h.b16 %v913
    %v1087 = vunpack.c.l.b16 %v914
    %v1088 = vunpack.c.h.b16 %v914
    %v1089 = vunpack.c.l.b16 %v915
    %v1090 = vunpack.c.h.b16 %v915
    %v1091 = vunpack.c.l.b16 %v916
    %v1092 = vunpack.c.h.b16 %v916
    %v1093 = vunpack.c.l.b16 %v917
    %v1094 = vunpack.c.h.b16 %v917
    %v1095 = vunpack.c.l.b16 %v918
    %v1096 = vunpack.c.h.b16 %v918
    %v1097 = vunpack.c.l.b16 %v919
    %v1098 = vunpack.c.h.b16 %v919
    %v1099 = vunpack.c.l.b16 %v920
    %v1100 = vunpack.c.h.b16 %v920
    %v1101 = vunpack.c.l.b16 %v921
    %v1102 = vunpack.c.h.b16 %v921
    %v1103 = vunpack.c.l.b16 %v922
    %v1104 = vunpack.c.h.b16 %v922
    %v1105 = vunpack.c.l.b16 %v923
    %v1106 = vunpack.c.h.b16 %v923
    %v1107 = vunpack.c.l.b16 %v924
    %v1108 = vunpack.c.h.b16 %v924
    %v1109 = vunpack.c.l.b16 %v925
    %v1110 = vunpack.c.h.b16 %v925
    %v1111 = vunpack.c.l.b16 %v926
    %v1112 = vunpack.c.h.b16 %v926
    %v1113 = vunpack.c.l.b16 %v927
    %v1114 = vunpack.c.h.b16 %v927
    %v1115 = vunpack.c.l.b16 %v928
    %v1116 = vunpack.c.h.b16 %v928
    %v1117 = vunpack.c.l.b16 %v929
    %v1118 = vunpack.c.h.b16 %v929
    %v1119 = vunpack.c.l.b16 %v930
    %v1120 = vunpack.c.h.b16 %v930
    %v1121 = vunpack.c.l.b16 %v931
    %v1122 = vunpack.c.h.b16 %v931
    %v1123 = vunpack.c.l.b16 %v932
    %v1124 = vunpack.c.h.b16 %v932
    %v1125 = vpack.c.b16 %v1001, %v997
    %v1126 = vpack.c.b16 %v1002, %v998
    %v1127 = vpack.c.b16 %v1003, %v999
    %v1128 = vpack.c.b16 %v1004, %v1000
    %v1129 = vpack.c.b16 %v1009, %v1005
    %v1130 = vpack.c.b16 %v1010, %v1006
    %v1131 = vpack.c.b16 %v1011, %v1007
    %v1132 = vpack.c.b16 %v1012, %v1008
    %v1133 = vpack.c.b16 %v1017, %v1013
    %v1134 = vpack.c.b16 %v1018, %v1014
    %v1135 = vpack.c.b16 %v1019, %v1015
    %v1136 = vpack.c.b16 %v1020, %v1016
    %v1137 = vpack.c.b16 %v1025, %v1021
    %v1138 = vpack.c.b16 %v1026, %v1022
    %v1139 = vpack.c.b16 %v1027, %v1023
    %v1140 = vpack.c.b16 %v1028, %v1024
    %v1141 = vpack.c.b16 %v1033, %v1029
    %v1142 = vpack.c.b16 %v1034, %v1030
    %v1143 = vpack.c.b16 %v1035, %v1031
    %v1144 = vpack.c.b16 %v1036, %v1032
    %v1145 = vpack.c.b16 %v1041, %v1037
    %v1146 = vpack.c.b16 %v1042, %v1038
    %v1147 = vpack.c.b16 %v1043, %v1039
    %v1148 = vpack.c.b16 %v1044, %v1040
    %v1149 = vpack.c.b16 %v1049, %v1045
    %v1150 = vpack.c.b16 %v1050, %v1046
    %v1151 = vpack.c.b16 %v1051, %v1047
    %v1152 = vpack.c.b16 %v1052, %v1048
    %v1153 = vpack.c.b16 %v1057, %v1053
    %v1154 = vpack.c.b16 %v1058, %v1054
    %v1155 = vpack.c.b16 %v1059, %v1055
    %v1156 = vpack.c.b16 %v1060, %v1056
    %v1157 = vpack.c.b16 %v1065, %v1061
    %v1158 = vpack.c.b16 %v1066, %v1062
    %v1159 = vpack.c.b16 %v1067, %v1063
    %v1160 = vpack.c.b16 %v1068, %v1064
    %v1161 = vpack.c.b16 %v1073, %v1069
    %v1162 = vpack.c.b16 %v1074, %v1070
    %v1163 = vpack.c.b16 %v1075, %v1071
    %v1164 = vpack.c.b16 %v1076, %v1072
    %v1165 = vpack.c.b16 %v1081, %v1077
    %v1166 = vpack.c.b16 %v1082, %v1078
    %v1167 = vpack.c.b16 %v1083, %v1079
    %v1168 = vpack.c.b16 %v1084, %v1080
    %v1169 = vpack.c.b16 %v1089, %v1085
    %v1170 = vpack.c.b16 %v1090, %v1086
    %v1171 = vpack.c.b16 %v1091, %v1087
    %v1172 = vpack.c.b16 %v1092, %v1088
    %v1173 = vpack.c.b16 %v1097, %v1093
    %v1174 = vpack.c.b16 %v1098, %v1094
    %v1175 = vpack.c.b16 %v1099, %v1095
    %v1176 = vpack.c.b16 %v1100, %v1096
    %v1177 = vpack.c.b16 %v1105, %v1101
    %v1178 = vpack.c.b16 %v1106, %v1102
    %v1179 = vpack.c.b16 %v1107, %v1103
    %v1180 = vpack.c.b16 %v1108, %v1104
    %v1181 = vpack.c.b16 %v1113, %v1109
    %v1182 = vpack.c.b16 %v1114, %v1110
    %v1183 = vpack.c.b16 %v1115, %v1111
    %v1184 = vpack.c.b16 %v1116, %v1112
    %v1185 = vpack.c.b16 %v1121, %v1117
    %v1186 = vpack.c.b16 %v1122, %v1118
    %v1187 = vpack.c.b16 %v1123, %v1119
    %v1188 = vpack.c.b16 %v1124, %v1120
    %1253 = vmatprep.subr.bf16.mxu0 %v1126
    %1254 = vmatpush1.bf16.msra.mxu0 %v1125
    %1255 = vmatprep.subr.bf16.mxu0 %v1130
    %1256 = vmatpush1.bf16.msra.mxu0 %v1129
    %1257 = vmatprep.subr.bf16.mxu0 %v1134
    %1258 = vmatpush1.bf16.msra.mxu0 %v1133
    %1259 = vmatprep.subr.bf16.mxu0 %v1138
    %1260 = vmatpush1.bf16.msra.mxu0 %v1137
    %1261 = vmatprep.subr.bf16.mxu0 %v1142
    %1262 = vmatpush1.bf16.msra.mxu0 %v1141
    %1263 = vmatprep.subr.bf16.mxu0 %v1146
    %1264 = vmatpush1.bf16.msra.mxu0 %v1145
    %1265 = vmatprep.subr.bf16.mxu0 %v1150
    %1266 = vmatpush1.bf16.msra.mxu0 %v1149
    %1267 = vmatprep.subr.bf16.mxu0 %v1154
    %1268 = vmatpush1.bf16.msra.mxu0 %v1153
    %1269 = vmatprep.subr.bf16.mxu0 %v1158
    %1270 = vmatpush1.bf16.msra.mxu0 %v1157
    %1271 = vmatprep.subr.bf16.mxu0 %v1162
    %1272 = vmatpush1.bf16.msra.mxu0 %v1161
    %1273 = vmatprep.subr.bf16.mxu0 %v1166
    %1274 = vmatpush1.bf16.msra.mxu0 %v1165
    %1275 = vmatprep.subr.bf16.mxu0 %v1170
    %1276 = vmatpush1.bf16.msra.mxu0 %v1169
    %1277 = vmatprep.subr.bf16.mxu0 %v1174
    %1278 = vmatpush1.bf16.msra.mxu0 %v1173
    %1279 = vmatprep.subr.bf16.mxu0 %v1178
    %1280 = vmatpush1.bf16.msra.mxu0 %v1177
    %1281 = vmatprep.subr.bf16.mxu0 %v1182
    %1282 = vmatpush1.bf16.msra.mxu0 %v1181
    %1283 = vmatprep.subr.bf16.mxu0 %v1186
    %1284 = vmatpush1.bf16.msra.mxu0 %v1185
    %1285 = vmatprep.mubr.bf16.mxu0 %v868
    %1286 = vmatmul.mubr.bf16.gmra.mrb[0].mxu0 %v867
    %v1287 = vpop.f32.mrb[0].mxu0
    %v1288 = vadd.f32 0.0, %v1287
    %v1289 = vpop.f32.mrb[0].mxu0
    %v1290 = vadd.f32 0.0, %v1289
    %v1291 = vpop.f32.mrb[0].mxu0
    %v1292 = vpop.f32.mrb[0].mxu0
    %1293 = vdwg.mxu0
    %1294 = vmatprep.subr.bf16.mxu0 %v1128
    %1295 = vmatpush1.bf16.msra.mxu0 %v1127
    %1296 = vmatprep.subr.bf16.mxu0 %v1132
    %1297 = vmatpush1.bf16.msra.mxu0 %v1131
    %1298 = vmatprep.subr.bf16.mxu0 %v1136
    %1299 = vmatpush1.bf16.msra.mxu0 %v1135
    %1300 = vmatprep.subr.bf16.mxu0 %v1140
    %1301 = vmatpush1.bf16.msra.mxu0 %v1139
    %1302 = vmatprep.subr.bf16.mxu0 %v1144
    %1303 = vmatpush1.bf16.msra.mxu0 %v1143
    %1304 = vmatprep.subr.bf16.mxu0 %v1148
    %1305 = vmatpush1.bf16.msra.mxu0 %v1147
    %1306 = vmatprep.subr.bf16.mxu0 %v1152
    %1307 = vmatpush1.bf16.msra.mxu0 %v1151
    %1308 = vmatprep.subr.bf16.mxu0 %v1156
    %1309 = vmatpush1.bf16.msra.mxu0 %v1155
    %1310 = vmatprep.subr.bf16.mxu0 %v1160
    %1311 = vmatpush1.bf16.msra.mxu0 %v1159
    %1312 = vmatprep.subr.bf16.mxu0 %v1164
    %1313 = vmatpush1.bf16.msra.mxu0 %v1163
    %1314 = vmatprep.subr.bf16.mxu0 %v1168
    %1315 = vmatpush1.bf16.msra.mxu0 %v1167
    %1316 = vmatprep.subr.bf16.mxu0 %v1172
    %1317 = vmatpush1.bf16.msra.mxu0 %v1171
    %1318 = vmatprep.subr.bf16.mxu0 %v1176
    %1319 = vmatpush1.bf16.msra.mxu0 %v1175
    %1320 = vmatprep.subr.bf16.mxu0 %v1180
    %1321 = vmatpush1.bf16.msra.mxu0 %v1179
    %1322 = vmatprep.subr.bf16.mxu0 %v1184
    %1323 = vmatpush1.bf16.msra.mxu0 %v1183
    %1324 = vmatprep.subr.bf16.mxu0 %v1188
    %1325 = vmatpush1.bf16.msra.mxu0 %v1187
    %1326 = vmatprep.mubr.bf16.mxu0 %v868
    %1327 = vmatmul.mubr.bf16.gmra.mrb[0].mxu0 %v867
    %v1328 = vpop.f32.mrb[0].mxu0
    %v1329 = vadd.f32 0.0, %v1328
    %v1330 = vpop.f32.mrb[0].mxu0
    %v1331 = vadd.f32 0.0, %v1330
    %v1332 = vpop.f32.mrb[0].mxu0
    %v1333 = vpop.f32.mrb[0].mxu0
    %1334 = vdwg.mxu0
    %v1335 = vld [vmem:[%s10] sm:$0xff]
    %v1336 = vld [vmem:[%s10 + $0x8] sm:$0xff]
    %v1337 = vld [vmem:[%s10 + $0x10] sm:$0xff]
    %v1338 = vld [vmem:[%s10 + $0x18] sm:$0xff]
    %v1339 = vld [vmem:[%s10 + $0x20] sm:$0xff]
    %v1340 = vld [vmem:[%s10 + $0x28] sm:$0xff]
    %v1341 = vld [vmem:[%s10 + $0x30] sm:$0xff]
    %v1342 = vld [vmem:[%s10 + $0x38] sm:$0xff]
    %v1343 = vld [vmem:[%s10 + $0x40] sm:$0xff]
    %v1344 = vld [vmem:[%s10 + $0x48] sm:$0xff]
    %v1345 = vld [vmem:[%s10 + $0x50] sm:$0xff]
    %v1346 = vld [vmem:[%s10 + $0x58] sm:$0xff]
    %v1347 = vld [vmem:[%s10 + $0x60] sm:$0xff]
    %v1348 = vld [vmem:[%s10 + $0x68] sm:$0xff]
    %v1349 = vld [vmem:[%s10 + $0x70] sm:$0xff]
    %v1350 = vld [vmem:[%s10 + $0x78] sm:$0xff]
    %v1351 = vld [vmem:[%s10 + $0x80] sm:$0xff]
    %v1352 = vld [vmem:[%s10 + $0x88] sm:$0xff]
    %v1353 = vld [vmem:[%s10 + $0x90] sm:$0xff]
    %v1354 = vld [vmem:[%s10 + $0x98] sm:$0xff]
    %v1355 = vld [vmem:[%s10 + $0xa0] sm:$0xff]
    %v1356 = vld [vmem:[%s10 + $0xa8] sm:$0xff]
    %v1357 = vld [vmem:[%s10 + $0xb0] sm:$0xff]
    %v1358 = vld [vmem:[%s10 + $0xb8] sm:$0xff]
    %v1359 = vld [vmem:[%s10 + $0xc0] sm:$0xff]
    %v1360 = vld [vmem:[%s10 + $0xc8] sm:$0xff]
    %v1361 = vld [vmem:[%s10 + $0xd0] sm:$0xff]
    %v1362 = vld [vmem:[%s10 + $0xd8] sm:$0xff]
    %v1363 = vld [vmem:[%s10 + $0xe0] sm:$0xff]
    %v1364 = vld [vmem:[%s10 + $0xe8] sm:$0xff]
    %v1365 = vld [vmem:[%s10 + $0xf0] sm:$0xff]
    %v1366 = vld [vmem:[%s10 + $0xf8] sm:$0xff]
    %v1367 = vld [vmem:[%s10 + $0x100] sm:$0xff]
    %v1368 = vld [vmem:[%s10 + $0x108] sm:$0xff]
    %v1369 = vld [vmem:[%s10 + $0x110] sm:$0xff]
    %v1370 = vld [vmem:[%s10 + $0x118] sm:$0xff]
    %v1371 = vld [vmem:[%s10 + $0x120] sm:$0xff]
    %v1372 = vld [vmem:[%s10 + $0x128] sm:$0xff]
    %v1373 = vld [vmem:[%s10 + $0x130] sm:$0xff]
    %v1374 = vld [vmem:[%s10 + $0x138] sm:$0xff]
    %v1375 = vld [vmem:[%s10 + $0x140] sm:$0xff]
    %v1376 = vld [vmem:[%s10 + $0x148] sm:$0xff]
    %v1377 = vld [vmem:[%s10 + $0x150] sm:$0xff]
    %v1378 = vld [vmem:[%s10 + $0x158] sm:$0xff]
    %v1379 = vld [vmem:[%s10 + $0x160] sm:$0xff]
    %v1380 = vld [vmem:[%s10 + $0x168] sm:$0xff]
    %v1381 = vld [vmem:[%s10 + $0x170] sm:$0xff]
    %v1382 = vld [vmem:[%s10 + $0x178] sm:$0xff]
    %v1383 = vld [vmem:[%s10 + $0x180] sm:$0xff]
    %v1384 = vld [vmem:[%s10 + $0x188] sm:$0xff]
    %v1385 = vld [vmem:[%s10 + $0x190] sm:$0xff]
    %v1386 = vld [vmem:[%s10 + $0x198] sm:$0xff]
    %v1387 = vld [vmem:[%s10 + $0x1a0] sm:$0xff]
    %v1388 = vld [vmem:[%s10 + $0x1a8] sm:$0xff]
    %v1389 = vld [vmem:[%s10 + $0x1b0] sm:$0xff]
    %v1390 = vld [vmem:[%s10 + $0x1b8] sm:$0xff]
    %v1391 = vld [vmem:[%s10 + $0x1c0] sm:$0xff]
    %v1392 = vld [vmem:[%s10 + $0x1c8] sm:$0xff]
    %v1393 = vld [vmem:[%s10 + $0x1d0] sm:$0xff]
    %v1394 = vld [vmem:[%s10 + $0x1d8] sm:$0xff]
    %v1395 = vld [vmem:[%s10 + $0x1e0] sm:$0xff]
    %v1396 = vld [vmem:[%s10 + $0x1e8] sm:$0xff]
    %v1397 = vld [vmem:[%s10 + $0x1f0] sm:$0xff]
    %v1398 = vld [vmem:[%s10 + $0x1f8] sm:$0xff]
    %v1399 = vld [vmem:[%s11] sm:$0xff]
    %v1400 = vld [vmem:[%s11 + $0x8] sm:$0xff]
    %v1401 = vld [vmem:[%s11 + $0x10] sm:$0xff]
    %v1402 = vld [vmem:[%s11 + $0x18] sm:$0xff]
    %v1403 = vsel %vm116, %v1288, 0.0
    %v1404 = vrot.slane %v1403, 4
    %v1405 = vadd.f32 %v1403, %v1404
    %v1406 = vrot.slane %v1405, 2
    %v1407 = vadd.f32 %v1405, %v1406
    %v1408 = vrot.slane %v1407, 1
    %v1409 = vadd.f32 %v1407, %v1408
    %v1410 = vsel %vm116, %v1290, 0.0
    %v1411 = vrot.slane %v1410, 4
    %v1412 = vadd.f32 %v1410, %v1411
    %v1413 = vrot.slane %v1412, 2
    %v1414 = vadd.f32 %v1412, %v1413
    %v1415 = vrot.slane %v1414, 1
    %v1416 = vadd.f32 %v1414, %v1415
    %v1417 = vsel %vm116, %v1329, 0.0
    %v1418 = vrot.slane %v1417, 4
    %v1419 = vadd.f32 %v1417, %v1418
    %v1420 = vrot.slane %v1419, 2
    %v1421 = vadd.f32 %v1419, %v1420
    %v1422 = vrot.slane %v1421, 1
    %v1423 = vadd.f32 %v1421, %v1422
    %v1424 = vsel %vm116, %v1331, 0.0
    %v1425 = vrot.slane %v1424, 4
    %v1426 = vadd.f32 %v1424, %v1425
    %v1427 = vrot.slane %v1426, 2
    %v1428 = vadd.f32 %v1426, %v1427
    %v1429 = vrot.slane %v1428, 1
    %v1430 = vadd.f32 %v1428, %v1429
    %v1431 = vmul.f32 %v1288, %v1288
    %v1432 = vmul.f32 %v1290, %v1290
    %v1433 = vmul.f32 %v1329, %v1329
    %v1434 = vmul.f32 %v1331, %v1331
    %v1435 = vsel %vm116, %v1431, 0.0
    %v1436 = vrot.slane %v1435, 4
    %v1437 = vadd.f32 %v1435, %v1436
    %v1438 = vrot.slane %v1437, 2
    %v1439 = vadd.f32 %v1437, %v1438
    %v1440 = vrot.slane %v1439, 1
    %v1441 = vadd.f32 %v1439, %v1440
    %v1442 = vsel %vm116, %v1432, 0.0
    %v1443 = vrot.slane %v1442, 4
    %v1444 = vadd.f32 %v1442, %v1443
    %v1445 = vrot.slane %v1444, 2
    %v1446 = vadd.f32 %v1444, %v1445
    %v1447 = vrot.slane %v1446, 1
    %v1448 = vadd.f32 %v1446, %v1447
    %v1449 = vsel %vm116, %v1433, 0.0
    %v1450 = vrot.slane %v1449, 4
    %v1451 = vadd.f32 %v1449, %v1450
    %v1452 = vrot.slane %v1451, 2
    %v1453 = vadd.f32 %v1451, %v1452
    %v1454 = vrot.slane %v1453, 1
    %v1455 = vadd.f32 %v1453, %v1454
    %v1456 = vsel %vm116, %v1434, 0.0
    %v1457 = vrot.slane %v1456, 4
    %v1458 = vadd.f32 %v1456, %v1457
    %v1459 = vrot.slane %v1458, 2
    %v1460 = vadd.f32 %v1458, %v1459
    %v1461 = vrot.slane %v1460, 1
    %v1462 = vadd.f32 %v1460, %v1461
    %v1463 = vsel %vm288, %v1409, %v1441
    %v1464 = vsel %vm288, %v1416, %v1448
    %v1465 = vsel %vm288, %v1423, %v1455
    %v1466 = vsel %vm288, %v1430, %v1462
    %1467 = vmatprep.subr.mxu0 0.0
    %1468 = vmatpush1.msra.mxu0 %v1335
    %1469 = vmatprep.subr.mxu0 0.0
    %1470 = vmatpush1.msra.mxu0 %v1336
    %1471 = vmatprep.subr.mxu0 0.0
    %1472 = vmatpush1.msra.mxu0 %v1337
    %1473 = vmatprep.subr.mxu0 0.0
    %1474 = vmatpush1.msra.mxu0 %v1338
    %1475 = vmatprep.subr.mxu0 0.0
    %1476 = vmatpush1.msra.mxu0 %v1339
    %1477 = vmatprep.subr.mxu0 0.0
    %1478 = vmatpush1.msra.mxu0 %v1340
    %1479 = vmatprep.subr.mxu0 0.0
    %1480 = vmatpush1.msra.mxu0 %v1341
    %1481 = vmatprep.subr.mxu0 0.0
    %1482 = vmatpush1.msra.mxu0 %v1342
    %1483 = vmatprep.subr.mxu0 0.0
    %1484 = vmatpush1.msra.mxu0 %v1343
    %1485 = vmatprep.subr.mxu0 0.0
    %1486 = vmatpush1.msra.mxu0 %v1344
    %1487 = vmatprep.subr.mxu0 0.0
    %1488 = vmatpush1.msra.mxu0 %v1345
    %1489 = vmatprep.subr.mxu0 0.0
    %1490 = vmatpush1.msra.mxu0 %v1346
    %1491 = vmatprep.subr.mxu0 0.0
    %1492 = vmatpush1.msra.mxu0 %v1347
    %1493 = vmatprep.subr.mxu0 0.0
    %1494 = vmatpush1.msra.mxu0 %v1348
    %1495 = vmatprep.subr.mxu0 0.0
    %1496 = vmatpush1.msra.mxu0 %v1349
    %1497 = vmatprep.subr.mxu0 0.0
    %1498 = vmatpush1.msra.mxu0 %v1350
    %1499 = vmatprep.subr.mxu0 0.0
    %1500 = vmatpush1.msra.mxu0 %v1351
    %1501 = vmatprep.subr.mxu0 0.0
    %1502 = vmatpush1.msra.mxu0 %v1352
    %1503 = vmatprep.subr.mxu0 0.0
    %1504 = vmatpush1.msra.mxu0 %v1353
    %1505 = vmatprep.subr.mxu0 0.0
    %1506 = vmatpush1.msra.mxu0 %v1354
    %1507 = vmatprep.subr.mxu0 0.0
    %1508 = vmatpush1.msra.mxu0 %v1355
    %1509 = vmatprep.subr.mxu0 0.0
    %1510 = vmatpush1.msra.mxu0 %v1356
    %1511 = vmatprep.subr.mxu0 0.0
    %1512 = vmatpush1.msra.mxu0 %v1357
    %1513 = vmatprep.subr.mxu0 0.0
    %1514 = vmatpush1.msra.mxu0 %v1358
    %1515 = vmatprep.subr.mxu0 0.0
    %1516 = vmatpush1.msra.mxu0 %v1359
    %1517 = vmatprep.subr.mxu0 0.0
    %1518 = vmatpush1.msra.mxu0 %v1360
    %1519 = vmatprep.subr.mxu0 0.0
    %1520 = vmatpush1.msra.mxu0 %v1361
    %1521 = vmatprep.subr.mxu0 0.0
    %1522 = vmatpush1.msra.mxu0 %v1362
    %1523 = vmatprep.subr.mxu0 0.0
    %1524 = vmatpush1.msra.mxu0 %v1363
    %1525 = vmatprep.subr.mxu0 0.0
    %1526 = vmatpush1.msra.mxu0 %v1364
    %1527 = vmatprep.subr.mxu0 0.0
    %1528 = vmatpush1.msra.mxu0 %v1365
    %1529 = vmatprep.subr.mxu0 0.0
    %1530 = vmatpush1.msra.mxu0 %v1366
    %1531 = vmatprep.mubr.f32.mxu0 %v1464
    %1532 = vmatmul.mubr.f32.gmra.mrb[0].mxu0 %v1463
    %v1533 = vpop.f32.mrb[0].mxu0
    %v1534 = vadd.f32 0.0, %v1533
    %v1535 = vpop.f32.mrb[0].mxu0
    %1536 = vdwg.mxu0
    %1537 = vmatprep.subr.mxu0 0.0
    %1538 = vmatpush1.msra.mxu0 %v1367
    %1539 = vmatprep.subr.mxu0 0.0
    %1540 = vmatpush1.msra.mxu0 %v1368
    %1541 = vmatprep.subr.mxu0 0.0
    %1542 = vmatpush1.msra.mxu0 %v1369
    %1543 = vmatprep.subr.mxu0 0.0
    %1544 = vmatpush1.msra.mxu0 %v1370
    %1545 = vmatprep.subr.mxu0 0.0
    %1546 = vmatpush1.msra.mxu0 %v1371
    %1547 = vmatprep.subr.mxu0 0.0
    %1548 = vmatpush1.msra.mxu0 %v1372
    %1549 = vmatprep.subr.mxu0 0.0
    %1550 = vmatpush1.msra.mxu0 %v1373
    %1551 = vmatprep.subr.mxu0 0.0
    %1552 = vmatpush1.msra.mxu0 %v1374
    %1553 = vmatprep.subr.mxu0 0.0
    %1554 = vmatpush1.msra.mxu0 %v1375
    %1555 = vmatprep.subr.mxu0 0.0
    %1556 = vmatpush1.msra.mxu0 %v1376
    %1557 = vmatprep.subr.mxu0 0.0
    %1558 = vmatpush1.msra.mxu0 %v1377
    %1559 = vmatprep.subr.mxu0 0.0
    %1560 = vmatpush1.msra.mxu0 %v1378
    %1561 = vmatprep.subr.mxu0 0.0
    %1562 = vmatpush1.msra.mxu0 %v1379
    %1563 = vmatprep.subr.mxu0 0.0
    %1564 = vmatpush1.msra.mxu0 %v1380
    %1565 = vmatprep.subr.mxu0 0.0
    %1566 = vmatpush1.msra.mxu0 %v1381
    %1567 = vmatprep.subr.mxu0 0.0
    %1568 = vmatpush1.msra.mxu0 %v1382
    %1569 = vmatprep.subr.mxu0 0.0
    %1570 = vmatpush1.msra.mxu0 %v1383
    %1571 = vmatprep.subr.mxu0 0.0
    %1572 = vmatpush1.msra.mxu0 %v1384
    %1573 = vmatprep.subr.mxu0 0.0
    %1574 = vmatpush1.msra.mxu0 %v1385
    %1575 = vmatprep.subr.mxu0 0.0
    %1576 = vmatpush1.msra.mxu0 %v1386
    %1577 = vmatprep.subr.mxu0 0.0
    %1578 = vmatpush1.msra.mxu0 %v1387
    %1579 = vmatprep.subr.mxu0 0.0
    %1580 = vmatpush1.msra.mxu0 %v1388
    %1581 = vmatprep.subr.mxu0 0.0
    %1582 = vmatpush1.msra.mxu0 %v1389
    %1583 = vmatprep.subr.mxu0 0.0
    %1584 = vmatpush1.msra.mxu0 %v1390
    %1585 = vmatprep.subr.mxu0 0.0
    %1586 = vmatpush1.msra.mxu0 %v1391
    %1587 = vmatprep.subr.mxu0 0.0
    %1588 = vmatpush1.msra.mxu0 %v1392
    %1589 = vmatprep.subr.mxu0 0.0
    %1590 = vmatpush1.msra.mxu0 %v1393
    %1591 = vmatprep.subr.mxu0 0.0
    %1592 = vmatpush1.msra.mxu0 %v1394
    %1593 = vmatprep.subr.mxu0 0.0
    %1594 = vmatpush1.msra.mxu0 %v1395
    %1595 = vmatprep.subr.mxu0 0.0
    %1596 = vmatpush1.msra.mxu0 %v1396
    %1597 = vmatprep.subr.mxu0 0.0
    %1598 = vmatpush1.msra.mxu0 %v1397
    %1599 = vmatprep.subr.mxu0 0.0
    %1600 = vmatpush1.msra.mxu0 %v1398
    %1601 = vmatprep.mubr.f32.mxu0 %v1466
    %1602 = vmatmul.mubr.f32.gmra.mrb[0].mxu0 %v1465
    %v1603 = vpop.f32.mrb[0].mxu0
    %v1604 = vadd.f32 %v1534, %v1603
    %v1605 = vpop.f32.mrb[0].mxu0
    %1606 = vdwg.mxu0
    %v1607 = vmul.f32 %v1604, 0.0078125
    %v1608 = vmul.f32 %v1607, %v1607
    %v1610 = vrot.slane %v1608, 7
    %v1612 = vsub.f32 %v1607, %v1610
    %v1613 = vadd.f32 %v1612, 1e-05
    %v1614 = vrsqrt.pop %v1613
    %v1615 = vsub.f32 0.0, %v1607
    %v1617 = vrot.slane %v1614, 1
    %v1619 = vmul.f32 %v1615, %v1617
    %v1620 = vlaneseq
    %v1621 = vshrl.u32 %v1620, 7
    %v1622 = vsub.s32 1, %v1621
    %v1623 = vrot.slane %v1614, %v1622
    %v1624 = vlaneseq
    %v1625 = vshrl.u32 %v1624, 7
    %v1626 = vsub.s32 0, %v1625
    %v1627 = vrot.slane %v1619, %v1626
    %v1628 = vsel %vm288, %v1623, %v1627
    %vm1629 = vcmask 64512
    %v1631 = vsel %vm1629, %v1628, 0
    %1633 = vmatprep.subr.mxu0 %v1400
    %1634 = vmatpush1.msra.mxu0 %v1399
    %1635 = vmatprep.subr.mxu0 0.0
    %1636 = vmatpush1.msra.mxu0 0.0
    %1637 = vmatprep.subr.mxu0 0.0
    %1638 = vmatpush1.msra.mxu0 0.0
    %1639 = vmatprep.subr.mxu0 0.0
    %1640 = vmatpush1.msra.mxu0 0.0
    %1641 = vmatprep.subr.mxu0 0.0
    %1642 = vmatpush1.msra.mxu0 0.0
    %1643 = vmatprep.subr.mxu0 0.0
    %1644 = vmatpush1.msra.mxu0 0.0
    %1645 = vmatprep.subr.mxu0 0.0
    %1646 = vmatpush1.msra.mxu0 0.0
    %1647 = vmatprep.subr.mxu0 0.0
    %1648 = vmatpush1.msra.mxu0 0.0
    %1649 = vmatprep.subr.mxu0 0.0
    %1650 = vmatpush1.msra.mxu0 0.0
    %1651 = vmatprep.subr.mxu0 0.0
    %1652 = vmatpush1.msra.mxu0 0.0
    %1653 = vmatprep.subr.mxu0 0.0
    %1654 = vmatpush1.msra.mxu0 0.0
    %1655 = vmatprep.subr.mxu0 0.0
    %1656 = vmatpush1.msra.mxu0 0.0
    %1657 = vmatprep.subr.mxu0 0.0
    %1658 = vmatpush1.msra.mxu0 0.0
    %1659 = vmatprep.subr.mxu0 0.0
    %1660 = vmatpush1.msra.mxu0 0.0
    %1661 = vmatprep.subr.mxu0 0.0
    %1662 = vmatpush1.msra.mxu0 0.0
    %1663 = vmatprep.subr.mxu0 0.0
    %1664 = vmatpush1.msra.mxu0 0.0
    %1665 = vmatprep.subr.mxu0 0.0
    %1666 = vmatpush1.msra.mxu0 0.0
    %1667 = vmatprep.subr.mxu0 0.0
    %1668 = vmatpush1.msra.mxu0 0.0
    %1669 = vmatprep.subr.mxu0 0.0
    %1670 = vmatpush1.msra.mxu0 0.0
    %1671 = vmatprep.subr.mxu0 0.0
    %1672 = vmatpush1.msra.mxu0 0.0
    %1673 = vmatprep.subr.mxu0 0.0
    %1674 = vmatpush1.msra.mxu0 0.0
    %1675 = vmatprep.subr.mxu0 0.0
    %1676 = vmatpush1.msra.mxu0 0.0
    %1677 = vmatprep.subr.mxu0 0.0
    %1678 = vmatpush1.msra.mxu0 0.0
    %1679 = vmatprep.subr.mxu0 0.0
    %1680 = vmatpush1.msra.mxu0 0.0
    %1681 = vmatprep.subr.mxu0 0.0
    %1682 = vmatpush1.msra.mxu0 0.0
    %1683 = vmatprep.subr.mxu0 0.0
    %1684 = vmatpush1.msra.mxu0 0.0
    %1685 = vmatprep.subr.mxu0 0.0
    %1686 = vmatpush1.msra.mxu0 0.0
    %1687 = vmatprep.subr.mxu0 0.0
    %1688 = vmatpush1.msra.mxu0 0.0
    %1689 = vmatprep.subr.mxu0 0.0
    %1690 = vmatpush1.msra.mxu0 0.0
    %1691 = vmatprep.subr.mxu0 0.0
    %1692 = vmatpush1.msra.mxu0 0.0
    %1693 = vmatprep.subr.mxu0 0.0
    %1694 = vmatpush1.msra.mxu0 0.0
    %1695 = vmatprep.subr.mxu0 0.0
    %1696 = vmatpush1.msra.mxu0 0.0
    %1697 = vmatprep.mubr.f32.mxu0 0.0
    %1698 = vmatmul.mubr.f32.gmra.mrb[0].mxu0 %v1631
    %v1699 = vpop.f32.mrb[0].mxu0
    %v1700 = vadd.f32 0.0, %v1699
    %v1701 = vpop.f32.mrb[0].mxu0
    %v1702 = vadd.f32 0.0, %v1701
    %1703 = vdwg.mxu0
    %1704 = vmatprep.subr.mxu0 %v1402
    %1705 = vmatpush1.msra.mxu0 %v1401
    %1706 = vmatprep.subr.mxu0 0.0
    %1707 = vmatpush1.msra.mxu0 0.0
    %1708 = vmatprep.subr.mxu0 0.0
    %1709 = vmatpush1.msra.mxu0 0.0
    %1710 = vmatprep.subr.mxu0 0.0
    %1711 = vmatpush1.msra.mxu0 0.0
    %1712 = vmatprep.subr.mxu0 0.0
    %1713 = vmatpush1.msra.mxu0 0.0
    %1714 = vmatprep.subr.mxu0 0.0
    %1715 = vmatpush1.msra.mxu0 0.0
    %1716 = vmatprep.subr.mxu0 0.0
    %1717 = vmatpush1.msra.mxu0 0.0
    %1718 = vmatprep.subr.mxu0 0.0
    %1719 = vmatpush1.msra.mxu0 0.0
    %1720 = vmatprep.subr.mxu0 0.0
    %1721 = vmatpush1.msra.mxu0 0.0
    %1722 = vmatprep.subr.mxu0 0.0
    %1723 = vmatpush1.msra.mxu0 0.0
    %1724 = vmatprep.subr.mxu0 0.0
    %1725 = vmatpush1.msra.mxu0 0.0
    %1726 = vmatprep.subr.mxu0 0.0
    %1727 = vmatpush1.msra.mxu0 0.0
    %1728 = vmatprep.subr.mxu0 0.0
    %1729 = vmatpush1.msra.mxu0 0.0
    %1730 = vmatprep.subr.mxu0 0.0
    %1731 = vmatpush1.msra.mxu0 0.0
    %1732 = vmatprep.subr.mxu0 0.0
    %1733 = vmatpush1.msra.mxu0 0.0
    %1734 = vmatprep.subr.mxu0 0.0
    %1735 = vmatpush1.msra.mxu0 0.0
    %1736 = vmatprep.subr.mxu0 0.0
    %1737 = vmatpush1.msra.mxu0 0.0
    %1738 = vmatprep.subr.mxu0 0.0
    %1739 = vmatpush1.msra.mxu0 0.0
    %1740 = vmatprep.subr.mxu0 0.0
    %1741 = vmatpush1.msra.mxu0 0.0
    %1742 = vmatprep.subr.mxu0 0.0
    %1743 = vmatpush1.msra.mxu0 0.0
    %1744 = vmatprep.subr.mxu0 0.0
    %1745 = vmatpush1.msra.mxu0 0.0
    %1746 = vmatprep.subr.mxu0 0.0
    %1747 = vmatpush1.msra.mxu0 0.0
    %1748 = vmatprep.subr.mxu0 0.0
    %1749 = vmatpush1.msra.mxu0 0.0
    %1750 = vmatprep.subr.mxu0 0.0
    %1751 = vmatpush1.msra.mxu0 0.0
    %1752 = vmatprep.subr.mxu0 0.0
    %1753 = vmatpush1.msra.mxu0 0.0
    %1754 = vmatprep.subr.mxu0 0.0
    %1755 = vmatpush1.msra.mxu0 0.0
    %1756 = vmatprep.subr.mxu0 0.0
    %1757 = vmatpush1.msra.mxu0 0.0
    %1758 = vmatprep.subr.mxu0 0.0
    %1759 = vmatpush1.msra.mxu0 0.0
    %1760 = vmatprep.subr.mxu0 0.0
    %1761 = vmatpush1.msra.mxu0 0.0
    %1762 = vmatprep.subr.mxu0 0.0
    %1763 = vmatpush1.msra.mxu0 0.0
    %1764 = vmatprep.subr.mxu0 0.0
    %1765 = vmatpush1.msra.mxu0 0.0
    %1766 = vmatprep.subr.mxu0 0.0
    %1767 = vmatpush1.msra.mxu0 0.0
    %1768 = vmatprep.mubr.f32.mxu0 0.0
    %1769 = vmatmul.mubr.f32.gmra.mrb[0].mxu0 %v1631
    %v1770 = vpop.f32.mrb[0].mxu0
    %v1771 = vadd.f32 0.0, %v1770
    %v1772 = vpop.f32.mrb[0].mxu0
    %v1773 = vadd.f32 0.0, %v1772
    %1774 = vdwg.mxu0
    %v1775 = vlaneseq
    %v1776 = vshrl.u32 %v1775, 7
    %v1777 = vsub.s32 0, %v1776
    %v1778 = vrot.slane %v1700, %v1777
    %v1779 = vlaneseq
    %v1780 = vshrl.u32 %v1779, 7
    %v1781 = vsub.s32 0, %v1780
    %v1782 = vrot.slane %v1702, %v1781
    %v1783 = vlaneseq
    %v1784 = vshrl.u32 %v1783, 7
    %v1785 = vsub.s32 0, %v1784
    %v1786 = vrot.slane %v1771, %v1785
    %v1787 = vlaneseq
    %v1788 = vshrl.u32 %v1787, 7
    %v1789 = vsub.s32 0, %v1788
    %v1790 = vrot.slane %v1773, %v1789
    %v1791 = vmul.f32 %v1288, %v1778
    %v1792 = vmul.f32 %v1290, %v1782
    %v1793 = vmul.f32 %v1329, %v1786
    %v1794 = vmul.f32 %v1331, %v1790
    %v1795 = vlaneseq
    %v1796 = vshrl.u32 %v1795, 7
    %v1797 = vsub.s32 1, %v1796
    %v1798 = vrot.slane %v1700, %v1797
    %v1799 = vlaneseq
    %v1800 = vshrl.u32 %v1799, 7
    %v1801 = vsub.s32 1, %v1800
    %v1802 = vrot.slane %v1702, %v1801
    %v1803 = vlaneseq
    %v1804 = vshrl.u32 %v1803, 7
    %v1805 = vsub.s32 1, %v1804
    %v1806 = vrot.slane %v1771, %v1805
    %v1807 = vlaneseq
    %v1808 = vshrl.u32 %v1807, 7
    %v1809 = vsub.s32 1, %v1808
    %v1810 = vrot.slane %v1773, %v1809
    %v1811 = vadd.f32 %v1791, %v1798
    %v1812 = vadd.f32 %v1792, %v1802
    %v1813 = vadd.f32 %v1793, %v1806
    %v1814 = vadd.f32 %v1794, %v1810
    %vm1815 = vcmp.ge.f32.partialorder %v1811, 0.0
    %vm1816 = vcmp.ge.f32.partialorder %v1812, 0.0
    %vm1817 = vcmp.ge.f32.partialorder %v1813, 0.0
    %vm1818 = vcmp.ge.f32.partialorder %v1814, 0.0
    %v1819 = vmul.f32 %v1811, 0.05
    %v1820 = vmul.f32 %v1812, 0.05
    %v1821 = vmul.f32 %v1813, 0.05
    %v1822 = vmul.f32 %v1814, 0.05
    %v1823 = vsel %vm1815, %v1811, %v1819
    %v1824 = vsel %vm1816, %v1812, %v1820
    %v1825 = vsel %vm1817, %v1813, %v1821
    %v1826 = vsel %vm1818, %v1814, %v1822
    %v1827 = vpack.c.bf16 %v1823, %v1823
    %v1828 = vpack.c.bf16 %v1824, %v1824
    %v1829 = vpack.c.bf16 %v1825, %v1825
    %v1830 = vpack.c.bf16 %v1826, %v1826
    %v1831 = vld [vmem:[#allocation2] sm:$0xff]
    %v1832 = vld [vmem:[#allocation2 + $0x8] sm:$0xff]
    %v1833 = vld [vmem:[#allocation2 + $0x10] sm:$0xff]
    %v1834 = vld [vmem:[#allocation2 + $0x18] sm:$0xff]
    %v1835 = vld [vmem:[#allocation2 + $0x20] sm:$0xff]
    %v1836 = vld [vmem:[#allocation2 + $0x28] sm:$0xff]
    %v1837 = vld [vmem:[#allocation2 + $0x30] sm:$0xff]
    %v1838 = vld [vmem:[#allocation2 + $0x38] sm:$0xff]
    %v1839 = vld [vmem:[#allocation2 + $0x40] sm:$0xff]
    %v1840 = vld [vmem:[#allocation2 + $0x48] sm:$0xff]
    %v1841 = vld [vmem:[#allocation2 + $0x50] sm:$0xff]
    %v1842 = vld [vmem:[#allocation2 + $0x58] sm:$0xff]
    %v1843 = vld [vmem:[#allocation2 + $0x60] sm:$0xff]
    %v1844 = vld [vmem:[#allocation2 + $0x68] sm:$0xff]
    %v1845 = vld [vmem:[#allocation2 + $0x70] sm:$0xff]
    %v1846 = vld [vmem:[#allocation2 + $0x78] sm:$0xff]
    %v1847 = vld [vmem:[#allocation2 + $0x80] sm:$0xff]
    %v1848 = vld [vmem:[#allocation2 + $0x88] sm:$0xff]
    %v1849 = vld [vmem:[#allocation2 + $0x90] sm:$0xff]
    %v1850 = vld [vmem:[#allocation2 + $0x98] sm:$0xff]
    %v1851 = vld [vmem:[#allocation2 + $0xa0] sm:$0xff]
    %v1852 = vld [vmem:[#allocation2 + $0xa8] sm:$0xff]
    %v1853 = vld [vmem:[#allocation2 + $0xb0] sm:$0xff]
    %v1854 = vld [vmem:[#allocation2 + $0xb8] sm:$0xff]
    %v1855 = vld [vmem:[#allocation2 + $0xc0] sm:$0xff]
    %v1856 = vld [vmem:[#allocation2 + $0xc8] sm:$0xff]
    %v1857 = vld [vmem:[#allocation2 + $0xd0] sm:$0xff]
    %v1858 = vld [vmem:[#allocation2 + $0xd8] sm:$0xff]
    %v1859 = vld [vmem:[#allocation2 + $0xe0] sm:$0xff]
    %v1860 = vld [vmem:[#allocation2 + $0xe8] sm:$0xff]
    %v1861 = vld [vmem:[#allocation2 + $0xf0] sm:$0xff]
    %v1862 = vld [vmem:[#allocation2 + $0xf8] sm:$0xff]
    %v1863 = vld [vmem:[#allocation2 + $0x100] sm:$0xff]
    %v1864 = vld [vmem:[#allocation2 + $0x108] sm:$0xff]
    %v1865 = vld [vmem:[#allocation2 + $0x110] sm:$0xff]
    %v1866 = vld [vmem:[#allocation2 + $0x118] sm:$0xff]
    %v1867 = vld [vmem:[#allocation2 + $0x120] sm:$0xff]
    %v1868 = vld [vmem:[#allocation2 + $0x128] sm:$0xff]
    %v1869 = vld [vmem:[#allocation2 + $0x130] sm:$0xff]
    %v1870 = vld [vmem:[#allocation2 + $0x138] sm:$0xff]
    %v1871 = vld [vmem:[#allocation2 + $0x140] sm:$0xff]
    %v1872 = vld [vmem:[#allocation2 + $0x148] sm:$0xff]
    %v1873 = vld [vmem:[#allocation2 + $0x150] sm:$0xff]
    %v1874 = vld [vmem:[#allocation2 + $0x158] sm:$0xff]
    %v1875 = vld [vmem:[#allocation2 + $0x160] sm:$0xff]
    %v1876 = vld [vmem:[#allocation2 + $0x168] sm:$0xff]
    %v1877 = vld [vmem:[#allocation2 + $0x170] sm:$0xff]
    %v1878 = vld [vmem:[#allocation2 + $0x178] sm:$0xff]
    %v1879 = vld [vmem:[#allocation2 + $0x180] sm:$0xff]
    %v1880 = vld [vmem:[#allocation2 + $0x188] sm:$0xff]
    %v1881 = vld [vmem:[#allocation2 + $0x190] sm:$0xff]
    %v1882 = vld [vmem:[#allocation2 + $0x198] sm:$0xff]
    %v1883 = vld [vmem:[#allocation2 + $0x1a0] sm:$0xff]
    %v1884 = vld [vmem:[#allocation2 + $0x1a8] sm:$0xff]
    %v1885 = vld [vmem:[#allocation2 + $0x1b0] sm:$0xff]
    %v1886 = vld [vmem:[#allocation2 + $0x1b8] sm:$0xff]
    %v1887 = vld [vmem:[#allocation2 + $0x1c0] sm:$0xff]
    %v1888 = vld [vmem:[#allocation2 + $0x1c8] sm:$0xff]
    %v1889 = vld [vmem:[#allocation2 + $0x1d0] sm:$0xff]
    %v1890 = vld [vmem:[#allocation2 + $0x1d8] sm:$0xff]
    %v1891 = vld [vmem:[#allocation2 + $0x1e0] sm:$0xff]
    %v1892 = vld [vmem:[#allocation2 + $0x1e8] sm:$0xff]
    %v1893 = vld [vmem:[#allocation2 + $0x1f0] sm:$0xff]
    %v1894 = vld [vmem:[#allocation2 + $0x1f8] sm:$0xff]
    %v1895 = vld [vmem:[#allocation2 + $0x200] sm:$0xff]
    %v1896 = vld [vmem:[#allocation2 + $0x208] sm:$0xff]
    %v1897 = vld [vmem:[#allocation2 + $0x210] sm:$0xff]
    %v1898 = vld [vmem:[#allocation2 + $0x218] sm:$0xff]
    %v1899 = vld [vmem:[#allocation2 + $0x220] sm:$0xff]
    %v1900 = vld [vmem:[#allocation2 + $0x228] sm:$0xff]
    %v1901 = vld [vmem:[#allocation2 + $0x230] sm:$0xff]
    %v1902 = vld [vmem:[#allocation2 + $0x238] sm:$0xff]
    %v1903 = vld [vmem:[#allocation2 + $0x240] sm:$0xff]
    %v1904 = vld [vmem:[#allocation2 + $0x248] sm:$0xff]
    %v1905 = vld [vmem:[#allocation2 + $0x250] sm:$0xff]
    %v1906 = vld [vmem:[#allocation2 + $0x258] sm:$0xff]
    %v1907 = vld [vmem:[#allocation2 + $0x260] sm:$0xff]
    %v1908 = vld [vmem:[#allocation2 + $0x268] sm:$0xff]
    %v1909 = vld [vmem:[#allocation2 + $0x270] sm:$0xff]
    %v1910 = vld [vmem:[#allocation2 + $0x278] sm:$0xff]
    %v1911 = vld [vmem:[#allocation2 + $0x280] sm:$0xff]
    %v1912 = vld [vmem:[#allocation2 + $0x288] sm:$0xff]
    %v1913 = vld [vmem:[#allocation2 + $0x290] sm:$0xff]
    %v1914 = vld [vmem:[#allocation2 + $0x298] sm:$0xff]
    %v1915 = vld [vmem:[#allocation2 + $0x2a0] sm:$0xff]
    %v1916 = vld [vmem:[#allocation2 + $0x2a8] sm:$0xff]
    %v1917 = vld [vmem:[#allocation2 + $0x2b0] sm:$0xff]
    %v1918 = vld [vmem:[#allocation2 + $0x2b8] sm:$0xff]
    %v1919 = vld [vmem:[#allocation2 + $0x2c0] sm:$0xff]
    %v1920 = vld [vmem:[#allocation2 + $0x2c8] sm:$0xff]
    %v1921 = vld [vmem:[#allocation2 + $0x2d0] sm:$0xff]
    %v1922 = vld [vmem:[#allocation2 + $0x2d8] sm:$0xff]
    %v1923 = vld [vmem:[#allocation2 + $0x2e0] sm:$0xff]
    %v1924 = vld [vmem:[#allocation2 + $0x2e8] sm:$0xff]
    %v1925 = vld [vmem:[#allocation2 + $0x2f0] sm:$0xff]
    %v1926 = vld [vmem:[#allocation2 + $0x2f8] sm:$0xff]
    %v1927 = vld [vmem:[#allocation2 + $0x300] sm:$0xff]
    %v1928 = vld [vmem:[#allocation2 + $0x308] sm:$0xff]
    %v1929 = vld [vmem:[#allocation2 + $0x310] sm:$0xff]
    %v1930 = vld [vmem:[#allocation2 + $0x318] sm:$0xff]
    %v1931 = vld [vmem:[#allocation2 + $0x320] sm:$0xff]
    %v1932 = vld [vmem:[#allocation2 + $0x328] sm:$0xff]
    %v1933 = vld [vmem:[#allocation2 + $0x330] sm:$0xff]
    %v1934 = vld [vmem:[#allocation2 + $0x338] sm:$0xff]
    %v1935 = vld [vmem:[#allocation2 + $0x340] sm:$0xff]
    %v1936 = vld [vmem:[#allocation2 + $0x348] sm:$0xff]
    %v1937 = vld [vmem:[#allocation2 + $0x350] sm:$0xff]
    %v1938 = vld [vmem:[#allocation2 + $0x358] sm:$0xff]
    %v1939 = vld [vmem:[#allocation2 + $0x360] sm:$0xff]
    %v1940 = vld [vmem:[#allocation2 + $0x368] sm:$0xff]
    %v1941 = vld [vmem:[#allocation2 + $0x370] sm:$0xff]
    %v1942 = vld [vmem:[#allocation2 + $0x378] sm:$0xff]
    %v1943 = vld [vmem:[#allocation2 + $0x380] sm:$0xff]
    %v1944 = vld [vmem:[#allocation2 + $0x388] sm:$0xff]
    %v1945 = vld [vmem:[#allocation2 + $0x390] sm:$0xff]
    %v1946 = vld [vmem:[#allocation2 + $0x398] sm:$0xff]
    %v1947 = vld [vmem:[#allocation2 + $0x3a0] sm:$0xff]
    %v1948 = vld [vmem:[#allocation2 + $0x3a8] sm:$0xff]
    %v1949 = vld [vmem:[#allocation2 + $0x3b0] sm:$0xff]
    %v1950 = vld [vmem:[#allocation2 + $0x3b8] sm:$0xff]
    %v1951 = vld [vmem:[#allocation2 + $0x3c0] sm:$0xff]
    %v1952 = vld [vmem:[#allocation2 + $0x3c8] sm:$0xff]
    %v1953 = vld [vmem:[#allocation2 + $0x3d0] sm:$0xff]
    %v1954 = vld [vmem:[#allocation2 + $0x3d8] sm:$0xff]
    %v1955 = vld [vmem:[#allocation2 + $0x3e0] sm:$0xff]
    %v1956 = vld [vmem:[#allocation2 + $0x3e8] sm:$0xff]
    %v1957 = vld [vmem:[#allocation2 + $0x3f0] sm:$0xff]
    %v1958 = vld [vmem:[#allocation2 + $0x3f8] sm:$0xff]
    %v1959 = vld [vmem:[#allocation2 + $0x400] sm:$0xff]
    %v1960 = vld [vmem:[#allocation2 + $0x408] sm:$0xff]
    %v1961 = vld [vmem:[#allocation2 + $0x410] sm:$0xff]
    %v1962 = vld [vmem:[#allocation2 + $0x418] sm:$0xff]
    %v1963 = vld [vmem:[#allocation2 + $0x420] sm:$0xff]
    %v1964 = vld [vmem:[#allocation2 + $0x428] sm:$0xff]
    %v1965 = vld [vmem:[#allocation2 + $0x430] sm:$0xff]
    %v1966 = vld [vmem:[#allocation2 + $0x438] sm:$0xff]
    %v1967 = vld [vmem:[#allocation2 + $0x440] sm:$0xff]
    %v1968 = vld [vmem:[#allocation2 + $0x448] sm:$0xff]
    %v1969 = vld [vmem:[#allocation2 + $0x450] sm:$0xff]
    %v1970 = vld [vmem:[#allocation2 + $0x458] sm:$0xff]
    %v1971 = vld [vmem:[#allocation2 + $0x460] sm:$0xff]
    %v1972 = vld [vmem:[#allocation2 + $0x468] sm:$0xff]
    %v1973 = vld [vmem:[#allocation2 + $0x470] sm:$0xff]
    %v1974 = vld [vmem:[#allocation2 + $0x478] sm:$0xff]
    %v1975 = vld [vmem:[#allocation2 + $0x480] sm:$0xff]
    %v1976 = vld [vmem:[#allocation2 + $0x488] sm:$0xff]
    %v1977 = vld [vmem:[#allocation2 + $0x490] sm:$0xff]
    %v1978 = vld [vmem:[#allocation2 + $0x498] sm:$0xff]
    %v1979 = vld [vmem:[#allocation2 + $0x4a0] sm:$0xff]
    %v1980 = vld [vmem:[#allocation2 + $0x4a8] sm:$0xff]
    %v1981 = vld [vmem:[#allocation2 + $0x4b0] sm:$0xff]
    %v1982 = vld [vmem:[#allocation2 + $0x4b8] sm:$0xff]
    %v1983 = vld [vmem:[#allocation2 + $0x4c0] sm:$0xff]
    %v1984 = vld [vmem:[#allocation2 + $0x4c8] sm:$0xff]
    %v1985 = vld [vmem:[#allocation2 + $0x4d0] sm:$0xff]
    %v1986 = vld [vmem:[#allocation2 + $0x4d8] sm:$0xff]
    %v1987 = vld [vmem:[#allocation2 + $0x4e0] sm:$0xff]
    %v1988 = vld [vmem:[#allocation2 + $0x4e8] sm:$0xff]
    %v1989 = vld [vmem:[#allocation2 + $0x4f0] sm:$0xff]
    %v1990 = vld [vmem:[#allocation2 + $0x4f8] sm:$0xff]
    %v1991 = vld [vmem:[#allocation2 + $0x500] sm:$0xff]
    %v1992 = vld [vmem:[#allocation2 + $0x508] sm:$0xff]
    %v1993 = vld [vmem:[#allocation2 + $0x510] sm:$0xff]
    %v1994 = vld [vmem:[#allocation2 + $0x518] sm:$0xff]
    %v1995 = vld [vmem:[#allocation2 + $0x520] sm:$0xff]
    %v1996 = vld [vmem:[#allocation2 + $0x528] sm:$0xff]
    %v1997 = vld [vmem:[#allocation2 + $0x530] sm:$0xff]
    %v1998 = vld [vmem:[#allocation2 + $0x538] sm:$0xff]
    %v1999 = vld [vmem:[#allocation2 + $0x540] sm:$0xff]
    %v2000 = vld [vmem:[#allocation2 + $0x548] sm:$0xff]
    %v2001 = vld [vmem:[#allocation2 + $0x550] sm:$0xff]
    %v2002 = vld [vmem:[#allocation2 + $0x558] sm:$0xff]
    %v2003 = vld [vmem:[#allocation2 + $0x560] sm:$0xff]
    %v2004 = vld [vmem:[#allocation2 + $0x568] sm:$0xff]
    %v2005 = vld [vmem:[#allocation2 + $0x570] sm:$0xff]
    %v2006 = vld [vmem:[#allocation2 + $0x578] sm:$0xff]
    %v2007 = vld [vmem:[#allocation2 + $0x580] sm:$0xff]
    %v2008 = vld [vmem:[#allocation2 + $0x588] sm:$0xff]
    %v2009 = vld [vmem:[#allocation2 + $0x590] sm:$0xff]
    %v2010 = vld [vmem:[#allocation2 + $0x598] sm:$0xff]
    %v2011 = vld [vmem:[#allocation2 + $0x5a0] sm:$0xff]
    %v2012 = vld [vmem:[#allocation2 + $0x5a8] sm:$0xff]
    %v2013 = vld [vmem:[#allocation2 + $0x5b0] sm:$0xff]
    %v2014 = vld [vmem:[#allocation2 + $0x5b8] sm:$0xff]
    %v2015 = vld [vmem:[#allocation2 + $0x5c0] sm:$0xff]
    %v2016 = vld [vmem:[#allocation2 + $0x5c8] sm:$0xff]
    %v2017 = vld [vmem:[#allocation2 + $0x5d0] sm:$0xff]
    %v2018 = vld [vmem:[#allocation2 + $0x5d8] sm:$0xff]
    %v2019 = vld [vmem:[#allocation2 + $0x5e0] sm:$0xff]
    %v2020 = vld [vmem:[#allocation2 + $0x5e8] sm:$0xff]
    %v2021 = vld [vmem:[#allocation2 + $0x5f0] sm:$0xff]
    %v2022 = vld [vmem:[#allocation2 + $0x5f8] sm:$0xff]
    %v2023 = vld [vmem:[%s13] sm:$0x3f]
    %v2025 = vlaneseq
    %v2026 = vshrl.u32 %v2025, 7
    %v2027 = vsub.s32 0, %v2026
    %v2028 = vrot.slane %v2023, %v2027
    %v2029 = vlaneseq
    %v2030 = vshrl.u32 %v2029, 7
    %v2031 = vsub.s32 1, %v2030
    %v2032 = vrot.slane %v2023, %v2031
    %v2033 = vlaneseq
    %v2034 = vshrl.u32 %v2033, 7
    %v2035 = vsub.s32 2, %v2034
    %v2036 = vrot.slane %v2023, %v2035
    %v2037 = vlaneseq
    %v2038 = vshrl.u32 %v2037, 7
    %v2039 = vsub.s32 3, %v2038
    %v2040 = vrot.slane %v2023, %v2039
    %v2041 = vlaneseq
    %v2042 = vshrl.u32 %v2041, 7
    %v2043 = vsub.s32 4, %v2042
    %v2044 = vrot.slane %v2023, %v2043
    %v2045 = vlaneseq
    %v2046 = vshrl.u32 %v2045, 7
    %v2047 = vsub.s32 5, %v2046
    %v2048 = vrot.slane %v2023, %v2047
    %v2247 = vunpack.c.l.b16 %v1831
    %v2248 = vunpack.c.h.b16 %v1831
    %v2249 = vunpack.c.l.b16 %v1832
    %v2250 = vunpack.c.h.b16 %v1832
    %v2251 = vunpack.c.l.b16 %v1833
    %v2252 = vunpack.c.h.b16 %v1833
    %v2253 = vunpack.c.l.b16 %v1834
    %v2254 = vunpack.c.h.b16 %v1834
    %v2255 = vunpack.c.l.b16 %v1835
    %v2256 = vunpack.c.h.b16 %v1835
    %v2257 = vunpack.c.l.b16 %v1836
    %v2258 = vunpack.c.h.b16 %v1836
    %v2259 = vunpack.c.l.b16 %v1837
    %v2260 = vunpack.c.h.b16 %v1837
    %v2261 = vunpack.c.l.b16 %v1838
    %v2262 = vunpack.c.h.b16 %v1838
    %v2263 = vunpack.c.l.b16 %v1839
    %v2264 = vunpack.c.h.b16 %v1839
    %v2265 = vunpack.c.l.b16 %v1840
    %v2266 = vunpack.c.h.b16 %v1840
    %v2267 = vunpack.c.l.b16 %v1841
    %v2268 = vunpack.c.h.b16 %v1841
    %v2269 = vunpack.c.l.b16 %v1842
    %v2270 = vunpack.c.h.b16 %v1842
    %v2271 = vunpack.c.l.b16 %v1843
    %v2272 = vunpack.c.h.b16 %v1843
    %v2273 = vunpack.c.l.b16 %v1844
    %v2274 = vunpack.c.h.b16 %v1844
    %v2275 = vunpack.c.l.b16 %v1845
    %v2276 = vunpack.c.h.b16 %v1845
    %v2277 = vunpack.c.l.b16 %v1846
    %v2278 = vunpack.c.h.b16 %v1846
    %v2279 = vunpack.c.l.b16 %v1847
    %v2280 = vunpack.c.h.b16 %v1847
    %v2281 = vunpack.c.l.b16 %v1848
    %v2282 = vunpack.c.h.b16 %v1848
    %v2283 = vunpack.c.l.b16 %v1849
    %v2284 = vunpack.c.h.b16 %v1849
    %v2285 = vunpack.c.l.b16 %v1850
    %v2286 = vunpack.c.h.b16 %v1850
    %v2287 = vunpack.c.l.b16 %v1851
    %v2288 = vunpack.c.h.b16 %v1851
    %v2289 = vunpack.c.l.b16 %v1852
    %v2290 = vunpack.c.h.b16 %v1852
    %v2291 = vunpack.c.l.b16 %v1853
    %v2292 = vunpack.c.h.b16 %v1853
    %v2293 = vunpack.c.l.b16 %v1854
    %v2294 = vunpack.c.h.b16 %v1854
    %v2295 = vunpack.c.l.b16 %v1855
    %v2296 = vunpack.c.h.b16 %v1855
    %v2297 = vunpack.c.l.b16 %v1856
    %v2298 = vunpack.c.h.b16 %v1856
    %v2299 = vunpack.c.l.b16 %v1857
    %v2300 = vunpack.c.h.b16 %v1857
    %v2301 = vunpack.c.l.b16 %v1858
    %v2302 = vunpack.c.h.b16 %v1858
    %v2303 = vunpack.c.l.b16 %v1859
    %v2304 = vunpack.c.h.b16 %v1859
    %v2305 = vunpack.c.l.b16 %v1860
    %v2306 = vunpack.c.h.b16 %v1860
    %v2307 = vunpack.c.l.b16 %v1861
    %v2308 = vunpack.c.h.b16 %v1861
    %v2309 = vunpack.c.l.b16 %v1862
    %v2310 = vunpack.c.h.b16 %v1862
    %v2311 = vunpack.c.l.b16 %v1863
    %v2312 = vunpack.c.h.b16 %v1863
    %v2313 = vunpack.c.l.b16 %v1864
    %v2314 = vunpack.c.h.b16 %v1864
    %v2315 = vunpack.c.l.b16 %v1865
    %v2316 = vunpack.c.h.b16 %v1865
    %v2317 = vunpack.c.l.b16 %v1866
    %v2318 = vunpack.c.h.b16 %v1866
    %v2319 = vunpack.c.l.b16 %v1867
    %v2320 = vunpack.c.h.b16 %v1867
    %v2321 = vunpack.c.l.b16 %v1868
    %v2322 = vunpack.c.h.b16 %v1868
    %v2323 = vunpack.c.l.b16 %v1869
    %v2324 = vunpack.c.h.b16 %v1869
    %v2325 = vunpack.c.l.b16 %v1870
    %v2326 = vunpack.c.h.b16 %v1870
    %v2327 = vunpack.c.l.b16 %v1871
    %v2328 = vunpack.c.h.b16 %v1871
    %v2329 = vunpack.c.l.b16 %v1872
    %v2330 = vunpack.c.h.b16 %v1872
    %v2331 = vunpack.c.l.b16 %v1873
    %v2332 = vunpack.c.h.b16 %v1873
    %v2333 = vunpack.c.l.b16 %v1874
    %v2334 = vunpack.c.h.b16 %v1874
    %v2335 = vunpack.c.l.b16 %v1875
    %v2336 = vunpack.c.h.b16 %v1875
    %v2337 = vunpack.c.l.b16 %v1876
    %v2338 = vunpack.c.h.b16 %v1876
    %v2339 = vunpack.c.l.b16 %v1877
    %v2340 = vunpack.c.h.b16 %v1877
    %v2341 = vunpack.c.l.b16 %v1878
    %v2342 = vunpack.c.h.b16 %v1878
    %v2343 = vunpack.c.l.b16 %v1879
    %v2344 = vunpack.c.h.b16 %v1879
    %v2345 = vunpack.c.l.b16 %v1880
    %v2346 = vunpack.c.h.b16 %v1880
    %v2347 = vunpack.c.l.b16 %v1881
    %v2348 = vunpack.c.h.b16 %v1881
    %v2349 = vunpack.c.l.b16 %v1882
    %v2350 = vunpack.c.h.b16 %v1882
    %v2351 = vunpack.c.l.b16 %v1883
    %v2352 = vunpack.c.h.b16 %v1883
    %v2353 = vunpack.c.l.b16 %v1884
    %v2354 = vunpack.c.h.b16 %v1884
    %v2355 = vunpack.c.l.b16 %v1885
    %v2356 = vunpack.c.h.b16 %v1885
    %v2357 = vunpack.c.l.b16 %v1886
    %v2358 = vunpack.c.h.b16 %v1886
    %v2359 = vunpack.c.l.b16 %v1887
    %v2360 = vunpack.c.h.b16 %v1887
    %v2361 = vunpack.c.l.b16 %v1888
    %v2362 = vunpack.c.h.b16 %v1888
    %v2363 = vunpack.c.l.b16 %v1889
    %v2364 = vunpack.c.h.b16 %v1889
    %v2365 = vunpack.c.l.b16 %v1890
    %v2366 = vunpack.c.h.b16 %v1890
    %v2367 = vunpack.c.l.b16 %v1891
    %v2368 = vunpack.c.h.b16 %v1891
    %v2369 = vunpack.c.l.b16 %v1892
    %v2370 = vunpack.c.h.b16 %v1892
    %v2371 = vunpack.c.l.b16 %v1893
    %v2372 = vunpack.c.h.b16 %v1893
    %v2373 = vunpack.c.l.b16 %v1894
    %v2374 = vunpack.c.h.b16 %v1894
    %v2375 = vunpack.c.l.b16 %v1895
    %v2376 = vunpack.c.h.b16 %v1895
    %v2377 = vunpack.c.l.b16 %v1896
    %v2378 = vunpack.c.h.b16 %v1896
    %v2379 = vunpack.c.l.b16 %v1897
    %v2380 = vunpack.c.h.b16 %v1897
    %v2381 = vunpack.c.l.b16 %v1898
    %v2382 = vunpack.c.h.b16 %v1898
    %v2383 = vunpack.c.l.b16 %v1899
    %v2384 = vunpack.c.h.b16 %v1899
    %v2385 = vunpack.c.l.b16 %v1900
    %v2386 = vunpack.c.h.b16 %v1900
    %v2387 = vunpack.c.l.b16 %v1901
    %v2388 = vunpack.c.h.b16 %v1901
    %v2389 = vunpack.c.l.b16 %v1902
    %v2390 = vunpack.c.h.b16 %v1902
    %v2391 = vunpack.c.l.b16 %v1903
    %v2392 = vunpack.c.h.b16 %v1903
    %v2393 = vunpack.c.l.b16 %v1904
    %v2394 = vunpack.c.h.b16 %v1904
    %v2395 = vunpack.c.l.b16 %v1905
    %v2396 = vunpack.c.h.b16 %v1905
    %v2397 = vunpack.c.l.b16 %v1906
    %v2398 = vunpack.c.h.b16 %v1906
    %v2399 = vunpack.c.l.b16 %v1907
    %v2400 = vunpack.c.h.b16 %v1907
    %v2401 = vunpack.c.l.b16 %v1908
    %v2402 = vunpack.c.h.b16 %v1908
    %v2403 = vunpack.c.l.b16 %v1909
    %v2404 = vunpack.c.h.b16 %v1909
    %v2405 = vunpack.c.l.b16 %v1910
    %v2406 = vunpack.c.h.b16 %v1910
    %v2407 = vunpack.c.l.b16 %v1911
    %v2408 = vunpack.c.h.b16 %v1911
    %v2409 = vunpack.c.l.b16 %v1912
    %v2410 = vunpack.c.h.b16 %v1912
    %v2411 = vunpack.c.l.b16 %v1913
    %v2412 = vunpack.c.h.b16 %v1913
    %v2413 = vunpack.c.l.b16 %v1914
    %v2414 = vunpack.c.h.b16 %v1914
    %v2415 = vunpack.c.l.b16 %v1915
    %v2416 = vunpack.c.h.b16 %v1915
    %v2417 = vunpack.c.l.b16 %v1916
    %v2418 = vunpack.c.h.b16 %v1916
    %v2419 = vunpack.c.l.b16 %v1917
    %v2420 = vunpack.c.h.b16 %v1917
    %v2421 = vunpack.c.l.b16 %v1918
    %v2422 = vunpack.c.h.b16 %v1918
    %v2423 = vunpack.c.l.b16 %v1919
    %v2424 = vunpack.c.h.b16 %v1919
    %v2425 = vunpack.c.l.b16 %v1920
    %v2426 = vunpack.c.h.b16 %v1920
    %v2427 = vunpack.c.l.b16 %v1921
    %v2428 = vunpack.c.h.b16 %v1921
    %v2429 = vunpack.c.l.b16 %v1922
    %v2430 = vunpack.c.h.b16 %v1922
    %v2431 = vunpack.c.l.b16 %v1923
    %v2432 = vunpack.c.h.b16 %v1923
    %v2433 = vunpack.c.l.b16 %v1924
    %v2434 = vunpack.c.h.b16 %v1924
    %v2435 = vunpack.c.l.b16 %v1925
    %v2436 = vunpack.c.h.b16 %v1925
    %v2437 = vunpack.c.l.b16 %v1926
    %v2438 = vunpack.c.h.b16 %v1926
    %v2439 = vunpack.c.l.b16 %v1927
    %v2440 = vunpack.c.h.b16 %v1927
    %v2441 = vunpack.c.l.b16 %v1928
    %v2442 = vunpack.c.h.b16 %v1928
    %v2443 = vunpack.c.l.b16 %v1929
    %v2444 = vunpack.c.h.b16 %v1929
    %v2445 = vunpack.c.l.b16 %v1930
    %v2446 = vunpack.c.h.b16 %v1930
    %v2447 = vunpack.c.l.b16 %v1931
    %v2448 = vunpack.c.h.b16 %v1931
    %v2449 = vunpack.c.l.b16 %v1932
    %v2450 = vunpack.c.h.b16 %v1932
    %v2451 = vunpack.c.l.b16 %v1933
    %v2452 = vunpack.c.h.b16 %v1933
    %v2453 = vunpack.c.l.b16 %v1934
    %v2454 = vunpack.c.h.b16 %v1934
    %v2455 = vunpack.c.l.b16 %v1935
    %v2456 = vunpack.c.h.b16 %v1935
    %v2457 = vunpack.c.l.b16 %v1936
    %v2458 = vunpack.c.h.b16 %v1936
    %v2459 = vunpack.c.l.b16 %v1937
    %v2460 = vunpack.c.h.b16 %v1937
    %v2461 = vunpack.c.l.b16 %v1938
    %v2462 = vunpack.c.h.b16 %v1938
    %v2463 = vunpack.c.l.b16 %v1939
    %v2464 = vunpack.c.h.b16 %v1939
    %v2465 = vunpack.c.l.b16 %v1940
    %v2466 = vunpack.c.h.b16 %v1940
    %v2467 = vunpack.c.l.b16 %v1941
    %v2468 = vunpack.c.h.b16 %v1941
    %v2469 = vunpack.c.l.b16 %v1942
    %v2470 = vunpack.c.h.b16 %v1942
    %v2471 = vunpack.c.l.b16 %v1943
    %v2472 = vunpack.c.h.b16 %v1943
    %v2473 = vunpack.c.l.b16 %v1944
    %v2474 = vunpack.c.h.b16 %v1944
    %v2475 = vunpack.c.l.b16 %v1945
    %v2476 = vunpack.c.h.b16 %v1945
    %v2477 = vunpack.c.l.b16 %v1946
    %v2478 = vunpack.c.h.b16 %v1946
    %v2479 = vunpack.c.l.b16 %v1947
    %v2480 = vunpack.c.h.b16 %v1947
    %v2481 = vunpack.c.l.b16 %v1948
    %v2482 = vunpack.c.h.b16 %v1948
    %v2483 = vunpack.c.l.b16 %v1949
    %v2484 = vunpack.c.h.b16 %v1949
    %v2485 = vunpack.c.l.b16 %v1950
    %v2486 = vunpack.c.h.b16 %v1950
    %v2487 = vunpack.c.l.b16 %v1951
    %v2488 = vunpack.c.h.b16 %v1951
    %v2489 = vunpack.c.l.b16 %v1952
    %v2490 = vunpack.c.h.b16 %v1952
    %v2491 = vunpack.c.l.b16 %v1953
    %v2492 = vunpack.c.h.b16 %v1953
    %v2493 = vunpack.c.l.b16 %v1954
    %v2494 = vunpack.c.h.b16 %v1954
    %v2495 = vunpack.c.l.b16 %v1955
    %v2496 = vunpack.c.h.b16 %v1955
    %v2497 = vunpack.c.l.b16 %v1956
    %v2498 = vunpack.c.h.b16 %v1956
    %v2499 = vunpack.c.l.b16 %v1957
    %v2500 = vunpack.c.h.b16 %v1957
    %v2501 = vunpack.c.l.b16 %v1958
    %v2502 = vunpack.c.h.b16 %v1958
    %v2503 = vunpack.c.l.b16 %v1959
    %v2504 = vunpack.c.h.b16 %v1959
    %v2505 = vunpack.c.l.b16 %v1960
    %v2506 = vunpack.c.h.b16 %v1960
    %v2507 = vunpack.c.l.b16 %v1961
    %v2508 = vunpack.c.h.b16 %v1961
    %v2509 = vunpack.c.l.b16 %v1962
    %v2510 = vunpack.c.h.b16 %v1962
    %v2511 = vunpack.c.l.b16 %v1963
    %v2512 = vunpack.c.h.b16 %v1963
    %v2513 = vunpack.c.l.b16 %v1964
    %v2514 = vunpack.c.h.b16 %v1964
    %v2515 = vunpack.c.l.b16 %v1965
    %v2516 = vunpack.c.h.b16 %v1965
    %v2517 = vunpack.c.l.b16 %v1966
    %v2518 = vunpack.c.h.b16 %v1966
    %v2519 = vunpack.c.l.b16 %v1967
    %v2520 = vunpack.c.h.b16 %v1967
    %v2521 = vunpack.c.l.b16 %v1968
    %v2522 = vunpack.c.h.b16 %v1968
    %v2523 = vunpack.c.l.b16 %v1969
    %v2524 = vunpack.c.h.b16 %v1969
    %v2525 = vunpack.c.l.b16 %v1970
    %v2526 = vunpack.c.h.b16 %v1970
    %v2527 = vunpack.c.l.b16 %v1971
    %v2528 = vunpack.c.h.b16 %v1971
    %v2529 = vunpack.c.l.b16 %v1972
    %v2530 = vunpack.c.h.b16 %v1972
    %v2531 = vunpack.c.l.b16 %v1973
    %v2532 = vunpack.c.h.b16 %v1973
    %v2533 = vunpack.c.l.b16 %v1974
    %v2534 = vunpack.c.h.b16 %v1974
    %v2535 = vunpack.c.l.b16 %v1975
    %v2536 = vunpack.c.h.b16 %v1975
    %v2537 = vunpack.c.l.b16 %v1976
    %v2538 = vunpack.c.h.b16 %v1976
    %v2539 = vunpack.c.l.b16 %v1977
    %v2540 = vunpack.c.h.b16 %v1977
    %v2541 = vunpack.c.l.b16 %v1978
    %v2542 = vunpack.c.h.b16 %v1978
    %v2543 = vunpack.c.l.b16 %v1979
    %v2544 = vunpack.c.h.b16 %v1979
    %v2545 = vunpack.c.l.b16 %v1980
    %v2546 = vunpack.c.h.b16 %v1980
    %v2547 = vunpack.c.l.b16 %v1981
    %v2548 = vunpack.c.h.b16 %v1981
    %v2549 = vunpack.c.l.b16 %v1982
    %v2550 = vunpack.c.h.b16 %v1982
    %v2551 = vunpack.c.l.b16 %v1983
    %v2552 = vunpack.c.h.b16 %v1983
    %v2553 = vunpack.c.l.b16 %v1984
    %v2554 = vunpack.c.h.b16 %v1984
    %v2555 = vunpack.c.l.b16 %v1985
    %v2556 = vunpack.c.h.b16 %v1985
    %v2557 = vunpack.c.l.b16 %v1986
    %v2558 = vunpack.c.h.b16 %v1986
    %v2559 = vunpack.c.l.b16 %v1987
    %v2560 = vunpack.c.h.b16 %v1987
    %v2561 = vunpack.c.l.b16 %v1988
    %v2562 = vunpack.c.h.b16 %v1988
    %v2563 = vunpack.c.l.b16 %v1989
    %v2564 = vunpack.c.h.b16 %v1989
    %v2565 = vunpack.c.l.b16 %v1990
    %v2566 = vunpack.c.h.b16 %v1990
    %v2567 = vunpack.c.l.b16 %v1991
    %v2568 = vunpack.c.h.b16 %v1991
    %v2569 = vunpack.c.l.b16 %v1992
    %v2570 = vunpack.c.h.b16 %v1992
    %v2571 = vunpack.c.l.b16 %v1993
    %v2572 = vunpack.c.h.b16 %v1993
    %v2573 = vunpack.c.l.b16 %v1994
    %v2574 = vunpack.c.h.b16 %v1994
    %v2575 = vunpack.c.l.b16 %v1995
    %v2576 = vunpack.c.h.b16 %v1995
    %v2577 = vunpack.c.l.b16 %v1996
    %v2578 = vunpack.c.h.b16 %v1996
    %v2579 = vunpack.c.l.b16 %v1997
    %v2580 = vunpack.c.h.b16 %v1997
    %v2581 = vunpack.c.l.b16 %v1998
    %v2582 = vunpack.c.h.b16 %v1998
    %v2583 = vunpack.c.l.b16 %v1999
    %v2584 = vunpack.c.h.b16 %v1999
    %v2585 = vunpack.c.l.b16 %v2000
    %v2586 = vunpack.c.h.b16 %v2000
    %v2587 = vunpack.c.l.b16 %v2001
    %v2588 = vunpack.c.h.b16 %v2001
    %v2589 = vunpack.c.l.b16 %v2002
    %v2590 = vunpack.c.h.b16 %v2002
    %v2591 = vunpack.c.l.b16 %v2003
    %v2592 = vunpack.c.h.b16 %v2003
    %v2593 = vunpack.c.l.b16 %v2004
    %v2594 = vunpack.c.h.b16 %v2004
    %v2595 = vunpack.c.l.b16 %v2005
    %v2596 = vunpack.c.h.b16 %v2005
    %v2597 = vunpack.c.l.b16 %v2006
    %v2598 = vunpack.c.h.b16 %v2006
    %v2599 = vunpack.c.l.b16 %v2007
    %v2600 = vunpack.c.h.b16 %v2007
    %v2601 = vunpack.c.l.b16 %v2008
    %v2602 = vunpack.c.h.b16 %v2008
    %v2603 = vunpack.c.l.b16 %v2009
    %v2604 = vunpack.c.h.b16 %v2009
    %v2605 = vunpack.c.l.b16 %v2010
    %v2606 = vunpack.c.h.b16 %v2010
    %v2607 = vunpack.c.l.b16 %v2011
    %v2608 = vunpack.c.h.b16 %v2011
    %v2609 = vunpack.c.l.b16 %v2012
    %v2610 = vunpack.c.h.b16 %v2012
    %v2611 = vunpack.c.l.b16 %v2013
    %v2612 = vunpack.c.h.b16 %v2013
    %v2613 = vunpack.c.l.b16 %v2014
    %v2614 = vunpack.c.h.b16 %v2014
    %v2615 = vunpack.c.l.b16 %v2015
    %v2616 = vunpack.c.h.b16 %v2015
    %v2617 = vunpack.c.l.b16 %v2016
    %v2618 = vunpack.c.h.b16 %v2016
    %v2619 = vunpack.c.l.b16 %v2017
    %v2620 = vunpack.c.h.b16 %v2017
    %v2621 = vunpack.c.l.b16 %v2018
    %v2622 = vunpack.c.h.b16 %v2018
    %v2623 = vunpack.c.l.b16 %v2019
    %v2624 = vunpack.c.h.b16 %v2019
    %v2625 = vunpack.c.l.b16 %v2020
    %v2626 = vunpack.c.h.b16 %v2020
    %v2627 = vunpack.c.l.b16 %v2021
    %v2628 = vunpack.c.h.b16 %v2021
    %v2629 = vunpack.c.l.b16 %v2022
    %v2630 = vunpack.c.h.b16 %v2022
    %v2631 = vpack.c.b16 %v2253, %v2247
    %v2632 = vpack.c.b16 %v2254, %v2248
    %v2633 = vpack.c.b16 %v2255, %v2249
    %v2634 = vpack.c.b16 %v2256, %v2250
    %v2635 = vpack.c.b16 %v2257, %v2251
    %v2636 = vpack.c.b16 %v2258, %v2252
    %v2637 = vpack.c.b16 %v2265, %v2259
    %v2638 = vpack.c.b16 %v2266, %v2260
    %v2639 = vpack.c.b16 %v2267, %v2261
    %v2640 = vpack.c.b16 %v2268, %v2262
    %v2641 = vpack.c.b16 %v2269, %v2263
    %v2642 = vpack.c.b16 %v2270, %v2264
    %v2643 = vpack.c.b16 %v2277, %v2271
    %v2644 = vpack.c.b16 %v2278, %v2272
    %v2645 = vpack.c.b16 %v2279, %v2273
    %v2646 = vpack.c.b16 %v2280, %v2274
    %v2647 = vpack.c.b16 %v2281, %v2275
    %v2648 = vpack.c.b16 %v2282, %v2276
    %v2649 = vpack.c.b16 %v2289, %v2283
    %v2650 = vpack.c.b16 %v2290, %v2284
    %v2651 = vpack.c.b16 %v2291, %v2285
    %v2652 = vpack.c.b16 %v2292, %v2286
    %v2653 = vpack.c.b16 %v2293, %v2287
    %v2654 = vpack.c.b16 %v2294, %v2288
    %v2655 = vpack.c.b16 %v2301, %v2295
    %v2656 = vpack.c.b16 %v2302, %v2296
    %v2657 = vpack.c.b16 %v2303, %v2297
    %v2658 = vpack.c.b16 %v2304, %v2298
    %v2659 = vpack.c.b16 %v2305, %v2299
    %v2660 = vpack.c.b16 %v2306, %v2300
    %v2661 = vpack.c.b16 %v2313, %v2307
    %v2662 = vpack.c.b16 %v2314, %v2308
    %v2663 = vpack.c.b16 %v2315, %v2309
    %v2664 = vpack.c.b16 %v2316, %v2310
    %v2665 = vpack.c.b16 %v2317, %v2311
    %v2666 = vpack.c.b16 %v2318, %v2312
    %v2667 = vpack.c.b16 %v2325, %v2319
    %v2668 = vpack.c.b16 %v2326, %v2320
    %v2669 = vpack.c.b16 %v2327, %v2321
    %v2670 = vpack.c.b16 %v2328, %v2322
    %v2671 = vpack.c.b16 %v2329, %v2323
    %v2672 = vpack.c.b16 %v2330, %v2324
    %v2673 = vpack.c.b16 %v2337, %v2331
    %v2674 = vpack.c.b16 %v2338, %v2332
    %v2675 = vpack.c.b16 %v2339, %v2333
    %v2676 = vpack.c.b16 %v2340, %v2334
    %v2677 = vpack.c.b16 %v2341, %v2335
    %v2678 = vpack.c.b16 %v2342, %v2336
    %v2679 = vpack.c.b16 %v2349, %v2343
    %v2680 = vpack.c.b16 %v2350, %v2344
    %v2681 = vpack.c.b16 %v2351, %v2345
    %v2682 = vpack.c.b16 %v2352, %v2346
    %v2683 = vpack.c.b16 %v2353, %v2347
    %v2684 = vpack.c.b16 %v2354, %v2348
    %v2685 = vpack.c.b16 %v2361, %v2355
    %v2686 = vpack.c.b16 %v2362, %v2356
    %v2687 = vpack.c.b16 %v2363, %v2357
    %v2688 = vpack.c.b16 %v2364, %v2358
    %v2689 = vpack.c.b16 %v2365, %v2359
    %v2690 = vpack.c.b16 %v2366, %v2360
    %v2691 = vpack.c.b16 %v2373, %v2367
    %v2692 = vpack.c.b16 %v2374, %v2368
    %v2693 = vpack.c.b16 %v2375, %v2369
    %v2694 = vpack.c.b16 %v2376, %v2370
    %v2695 = vpack.c.b16 %v2377, %v2371
    %v2696 = vpack.c.b16 %v2378, %v2372
    %v2697 = vpack.c.b16 %v2385, %v2379
    %v2698 = vpack.c.b16 %v2386, %v2380
    %v2699 = vpack.c.b16 %v2387, %v2381
    %v2700 = vpack.c.b16 %v2388, %v2382
    %v2701 = vpack.c.b16 %v2389, %v2383
    %v2702 = vpack.c.b16 %v2390, %v2384
    %v2703 = vpack.c.b16 %v2397, %v2391
    %v2704 = vpack.c.b16 %v2398, %v2392
    %v2705 = vpack.c.b16 %v2399, %v2393
    %v2706 = vpack.c.b16 %v2400, %v2394
    %v2707 = vpack.c.b16 %v2401, %v2395
    %v2708 = vpack.c.b16 %v2402, %v2396
    %v2709 = vpack.c.b16 %v2409, %v2403
    %v2710 = vpack.c.b16 %v2410, %v2404
    %v2711 = vpack.c.b16 %v2411, %v2405
    %v2712 = vpack.c.b16 %v2412, %v2406
    %v2713 = vpack.c.b16 %v2413, %v2407
    %v2714 = vpack.c.b16 %v2414, %v2408
    %v2715 = vpack.c.b16 %v2421, %v2415
    %v2716 = vpack.c.b16 %v2422, %v2416
    %v2717 = vpack.c.b16 %v2423, %v2417
    %v2718 = vpack.c.b16 %v2424, %v2418
    %v2719 = vpack.c.b16 %v2425, %v2419
    %v2720 = vpack.c.b16 %v2426, %v2420
    %v2721 = vpack.c.b16 %v2433, %v2427
    %v2722 = vpack.c.b16 %v2434, %v2428
    %v2723 = vpack.c.b16 %v2435, %v2429
    %v2724 = vpack.c.b16 %v2436, %v2430
    %v2725 = vpack.c.b16 %v2437, %v2431
    %v2726 = vpack.c.b16 %v2438, %v2432
    %v2727 = vpack.c.b16 %v2445, %v2439
    %v2728 = vpack.c.b16 %v2446, %v2440
    %v2729 = vpack.c.b16 %v2447, %v2441
    %v2730 = vpack.c.b16 %v2448, %v2442
    %v2731 = vpack.c.b16 %v2449, %v2443
    %v2732 = vpack.c.b16 %v2450, %v2444
    %v2733 = vpack.c.b16 %v2457, %v2451
    %v2734 = vpack.c.b16 %v2458, %v2452
    %v2735 = vpack.c.b16 %v2459, %v2453
    %v2736 = vpack.c.b16 %v2460, %v2454
    %v2737 = vpack.c.b16 %v2461, %v2455
    %v2738 = vpack.c.b16 %v2462, %v2456
    %v2739 = vpack.c.b16 %v2469, %v2463
    %v2740 = vpack.c.b16 %v2470, %v2464
    %v2741 = vpack.c.b16 %v2471, %v2465
    %v2742 = vpack.c.b16 %v2472, %v2466
    %v2743 = vpack.c.b16 %v2473, %v2467
    %v2744 = vpack.c.b16 %v2474, %v2468
    %v2745 = vpack.c.b16 %v2481, %v2475
    %v2746 = vpack.c.b16 %v2482, %v2476
    %v2747 = vpack.c.b16 %v2483, %v2477
    %v2748 = vpack.c.b16 %v2484, %v2478
    %v2749 = vpack.c.b16 %v2485, %v2479
    %v2750 = vpack.c.b16 %v2486, %v2480
    %v2751 = vpack.c.b16 %v2493, %v2487
    %v2752 = vpack.c.b16 %v2494, %v2488
    %v2753 = vpack.c.b16 %v2495, %v2489
    %v2754 = vpack.c.b16 %v2496, %v2490
    %v2755 = vpack.c.b16 %v2497, %v2491
    %v2756 = vpack.c.b16 %v2498, %v2492
    %v2757 = vpack.c.b16 %v2505, %v2499
    %v2758 = vpack.c.b16 %v2506, %v2500
    %v2759 = vpack.c.b16 %v2507, %v2501
    %v2760 = vpack.c.b16 %v2508, %v2502
    %v2761 = vpack.c.b16 %v2509, %v2503
    %v2762 = vpack.c.b16 %v2510, %v2504
    %v2763 = vpack.c.b16 %v2517, %v2511
    %v2764 = vpack.c.b16 %v2518, %v2512
    %v2765 = vpack.c.b16 %v2519, %v2513
    %v2766 = vpack.c.b16 %v2520, %v2514
    %v2767 = vpack.c.b16 %v2521, %v2515
    %v2768 = vpack.c.b16 %v2522, %v2516
    %v2769 = vpack.c.b16 %v2529, %v2523
    %v2770 = vpack.c.b16 %v2530, %v2524
    %v2771 = vpack.c.b16 %v2531, %v2525
    %v2772 = vpack.c.b16 %v2532, %v2526
    %v2773 = vpack.c.b16 %v2533, %v2527
    %v2774 = vpack.c.b16 %v2534, %v2528
    %v2775 = vpack.c.b16 %v2541, %v2535
    %v2776 = vpack.c.b16 %v2542, %v2536
    %v2777 = vpack.c.b16 %v2543, %v2537
    %v2778 = vpack.c.b16 %v2544, %v2538
    %v2779 = vpack.c.b16 %v2545, %v2539
    %v2780 = vpack.c.b16 %v2546, %v2540
    %v2781 = vpack.c.b16 %v2553, %v2547
    %v2782 = vpack.c.b16 %v2554, %v2548
    %v2783 = vpack.c.b16 %v2555, %v2549
    %v2784 = vpack.c.b16 %v2556, %v2550
    %v2785 = vpack.c.b16 %v2557, %v2551
    %v2786 = vpack.c.b16 %v2558, %v2552
    %v2787 = vpack.c.b16 %v2565, %v2559
    %v2788 = vpack.c.b16 %v2566, %v2560
    %v2789 = vpack.c.b16 %v2567, %v2561
    %v2790 = vpack.c.b16 %v2568, %v2562
    %v2791 = vpack.c.b16 %v2569, %v2563
    %v2792 = vpack.c.b16 %v2570, %v2564
    %v2793 = vpack.c.b16 %v2577, %v2571
    %v2794 = vpack.c.b16 %v2578, %v2572
    %v2795 = vpack.c.b16 %v2579, %v2573
    %v2796 = vpack.c.b16 %v2580, %v2574
    %v2797 = vpack.c.b16 %v2581, %v2575
    %v2798 = vpack.c.b16 %v2582, %v2576
    %v2799 = vpack.c.b16 %v2589, %v2583
    %v2800 = vpack.c.b16 %v2590, %v2584
    %v2801 = vpack.c.b16 %v2591, %v2585
    %v2802 = vpack.c.b16 %v2592, %v2586
    %v2803 = vpack.c.b16 %v2593, %v2587
    %v2804 = vpack.c.b16 %v2594, %v2588
    %v2805 = vpack.c.b16 %v2601, %v2595
    %v2806 = vpack.c.b16 %v2602, %v2596
    %v2807 = vpack.c.b16 %v2603, %v2597
    %v2808 = vpack.c.b16 %v2604, %v2598
    %v2809 = vpack.c.b16 %v2605, %v2599
    %v2810 = vpack.c.b16 %v2606, %v2600
    %v2811 = vpack.c.b16 %v2613, %v2607
    %v2812 = vpack.c.b16 %v2614, %v2608
    %v2813 = vpack.c.b16 %v2615, %v2609
    %v2814 = vpack.c.b16 %v2616, %v2610
    %v2815 = vpack.c.b16 %v2617, %v2611
    %v2816 = vpack.c.b16 %v2618, %v2612
    %v2817 = vpack.c.b16 %v2625, %v2619
    %v2818 = vpack.c.b16 %v2626, %v2620
    %v2819 = vpack.c.b16 %v2627, %v2621
    %v2820 = vpack.c.b16 %v2628, %v2622
    %v2821 = vpack.c.b16 %v2629, %v2623
    %v2822 = vpack.c.b16 %v2630, %v2624
    %3015 = vmatprep.subr.bf16.mxu0 %v2632
    %3016 = vmatpush1.bf16.msra.mxu0 %v2631
    %3017 = vmatprep.subr.bf16.mxu0 %v2638
    %3018 = vmatpush1.bf16.msra.mxu0 %v2637
    %3019 = vmatprep.subr.bf16.mxu0 %v2644
    %3020 = vmatpush1.bf16.msra.mxu0 %v2643
    %3021 = vmatprep.subr.bf16.mxu0 %v2650
    %3022 = vmatpush1.bf16.msra.mxu0 %v2649
    %3023 = vmatprep.subr.bf16.mxu0 %v2656
    %3024 = vmatpush1.bf16.msra.mxu0 %v2655
    %3025 = vmatprep.subr.bf16.mxu0 %v2662
    %3026 = vmatpush1.bf16.msra.mxu0 %v2661
    %3027 = vmatprep.subr.bf16.mxu0 %v2668
    %3028 = vmatpush1.bf16.msra.mxu0 %v2667
    %3029 = vmatprep.subr.bf16.mxu0 %v2674
    %3030 = vmatpush1.bf16.msra.mxu0 %v2673
    %3031 = vmatprep.subr.bf16.mxu0 %v2680
    %3032 = vmatpush1.bf16.msra.mxu0 %v2679
    %3033 = vmatprep.subr.bf16.mxu0 %v2686
    %3034 = vmatpush1.bf16.msra.mxu0 %v2685
    %3035 = vmatprep.subr.bf16.mxu0 %v2692
    %3036 = vmatpush1.bf16.msra.mxu0 %v2691
    %3037 = vmatprep.subr.bf16.mxu0 %v2698
    %3038 = vmatpush1.bf16.msra.mxu0 %v2697
    %3039 = vmatprep.subr.bf16.mxu0 %v2704
    %3040 = vmatpush1.bf16.msra.mxu0 %v2703
    %3041 = vmatprep.subr.bf16.mxu0 %v2710
    %3042 = vmatpush1.bf16.msra.mxu0 %v2709
    %3043 = vmatprep.subr.bf16.mxu0 %v2716
    %3044 = vmatpush1.bf16.msra.mxu0 %v2715
    %3045 = vmatprep.subr.bf16.mxu0 %v2722
    %3046 = vmatpush1.bf16.msra.mxu0 %v2721
    %3047 = vmatprep.mubr.bf16.mxu0 %v1828
    %3048 = vmatmul.mubr.bf16.gmra.mrb[0].mxu0 %v1827
    %v3049 = vpop.f32.mrb[0].mxu0
    %v3050 = vadd.f32 %v2028, %v3049
    %v3051 = vpop.f32.mrb[0].mxu0
    %v3052 = vadd.f32 %v2032, %v3051
    %v3053 = vpop.f32.mrb[0].mxu0
    %v3054 = vpop.f32.mrb[0].mxu0
    %3055 = vdwg.mxu0
    %3056 = vmatprep.subr.bf16.mxu0 %v2728
    %3057 = vmatpush1.bf16.msra.mxu0 %v2727
    %3058 = vmatprep.subr.bf16.mxu0 %v2734
    %3059 = vmatpush1.bf16.msra.mxu0 %v2733
    %3060 = vmatprep.subr.bf16.mxu0 %v2740
    %3061 = vmatpush1.bf16.msra.mxu0 %v2739
    %3062 = vmatprep.subr.bf16.mxu0 %v2746
    %3063 = vmatpush1.bf16.msra.mxu0 %v2745
    %3064 = vmatprep.subr.bf16.mxu0 %v2752
    %3065 = vmatpush1.bf16.msra.mxu0 %v2751
    %3066 = vmatprep.subr.bf16.mxu0 %v2758
    %3067 = vmatpush1.bf16.msra.mxu0 %v2757
    %3068 = vmatprep.subr.bf16.mxu0 %v2764
    %3069 = vmatpush1.bf16.msra.mxu0 %v2763
    %3070 = vmatprep.subr.bf16.mxu0 %v2770
    %3071 = vmatpush1.bf16.msra.mxu0 %v2769
    %3072 = vmatprep.subr.bf16.mxu0 %v2776
    %3073 = vmatpush1.bf16.msra.mxu0 %v2775
    %3074 = vmatprep.subr.bf16.mxu0 %v2782
    %3075 = vmatpush1.bf16.msra.mxu0 %v2781
    %3076 = vmatprep.subr.bf16.mxu0 %v2788
    %3077 = vmatpush1.bf16.msra.mxu0 %v2787
    %3078 = vmatprep.subr.bf16.mxu0 %v2794
    %3079 = vmatpush1.bf16.msra.mxu0 %v2793
    %3080 = vmatprep.subr.bf16.mxu0 %v2800
    %3081 = vmatpush1.bf16.msra.mxu0 %v2799
    %3082 = vmatprep.subr.bf16.mxu0 %v2806
    %3083 = vmatpush1.bf16.msra.mxu0 %v2805
    %3084 = vmatprep.subr.bf16.mxu0 %v2812
    %3085 = vmatpush1.bf16.msra.mxu0 %v2811
    %3086 = vmatprep.subr.bf16.mxu0 %v2818
    %3087 = vmatpush1.bf16.msra.mxu0 %v2817
    %3088 = vmatprep.mubr.bf16.mxu0 %v1830
    %3089 = vmatmul.mubr.bf16.gmra.mrb[0].mxu0 %v1829
    %v3090 = vpop.f32.mrb[0].mxu0
    %v3091 = vadd.f32 %v3050, %v3090
    %v3092 = vpop.f32.mrb[0].mxu0
    %v3093 = vadd.f32 %v3052, %v3092
    %v3094 = vpop.f32.mrb[0].mxu0
    %v3095 = vpop.f32.mrb[0].mxu0
    %3096 = vdwg.mxu0
    %3097 = vmatprep.subr.bf16.mxu0 %v2634
    %3098 = vmatpush1.bf16.msra.mxu0 %v2633
    %3099 = vmatprep.subr.bf16.mxu0 %v2640
    %3100 = vmatpush1.bf16.msra.mxu0 %v2639
    %3101 = vmatprep.subr.bf16.mxu0 %v2646
    %3102 = vmatpush1.bf16.msra.mxu0 %v2645
    %3103 = vmatprep.subr.bf16.mxu0 %v2652
    %3104 = vmatpush1.bf16.msra.mxu0 %v2651
    %3105 = vmatprep.subr.bf16.mxu0 %v2658
    %3106 = vmatpush1.bf16.msra.mxu0 %v2657
    %3107 = vmatprep.subr.bf16.mxu0 %v2664
    %3108 = vmatpush1.bf16.msra.mxu0 %v2663
    %3109 = vmatprep.subr.bf16.mxu0 %v2670
    %3110 = vmatpush1.bf16.msra.mxu0 %v2669
    %3111 = vmatprep.subr.bf16.mxu0 %v2676
    %3112 = vmatpush1.bf16.msra.mxu0 %v2675
    %3113 = vmatprep.subr.bf16.mxu0 %v2682
    %3114 = vmatpush1.bf16.msra.mxu0 %v2681
    %3115 = vmatprep.subr.bf16.mxu0 %v2688
    %3116 = vmatpush1.bf16.msra.mxu0 %v2687
    %3117 = vmatprep.subr.bf16.mxu0 %v2694
    %3118 = vmatpush1.bf16.msra.mxu0 %v2693
    %3119 = vmatprep.subr.bf16.mxu0 %v2700
    %3120 = vmatpush1.bf16.msra.mxu0 %v2699
    %3121 = vmatprep.subr.bf16.mxu0 %v2706
    %3122 = vmatpush1.bf16.msra.mxu0 %v2705
    %3123 = vmatprep.subr.bf16.mxu0 %v2712
    %3124 = vmatpush1.bf16.msra.mxu0 %v2711
    %3125 = vmatprep.subr.bf16.mxu0 %v2718
    %3126 = vmatpush1.bf16.msra.mxu0 %v2717
    %3127 = vmatprep.subr.bf16.mxu0 %v2724
    %3128 = vmatpush1.bf16.msra.mxu0 %v2723
    %3129 = vmatprep.mubr.bf16.mxu0 %v1828
    %3130 = vmatmul.mubr.bf16.gmra.mrb[0].mxu0 %v1827
    %v3131 = vpop.f32.mrb[0].mxu0
    %v3132 = vadd.f32 %v2036, %v3131
    %v3133 = vpop.f32.mrb[0].mxu0
    %v3134 = vadd.f32 %v2040, %v3133
    %v3135 = vpop.f32.mrb[0].mxu0
    %v3136 = vpop.f32.mrb[0].mxu0
    %3137 = vdwg.mxu0
    %3138 = vmatprep.subr.bf16.mxu0 %v2730
    %3139 = vmatpush1.bf16.msra.mxu0 %v2729
    %3140 = vmatprep.subr.bf16.mxu0 %v2736
    %3141 = vmatpush1.bf16.msra.mxu0 %v2735
    %3142 = vmatprep.subr.bf16.mxu0 %v2742
    %3143 = vmatpush1.bf16.msra.mxu0 %v2741
    %3144 = vmatprep.subr.bf16.mxu0 %v2748
    %3145 = vmatpush1.bf16.msra.mxu0 %v2747
    %3146 = vmatprep.subr.bf16.mxu0 %v2754
    %3147 = vmatpush1.bf16.msra.mxu0 %v2753
    %3148 = vmatprep.subr.bf16.mxu0 %v2760
    %3149 = vmatpush1.bf16.msra.mxu0 %v2759
    %3150 = vmatprep.subr.bf16.mxu0 %v2766
    %3151 = vmatpush1.bf16.msra.mxu0 %v2765
    %3152 = vmatprep.subr.bf16.mxu0 %v2772
    %3153 = vmatpush1.bf16.msra.mxu0 %v2771
    %3154 = vmatprep.subr.bf16.mxu0 %v2778
    %3155 = vmatpush1.bf16.msra.mxu0 %v2777
    %3156 = vmatprep.subr.bf16.mxu0 %v2784
    %3157 = vmatpush1.bf16.msra.mxu0 %v2783
    %3158 = vmatprep.subr.bf16.mxu0 %v2790
    %3159 = vmatpush1.bf16.msra.mxu0 %v2789
    %3160 = vmatprep.subr.bf16.mxu0 %v2796
    %3161 = vmatpush1.bf16.msra.mxu0 %v2795
    %3162 = vmatprep.subr.bf16.mxu0 %v2802
    %3163 = vmatpush1.bf16.msra.mxu0 %v2801
    %3164 = vmatprep.subr.bf16.mxu0 %v2808
    %3165 = vmatpush1.bf16.msra.mxu0 %v2807
    %3166 = vmatprep.subr.bf16.mxu0 %v2814
    %3167 = vmatpush1.bf16.msra.mxu0 %v2813
    %3168 = vmatprep.subr.bf16.mxu0 %v2820
    %3169 = vmatpush1.bf16.msra.mxu0 %v2819
    %3170 = vmatprep.mubr.bf16.mxu0 %v1830
    %3171 = vmatmul.mubr.bf16.gmra.mrb[0].mxu0 %v1829
    %v3172 = vpop.f32.mrb[0].mxu0
    %v3173 = vadd.f32 %v3132, %v3172
    %v3174 = vpop.f32.mrb[0].mxu0
    %v3175 = vadd.f32 %v3134, %v3174
    %v3176 = vpop.f32.mrb[0].mxu0
    %v3177 = vpop.f32.mrb[0].mxu0
    %3178 = vdwg.mxu0
    %3179 = vmatprep.subr.bf16.mxu0 %v2636
    %3180 = vmatpush1.bf16.msra.mxu0 %v2635
    %3181 = vmatprep.subr.bf16.mxu0 %v2642
    %3182 = vmatpush1.bf16.msra.mxu0 %v2641
    %3183 = vmatprep.subr.bf16.mxu0 %v2648
    %3184 = vmatpush1.bf16.msra.mxu0 %v2647
    %3185 = vmatprep.subr.bf16.mxu0 %v2654
    %3186 = vmatpush1.bf16.msra.mxu0 %v2653
    %3187 = vmatprep.subr.bf16.mxu0 %v2660
    %3188 = vmatpush1.bf16.msra.mxu0 %v2659
    %3189 = vmatprep.subr.bf16.mxu0 %v2666
    %3190 = vmatpush1.bf16.msra.mxu0 %v2665
    %3191 = vmatprep.subr.bf16.mxu0 %v2672
    %3192 = vmatpush1.bf16.msra.mxu0 %v2671
    %3193 = vmatprep.subr.bf16.mxu0 %v2678
    %3194 = vmatpush1.bf16.msra.mxu0 %v2677
    %3195 = vmatprep.subr.bf16.mxu0 %v2684
    %3196 = vmatpush1.bf16.msra.mxu0 %v2683
    %3197 = vmatprep.subr.bf16.mxu0 %v2690
    %3198 = vmatpush1.bf16.msra.mxu0 %v2689
    %3199 = vmatprep.subr.bf16.mxu0 %v2696
    %3200 = vmatpush1.bf16.msra.mxu0 %v2695
    %3201 = vmatprep.subr.bf16.mxu0 %v2702
    %3202 = vmatpush1.bf16.msra.mxu0 %v2701
    %3203 = vmatprep.subr.bf16.mxu0 %v2708
    %3204 = vmatpush1.bf16.msra.mxu0 %v2707
    %3205 = vmatprep.subr.bf16.mxu0 %v2714
    %3206 = vmatpush1.bf16.msra.mxu0 %v2713
    %3207 = vmatprep.subr.bf16.mxu0 %v2720
    %3208 = vmatpush1.bf16.msra.mxu0 %v2719
    %3209 = vmatprep.subr.bf16.mxu0 %v2726
    %3210 = vmatpush1.bf16.msra.mxu0 %v2725
    %3211 = vmatprep.mubr.bf16.mxu0 %v1828
    %3212 = vmatmul.mubr.bf16.gmra.mrb[0].mxu0 %v1827
    %v3213 = vpop.f32.mrb[0].mxu0
    %v3214 = vadd.f32 %v2044, %v3213
    %v3215 = vpop.f32.mrb[0].mxu0
    %v3216 = vadd.f32 %v2048, %v3215
    %v3217 = vpop.f32.mrb[0].mxu0
    %v3218 = vpop.f32.mrb[0].mxu0
    %3219 = vdwg.mxu0
    %3220 = vmatprep.subr.bf16.mxu0 %v2732
    %3221 = vmatpush1.bf16.msra.mxu0 %v2731
    %3222 = vmatprep.subr.bf16.mxu0 %v2738
    %3223 = vmatpush1.bf16.msra.mxu0 %v2737
    %3224 = vmatprep.subr.bf16.mxu0 %v2744
    %3225 = vmatpush1.bf16.msra.mxu0 %v2743
    %3226 = vmatprep.subr.bf16.mxu0 %v2750
    %3227 = vmatpush1.bf16.msra.mxu0 %v2749
    %3228 = vmatprep.subr.bf16.mxu0 %v2756
    %3229 = vmatpush1.bf16.msra.mxu0 %v2755
    %3230 = vmatprep.subr.bf16.mxu0 %v2762
    %3231 = vmatpush1.bf16.msra.mxu0 %v2761
    %3232 = vmatprep.subr.bf16.mxu0 %v2768
    %3233 = vmatpush1.bf16.msra.mxu0 %v2767
    %3234 = vmatprep.subr.bf16.mxu0 %v2774
    %3235 = vmatpush1.bf16.msra.mxu0 %v2773
    %3236 = vmatprep.subr.bf16.mxu0 %v2780
    %3237 = vmatpush1.bf16.msra.mxu0 %v2779
    %3238 = vmatprep.subr.bf16.mxu0 %v2786
    %3239 = vmatpush1.bf16.msra.mxu0 %v2785
    %3240 = vmatprep.subr.bf16.mxu0 %v2792
    %3241 = vmatpush1.bf16.msra.mxu0 %v2791
    %3242 = vmatprep.subr.bf16.mxu0 %v2798
    %3243 = vmatpush1.bf16.msra.mxu0 %v2797
    %3244 = vmatprep.subr.bf16.mxu0 %v2804
    %3245 = vmatpush1.bf16.msra.mxu0 %v2803
    %3246 = vmatprep.subr.bf16.mxu0 %v2810
    %3247 = vmatpush1.bf16.msra.mxu0 %v2809
    %3248 = vmatprep.subr.bf16.mxu0 %v2816
    %3249 = vmatpush1.bf16.msra.mxu0 %v2815
    %3250 = vmatprep.subr.bf16.mxu0 %v2822
    %3251 = vmatpush1.bf16.msra.mxu0 %v2821
    %3252 = vmatprep.mubr.bf16.mxu0 %v1830
    %3253 = vmatmul.mubr.bf16.gmra.mrb[0].mxu0 %v1829
    %v3254 = vpop.f32.mrb[0].mxu0
    %v3255 = vadd.f32 %v3214, %v3254
    %v3256 = vpop.f32.mrb[0].mxu0
    %v3257 = vadd.f32 %v3216, %v3256
    %v3258 = vpop.f32.mrb[0].mxu0
    %v3259 = vpop.f32.mrb[0].mxu0
    %3260 = vdwg.mxu0
    %v3261 = vtanh.pop %v3091
    %v3262 = vtanh.pop %v3093
    %v3263 = vtanh.pop %v3173
    %v3264 = vtanh.pop %v3175
    %v3265 = vtanh.pop %v3255
    %v3266 = vtanh.pop %v3257
    %v3273 = vcombine.low %v3261, %v3262
    %v3274 = vcombine.low %v3263, %v3264
    %v3276 = vunpack.c.l.s4 1983009808
    %v3277 = vunpack.c.0.s8 %v3276
    %v3278 = vlaneseq
    %v3279 = vshrl.u32 %v3278, 7
    %v3280 = vsub.s32 %v3277, %v3279
    %v3281 = vrot.slane %v3273, %v3280
    %v3283 = vunpack.c.l.s4 1983009808
    %v3284 = vunpack.c.0.s8 %v3283
    %v3285 = vlaneseq
    %v3286 = vshrl.u32 %v3285, 7
    %v3287 = vsub.s32 %v3284, %v3286
    %v3288 = vrot.slane %v3274, %v3287
    %v3289 = vcombine.low %v3281, %v3288
    %v3290 = vcombine.low %v3265, %v3266
    %v3292 = vunpack.c.l.s4 1983009808
    %v3293 = vunpack.c.0.s8 %v3292
    %v3294 = vlaneseq
    %v3295 = vshrl.u32 %v3294, 7
    %v3296 = vsub.s32 %v3293, %v3295
    %v3297 = vrot.slane %v3290, %v3296
    %3300 = vst [vmem:[%s14] sm:$0xff] %v3289
    %3301 = vst [vmem:[%s14 + $0x8] sm:$0xf] %v3297
    // Predicated region
    $region62: #{generator_forward.1} parent=1 // pred_check
      _
    $region63: #{generator_forward.1} parent=1 // pred_check_branch
      %3303 = sbr.rel (0) target = $region65
    $region64: #{generator_forward.1} parent=1 // pred_region
      _
    $region65: #{generator_forward.1} parent=1 // pred_fallthru
      _
    // Predicated region
    $region66: #{generator_forward.1} parent=1 // pred_check
      _
    $region67: #{generator_forward.1} parent=1 // pred_check_branch
      %3305 = sbr.rel (0) target = $region69
    $region68: #{generator_forward.1} parent=1 // pred_region
      _
    $region69: #{generator_forward.1} parent=1 // pred_fallthru
      _
    %3306 = vsyncpa [#allocation3], 1

</llo_original>
